<compile_context>
chip_gen: v7x
topology: tpu7x:2x2x1
jax: 0.10.0
libtpu: 0.0.40
codegen_flags: <defaults>
</compile_context>

<pallas_src>
import functools

import jax
import jax.numpy as jnp
from jax.experimental import pallas as pl
from jax.experimental.pallas import tpu as pltpu

EPS = 1e-5


def add_conv1x1_bn_kernel(x1_ref, x2_ref, w_ref, g_ref, b_ref, o_ref,
                          *, true_m, tc):
    i = pl.program_id(0)

    # Elementwise add (VPU). x blocks are grid-constant (fetched once);
    # recomputing the add per channel tile is ~70 KFLOP -> negligible, and it
    # keeps the "parallel" grid axis safe for multi-core sharding.
    x = x1_ref[...] + x2_ref[...]                                    # (Cin, Mp)

    # 1x1 conv for this channel tile == one MXU matmul (transposed orientation).
    y = jnp.dot(w_ref[...], x, preferred_element_type=jnp.float32)   # (tc, Mp)

    # Training-mode batchnorm, single-pass per-channel stats. The cross-lane
    # reductions run on the MXU (dot with a ones column) instead of the XLU.
    # Padded columns of x are zero => padded columns of y are zero => sums are
    # unaffected; divide by the TRUE pixel count, not the padded width.
    # TODO(synk): E[y^2]-E[y]^2 is cancellation-prone for large-mean
    # activations; fine for this module's distribution.
    ones_col = jnp.ones((y.shape[1], 1), dtype=jnp.float32)
    s1 = jnp.dot(y, ones_col, preferred_element_type=jnp.float32)    # (tc, 1)
    s2 = jnp.dot(y * y, ones_col, preferred_element_type=jnp.float32)

    inv_m = jnp.float32(1.0 / true_m)
    mean = s1 * inv_m                                                # (tc, 1)
    var = s2 * inv_m - mean * mean                                   # (tc, 1)
    inv_std = jax.lax.rsqrt(var + EPS)

    # gamma/beta live in VMEM as full (Cout, 1) blocks fetched once; slice this
    # tile's rows (i*tc is a multiple of 8 since tc is).
    start = pl.multiple_of(i * tc, tc)
    gamma = g_ref[pl.ds(start, tc), :]                               # (tc, 1)
    beta = b_ref[pl.ds(start, tc), :]                                # (tc, 1)

    scale = gamma * inv_std
    shift = beta - mean * scale
    o_ref[...] = (y * scale + shift).astype(o_ref.dtype)


def _default_channel_tile(cout):
    """Per-generation channel tile.

    v7x has two TensorCores -> 4 tiles (2/core) keeps per-core writeback
    pipelined; single-TC v5e/v6e -> 2 big tiles minimizes grid-step overhead
    while still overlapping writeback with compute.
    """
    try:
        kind = jax.devices()[0].device_kind.lower()
    except Exception:  # pragma: no cover - defensive
        kind = ""
    tile = 120 if ("v7" in kind or "7x" in kind) else 240
    if cout % tile == 0 and tile % 8 == 0:
        return tile
    cands = [t for t in range(8, cout + 1, 8) if cout % t == 0]
    return max(cands) if cands else cout


def add_conv1x1_bn(x231, x217, conv_w, bn_gamma, bn_beta):
    """x231, x217: (N, Cin, H, W) f32; conv_w: (Cout, Cin, 1, 1)."""
    N, Cin, H, W = x231.shape
    Cout = conv_w.shape[0]
    M = N * H * W
    Mp = ((M + 127) // 128) * 128          # lane-dense padded pixel count

    # NCHW -> (Cin, M). For N == 1 this is a pure reshape (no HBM transpose).
    if N == 1:
        x1 = x231.reshape(Cin, M)
        x2 = x217.reshape(Cin, M)
    else:
        # TODO(synk): N > 1 needs a real transpose; the module spec has N = 1.
        x1 = jnp.transpose(x231, (1, 0, 2, 3)).reshape(Cin, M)
        x2 = jnp.transpose(x217, (1, 0, 2, 3)).reshape(Cin, M)

    if Mp != M:
        pad = ((0, 0), (0, Mp - M))
        x1 = jnp.pad(x1, pad)              # zero pad -> zero conv outputs
        x2 = jnp.pad(x2, pad)

    w2 = conv_w.reshape(Cout, Cin)          # (Cout, Cin)
    gamma = bn_gamma.reshape(Cout, 1)
    beta = bn_beta.reshape(Cout, 1)

    tc = _default_channel_tile(Cout)
    grid = (Cout // tc,)

    cost = pl.CostEstimate(
        flops=(2 * Mp * Cin * Cout          # conv matmul
               + 4 * Mp * Cout              # two MXU reductions
               + Mp * Cin                   # add
               + 3 * Mp * Cout),            # y*y, scale, shift
        transcendentals=Cout,
        bytes_accessed=4 * (2 * Cin * Mp + Cout * Cin + 2 * Cout + Cout * Mp),
    )

    kernel = functools.partial(add_conv1x1_bn_kernel, true_m=float(M), tc=tc)

    out_padded = pl.pallas_call(
        kernel,
        out_shape=jax.ShapeDtypeStruct((Cout, Mp), jnp.float32),
        grid_spec=pltpu.PrefetchScalarGridSpec(
            num_scalar_prefetch=0,
            grid=grid,
            in_specs=[
                pl.BlockSpec((Cin, Mp), lambda i: (0, 0)),   # x1 (fetched once)
                pl.BlockSpec((Cin, Mp), lambda i: (0, 0)),   # x2 (fetched once)
                pl.BlockSpec((tc, Cin), lambda i: (i, 0)),   # weight tile
                pl.BlockSpec((Cout, 1), lambda i: (0, 0)),   # gamma (once)
                pl.BlockSpec((Cout, 1), lambda i: (0, 0)),   # beta  (once)
            ],
            out_specs=pl.BlockSpec((tc, Mp), lambda i: (i, 0)),
        ),
        compiler_params=pltpu.CompilerParams(
            dimension_semantics=("parallel",)),
        cost_estimate=cost,
    )(x1, x2, w2, gamma, beta)

    out2d = out_padded[:, :M] if Mp != M else out_padded

    # (Cout, N*H*W) -> (N, Cout, H, W); a pure reshape when N == 1.
    if N == 1:
        return out2d.reshape(1, Cout, H, W)
    return jnp.transpose(out2d.reshape(Cout, N, H, W), (1, 0, 2, 3))


def reference(x231, x217, conv_w, bn_gamma, bn_beta):
    """Pure-JAX reference of the PyTorch forward (training-mode batchnorm)."""
    x = x231 + x217
    y = jax.lax.conv_general_dilated(
        x, conv_w, window_strides=(1, 1), padding="VALID",
        dimension_numbers=("NCHW", "OIHW", "NCHW"))
    mean = jnp.mean(y, axis=(0, 2, 3), keepdims=True)
    var = jnp.mean((y - mean) ** 2, axis=(0, 2, 3), keepdims=True)
    y_hat = (y - mean) / jnp.sqrt(var + EPS)
    return y_hat * bn_gamma.reshape(1, -1, 1, 1) + bn_beta.reshape(1, -1, 1, 1)


if __name__ == "__main__":
    key = jax.random.PRNGKey(0)
    k1, k2, k3, k4, k5 = jax.random.split(key, 5)

    N, Cin, H, W, Cout = 1, 80, 28, 28, 480

    x231 = jax.random.normal(k1, (N, Cin, H, W), dtype=jnp.float32)
    x217 = jax.random.normal(k2, (N, Cin, H, W), dtype=jnp.float32)
    # Conv2d(80, 480, 1x1, bias=False) weight, deterministic init
    conv_w = jax.random.normal(k3, (Cout, Cin, 1, 1), dtype=jnp.float32) * 0.05
    # BatchNorm2d affine params (non-trivial but deterministic)
    bn_gamma = 1.0 + 0.1 * jax.random.normal(k4, (Cout,), dtype=jnp.float32)
    bn_beta = 0.1 * jax.random.normal(k5, (Cout,), dtype=jnp.float32)

    out = add_conv1x1_bn(x231, x217, conv_w, bn_gamma, bn_beta)
    out = jax.block_until_ready(out)

    ref = reference(x231, x217, conv_w, bn_gamma, bn_beta)
    assert out.shape == (N, Cout, H, W), out.shape
    assert jnp.allclose(out, ref, atol=1e-4, rtol=1e-4), (
        float(jnp.max(jnp.abs(out - ref))))

    print("KERNEL_OK")
</pallas_src>

<mosaic_0001>
module attributes {stable_mosaic.version = 11 : i64} {
  func.func @add_conv1x1_bn_kernel(%arg0: i32, %arg1: memref<80x896xf32, #tpu.memory_space<vmem>>, %arg2: memref<80x896xf32, #tpu.memory_space<vmem>>, %arg3: memref<240x80xf32, #tpu.memory_space<vmem>>, %arg4: memref<480x1xf32, #tpu.memory_space<vmem>>, %arg5: memref<480x1xf32, #tpu.memory_space<vmem>>, %arg6: memref<240x896xf32, #tpu.memory_space<vmem>>) attributes {dimension_semantics = [#tpu.dimension_semantics<parallel>], iteration_bounds = array<i64: 2>, scalar_prefetch = 0 : i64, scratch_operands = 0 : i64, tpu.core_type = #tpu.core_type<tc>, window_params = [{pipeline_mode = #tpu.pipeline_mode<synchronous>, transform_indices = @transform_0, window_bounds = array<i64: 80, 896>}, {pipeline_mode = #tpu.pipeline_mode<synchronous>, transform_indices = @transform_1, window_bounds = array<i64: 80, 896>}, {transform_indices = @transform_2, window_bounds = array<i64: 240, 80>}, {pipeline_mode = #tpu.pipeline_mode<synchronous>, transform_indices = @transform_3, window_bounds = array<i64: 480, 1>}, {pipeline_mode = #tpu.pipeline_mode<synchronous>, transform_indices = @transform_4, window_bounds = array<i64: 480, 1>}, {transform_indices = @transform_5, window_bounds = array<i64: 240, 896>}]} {
    %c0 = arith.constant 0 : index
    %c0_0 = arith.constant 0 : index
    %0 = vector.load %arg1[%c0, %c0_0] : memref<80x896xf32, #tpu.memory_space<vmem>>, vector<80x896xf32>
    %c0_1 = arith.constant 0 : index
    %c0_2 = arith.constant 0 : index
    %1 = vector.load %arg2[%c0_1, %c0_2] : memref<80x896xf32, #tpu.memory_space<vmem>>, vector<80x896xf32>
    %2 = arith.addf %0, %1 : vector<80x896xf32>
    %c0_3 = arith.constant 0 : index
    %c0_4 = arith.constant 0 : index
    %3 = vector.load %arg3[%c0_3, %c0_4] : memref<240x80xf32, #tpu.memory_space<vmem>>, vector<240x80xf32>
    %cst = arith.constant dense<0.000000e+00> : vector<240x896xf32>
    %4 = tpu.matmul %3, %2, %cst {dimension_numbers = #tpu.dot_dimension_numbers<[1], [0], [0], [1], [0, 0, 1, 1], [], []>} : vector<240x80xf32>, vector<80x896xf32>, vector<240x896xf32> -> vector<240x896xf32>
    %cst_5 = arith.constant 1.000000e+00 : f32
    %5 = vector.broadcast %cst_5 : f32 to vector<896x1xf32>
    %cst_6 = arith.constant dense<0.000000e+00> : vector<240x1xf32>
    %6 = tpu.matmul %4, %5, %cst_6 {dimension_numbers = #tpu.dot_dimension_numbers<[1], [0], [0], [1], [0, 0, 1, 1], [], []>} : vector<240x896xf32>, vector<896x1xf32>, vector<240x1xf32> -> vector<240x1xf32>
    %7 = arith.mulf %4, %4 : vector<240x896xf32>
    %cst_7 = arith.constant dense<0.000000e+00> : vector<240x1xf32>
    %8 = tpu.matmul %7, %5, %cst_7 {dimension_numbers = #tpu.dot_dimension_numbers<[1], [0], [0], [1], [0, 0, 1, 1], [], []>} : vector<240x896xf32>, vector<896x1xf32>, vector<240x1xf32> -> vector<240x1xf32>
    %cst_8 = arith.constant 0.00127551018 : f32
    %9 = vector.broadcast %cst_8 : f32 to vector<240x1xf32>
    %10 = arith.mulf %6, %9 : vector<240x1xf32>
    %cst_9 = arith.constant 0.00127551018 : f32
    %11 = vector.broadcast %cst_9 : f32 to vector<240x1xf32>
    %12 = arith.mulf %8, %11 : vector<240x1xf32>
    %13 = arith.mulf %10, %10 : vector<240x1xf32>
    %14 = arith.subf %12, %13 : vector<240x1xf32>
    %cst_10 = arith.constant 9.99999974E-6 : f32
    %15 = vector.broadcast %cst_10 : f32 to vector<240x1xf32>
    %16 = arith.addf %14, %15 : vector<240x1xf32>
    %17 = math.rsqrt %16 : vector<240x1xf32>
    %c240_i32 = arith.constant 240 : i32
    %18 = arith.muli %arg0, %c240_i32 : i32
    %19 = tpu.assume_multiple %18, 240 : i32
    %20 = arith.index_cast %19 : i32 to index
    %c0_11 = arith.constant 0 : index
    %21 = vector.load %arg4[%20, %c0_11] : memref<480x1xf32, #tpu.memory_space<vmem>>, vector<240x1xf32>
    %22 = arith.index_cast %19 : i32 to index
    %c0_12 = arith.constant 0 : index
    %23 = vector.load %arg5[%22, %c0_12] : memref<480x1xf32, #tpu.memory_space<vmem>>, vector<240x1xf32>
    %24 = arith.mulf %21, %17 : vector<240x1xf32>
    %25 = arith.mulf %10, %24 : vector<240x1xf32>
    %26 = arith.subf %23, %25 : vector<240x1xf32>
    %27 = vector.broadcast %24 : vector<240x1xf32> to vector<240x896xf32>
    %28 = arith.mulf %4, %27 : vector<240x896xf32>
    %29 = vector.broadcast %26 : vector<240x1xf32> to vector<240x896xf32>
    %30 = arith.addf %28, %29 : vector<240x896xf32>
    %c0_13 = arith.constant 0 : index
    %c0_14 = arith.constant 0 : index
    %31 = vector.load %arg6[%c0_13, %c0_14] : memref<240x896xf32, #tpu.memory_space<vmem>>, vector<240x896xf32>
    tpu.vector_store %arg6[%c0_13, %c0_14], %30 {strides = array<i32>} : memref<240x896xf32, #tpu.memory_space<vmem>>, vector<240x896xf32>,
    return
  }
  func.func @transform_0(%arg0: i32) -> (i32, i32) {
    %c0_i32 = arith.constant 0 : i32
    %c0_i32_0 = arith.constant 0 : i32
    %c0_i32_1 = arith.constant 0 : i32
    return %c0_i32, %c0_i32_0 : i32, i32
  }
  func.func @transform_1(%arg0: i32) -> (i32, i32) {
    %c0_i32 = arith.constant 0 : i32
    %c0_i32_0 = arith.constant 0 : i32
    %c0_i32_1 = arith.constant 0 : i32
    return %c0_i32, %c0_i32_0 : i32, i32
  }
  func.func @transform_2(%arg0: i32) -> (i32, i32) {
    %c0_i32 = arith.constant 0 : i32
    %c0_i32_0 = arith.constant 0 : i32
    return %arg0, %c0_i32 : i32, i32
  }
  func.func @transform_3(%arg0: i32) -> (i32, i32) {
    %c0_i32 = arith.constant 0 : i32
    %c0_i32_0 = arith.constant 0 : i32
    %c0_i32_1 = arith.constant 0 : i32
    return %c0_i32, %c0_i32_0 : i32, i32
  }
  func.func @transform_4(%arg0: i32) -> (i32, i32) {
    %c0_i32 = arith.constant 0 : i32
    %c0_i32_0 = arith.constant 0 : i32
    %c0_i32_1 = arith.constant 0 : i32
    return %c0_i32, %c0_i32_0 : i32, i32
  }
  func.func @transform_5(%arg0: i32) -> (i32, i32) {
    %c0_i32 = arith.constant 0 : i32
    %c0_i32_0 = arith.constant 0 : i32
    return %arg0, %c0_i32 : i32, i32
  }
}

</mosaic_0001>

<llo_original>
// kernel: tpu_custom_call.1
$region0: #{tpu_custom_call.1}
  #allocation0 [shape = 'u32[]', space=smem, size = 0x4, offset = 0x4, fixed_abs, tag = 'smem constant byte address 0x4 - core index']
  #allocation1 [shape = 'u32[144,128]{1,0:T(1,128)}', space=vmem, size = 0x12000, scoped, tag = 'internal scratch']
  %s0 = inlined_call_operand.hbm [shape: f32[80,896], index: 0, kind: input, shape index: {}]
  %s1 = inlined_call_operand.hbm [shape: f32[80,896], index: 1, kind: input, shape index: {}]
  %s2 = inlined_call_operand.vmem [shape: f32[480,80], index: 2, kind: input, shape index: {}]
  %s3 = inlined_call_operand.vmem [shape: f32[480,1], index: 3, kind: input, shape index: {}]
  %s4 = inlined_call_operand.vmem [shape: f32[480,1], index: 4, kind: input, shape index: {}]
  %s5 = inlined_call_operand.hbm [shape: f32[480,896], index: 5, kind: output, shape index: {}]
  %s6 = sld [smem:[#allocation0]]
  $region61: #{tpu_custom_call.1} parent=0
    _
  %s8 = ssub.s32 1, %s6
  %s9 = scalar_select 0, %s8, %s6
  $region1: #{tpu_custom_call.1} parent=0
    #allocation2 [shape = 'u8[286720]{0}', space=vmem, size = 0x46000, scoped, tag = 'input window, operand 0, single buffered']
    #allocation3 [shape = 's32[2]{0}', space=sflag, size = 0x8, scoped, tag = 'scoped memory for tpu_custom_call.1']
    #allocation4 [shape = 's32[2]{0}', space=sflag, size = 0x8, scoped, tag = 'scoped memory for tpu_custom_call.1']
    #allocation5 [shape = 'u8[286720]{0}', space=vmem, size = 0x46000, scoped, tag = 'input window, operand 1, single buffered']
    #allocation6 [shape = 's32[1]{0}', space=sflag, size = 0x4, scoped, tag = 'scoped memory for tpu_custom_call.1']
    #allocation7 [shape = 'u8[1720320]{0}', space=vmem, size = 0x1a4000, scoped, tag = 'output window, operand 0']
    %10 = vsyncpa [#allocation3], 0
    %11 = vsyncpa [#allocation6], 0
    %12 = vsyncpa [#allocation4], 0
    %s13 = scalar_lea.sflag [#allocation4], 1
    %14 = vsyncpa %s13, 0
    loop: start=0, step=1, limit=4
    $region2: #{tpu_custom_call.1} parent=1 // loop_pre_header
      _
    $region3: #{tpu_custom_call.1} parent=1 // loop_header
      %s16 = sphi 0, %s20
      %p17 = scmp.ge.s32.totalorder %s16, 4
      %s24 = sphi 0, %s24
      %s26 = sphi 0, %s24
      %s27 = sphi 0, %s26
      %s41 = sphi 0, %s27
      %s45 = sphi 0, %s45
      %s47 = sphi 0, %s45
      %s48 = sphi 0, %s47
      %s62 = sphi 0, %s48
      %s68 = sphi 0, %s70
      %s71 = sphi 0, %s68
      %s72 = sphi 0, %s71
      %s88 = sphi 0, %s72
      %s92 = sphi 0, %s92
      %s94 = sphi 0, %s92
      %s95 = sphi 0, %s94
      %s109 = sphi 0, %s95
      %s113 = sphi 0, %s113
      %s115 = sphi 0, %s113
      %s116 = sphi 0, %s115
      %s130 = sphi 0, %s116
      %s136 = sphi 0, %s138
      %s139 = sphi 0, %s136
      %s140 = sphi 0, %s139
      %s156 = sphi 0, %s140
    $region4: #{tpu_custom_call.1} parent=1 // loop_header_branch
      %19 = sbr.rel (%p17) target = $region8
    $region5: #{tpu_custom_call.1} parent=1 // loop_body
      %s21 = ssub.s32 %s16, 1
      %s22 = ssub.s32 %s16, 2
      %s23 = sadd.s32 %s16, 1
      %s25 = sadd.s32 %s24, 1
      %p28 = scmp.eq.s32.totalorder %s16, 1
      %p29 = scmp.ne.s32.totalorder %s24, %s26
      %p30 = scmp.eq.s32.totalorder %s16, 0
      %p31 = por %p29, %p30
      %p32 = scmp.ne.s32.totalorder %s24, %s26
      %p33 = scmp.eq.s32.totalorder %s21, 1
      %p34 = por %p32, %p33
      %p35 = scmp.ne.s32.totalorder %s26, %s27
      %p36 = scmp.eq.s32.totalorder %s21, 0
      %p37 = por %p35, %p36
      %p38 = scmp.ne.s32.totalorder %s26, %s27
      %p39 = scmp.eq.s32.totalorder %s22, 1
      %p40 = por %p38, %p39
      %p42 = scmp.ne.s32.totalorder %s27, %s41
      %p43 = scmp.eq.s32.totalorder %s22, 0
      %p44 = por %p42, %p43
      %s46 = sadd.s32 %s45, 1
      %p49 = scmp.eq.s32.totalorder %s16, 1
      %p50 = scmp.ne.s32.totalorder %s45, %s47
      %p51 = scmp.eq.s32.totalorder %s16, 0
      %p52 = por %p50, %p51
      %p53 = scmp.ne.s32.totalorder %s45, %s47
      %p54 = scmp.eq.s32.totalorder %s21, 1
      %p55 = por %p53, %p54
      %p56 = scmp.ne.s32.totalorder %s47, %s48
      %p57 = scmp.eq.s32.totalorder %s21, 0
      %p58 = por %p56, %p57
      %p59 = scmp.ne.s32.totalorder %s47, %s48
      %p60 = scmp.eq.s32.totalorder %s22, 1
      %p61 = por %p59, %p60
      %p63 = scmp.ne.s32.totalorder %s48, %s62
      %p64 = scmp.eq.s32.totalorder %s22, 0
      %p65 = por %p63, %p64
      %s66 = ssub.s32 %s16, %s23
      %p67 = scmp.eq.s32.totalorder %s66, 0
      %s69 = sadd.s32 %s68, 1
      %s70 = scalar_select %p67, %s68, %s69
      %p73 = pneg %p67
      %p74 = scmp.eq.s32.totalorder %s16, 1
      %p75 = por %p73, %p74
      %p76 = scmp.ne.s32.totalorder %s68, %s71
      %p77 = scmp.eq.s32.totalorder %s16, 0
      %p78 = por %p76, %p77
      %p79 = scmp.ne.s32.totalorder %s68, %s71
      %p80 = scmp.eq.s32.totalorder %s21, 1
      %p81 = por %p79, %p80
      %p82 = scmp.ne.s32.totalorder %s71, %s72
      %p83 = scmp.eq.s32.totalorder %s21, 0
      %p84 = por %p82, %p83
      %p85 = scmp.ne.s32.totalorder %s71, %s72
      %p86 = scmp.eq.s32.totalorder %s22, 1
      %p87 = por %p85, %p86
      %p89 = scmp.ne.s32.totalorder %s72, %s88
      %p90 = scmp.eq.s32.totalorder %s22, 0
      %p91 = por %p89, %p90
      %s93 = sadd.s32 %s92, 1
      %p96 = scmp.eq.s32.totalorder %s16, 1
      %p97 = scmp.ne.s32.totalorder %s92, %s94
      %p98 = scmp.eq.s32.totalorder %s16, 0
      %p99 = por %p97, %p98
      %p100 = scmp.ne.s32.totalorder %s92, %s94
      %p101 = scmp.eq.s32.totalorder %s21, 1
      %p102 = por %p100, %p101
      %p103 = scmp.ne.s32.totalorder %s94, %s95
      %p104 = scmp.eq.s32.totalorder %s21, 0
      %p105 = por %p103, %p104
      %p106 = scmp.ne.s32.totalorder %s94, %s95
      %p107 = scmp.eq.s32.totalorder %s22, 1
      %p108 = por %p106, %p107
      %p110 = scmp.ne.s32.totalorder %s95, %s109
      %p111 = scmp.eq.s32.totalorder %s22, 0
      %p112 = por %p110, %p111
      %s114 = sadd.s32 %s113, 1
      %p117 = scmp.eq.s32.totalorder %s16, 1
      %p118 = scmp.ne.s32.totalorder %s113, %s115
      %p119 = scmp.eq.s32.totalorder %s16, 0
      %p120 = por %p118, %p119
      %p121 = scmp.ne.s32.totalorder %s113, %s115
      %p122 = scmp.eq.s32.totalorder %s21, 1
      %p123 = por %p121, %p122
      %p124 = scmp.ne.s32.totalorder %s115, %s116
      %p125 = scmp.eq.s32.totalorder %s21, 0
      %p126 = por %p124, %p125
      %p127 = scmp.ne.s32.totalorder %s115, %s116
      %p128 = scmp.eq.s32.totalorder %s22, 1
      %p129 = por %p127, %p128
      %p131 = scmp.ne.s32.totalorder %s116, %s130
      %p132 = scmp.eq.s32.totalorder %s22, 0
      %p133 = por %p131, %p132
      %s134 = ssub.s32 %s16, %s23
      %p135 = scmp.eq.s32.totalorder %s134, 0
      %s137 = sadd.s32 %s136, 1
      %s138 = scalar_select %p135, %s136, %s137
      %p141 = pneg %p135
      %p142 = scmp.eq.s32.totalorder %s16, 1
      %p143 = por %p141, %p142
      %p144 = scmp.ne.s32.totalorder %s136, %s139
      %p145 = scmp.eq.s32.totalorder %s16, 0
      %p146 = por %p144, %p145
      %p147 = scmp.ne.s32.totalorder %s136, %s139
      %p148 = scmp.eq.s32.totalorder %s21, 1
      %p149 = por %p147, %p148
      %p150 = scmp.ne.s32.totalorder %s139, %s140
      %p151 = scmp.eq.s32.totalorder %s21, 0
      %p152 = por %p150, %p151
      %p153 = scmp.ne.s32.totalorder %s139, %s140
      %p154 = scmp.eq.s32.totalorder %s22, 1
      %p155 = por %p153, %p154
      %p157 = scmp.ne.s32.totalorder %s140, %s156
      %p158 = scmp.eq.s32.totalorder %s22, 0
      %p159 = por %p157, %p158
      %p160 = scmp.le.s32.totalorder 1, %s16
      %p161 = scmp.lt.s32.totalorder %s16, 3
      %p162 = pnand %p160, %p161
      %p163 = pneg %p162
      // Predicated region
      $region9: #{tpu_custom_call.1} parent=5 // pred_check
        _
      $region10: #{tpu_custom_call.1} parent=5 // pred_check_branch
        %165 = sbr.rel (%p162) target = $region12
      $region11: #{tpu_custom_call.1} parent=5 // pred_region
        %s166 = ssub.s32 %s16, 1
        // Predicated region
        $region13: #{tpu_custom_call.1} parent=11 // pred_check
          %p167 = pneg %p37
        $region14: #{tpu_custom_call.1} parent=11 // pred_check_branch
          %169 = sbr.rel (%p167) target = $region16
        $region15: #{tpu_custom_call.1} parent=11 // pred_region
          %s171 = ssub.s32 8960, 8960
          %172 = vsyncadd [#allocation3], %s171
          %s173 = sshll.u32 [#allocation2], 4
          %s174 = int_to_ptr.vmem [resolvable:$true] %s173
          %179 = dma.hbm_to_vmem [thread:$0]  %s0, 8960, %s174, [#allocation3], 896, 896, 56
        $region16: #{tpu_custom_call.1} parent=11 // pred_fallthru
          _
        // Predicated region
        $region17: #{tpu_custom_call.1} parent=11 // pred_check
          %p180 = pneg %p58
        $region18: #{tpu_custom_call.1} parent=11 // pred_check_branch
          %182 = sbr.rel (%p180) target = $region20
        $region19: #{tpu_custom_call.1} parent=11 // pred_region
          %s184 = ssub.s32 8960, 8960
          %185 = vsyncadd [#allocation6], %s184
          %s186 = sshll.u32 [#allocation5], 4
          %s187 = int_to_ptr.vmem [resolvable:$true] %s186
          %192 = dma.hbm_to_vmem [thread:$0]  %s1, 8960, %s187, [#allocation6], 896, 896, 56
        $region20: #{tpu_custom_call.1} parent=11 // pred_fallthru
          _
        // Predicated region
        $region21: #{tpu_custom_call.1} parent=11 // pred_check
          %p193 = pneg %p105
        $region22: #{tpu_custom_call.1} parent=11 // pred_check_branch
          %195 = sbr.rel (%p193) target = $region24
        $region23: #{tpu_custom_call.1} parent=11 // pred_region
          _
        $region24: #{tpu_custom_call.1} parent=11 // pred_fallthru
          _
        // Predicated region
        $region25: #{tpu_custom_call.1} parent=11 // pred_check
          %p196 = pneg %p126
        $region26: #{tpu_custom_call.1} parent=11 // pred_check_branch
          %198 = sbr.rel (%p196) target = $region28
        $region27: #{tpu_custom_call.1} parent=11 // pred_region
          _
        $region28: #{tpu_custom_call.1} parent=11 // pred_fallthru
          _
      $region12: #{tpu_custom_call.1} parent=5 // pred_fallthru
        _
      %p199 = scmp.lt.s32.totalorder %s16, 2
      // Predicated region
      $region29: #{tpu_custom_call.1} parent=5 // pred_check
        %p200 = pneg %p199
      $region30: #{tpu_custom_call.1} parent=5 // pred_check_branch
        %202 = sbr.rel (%p200) target = $region32
      $region31: #{tpu_custom_call.1} parent=5 // pred_region
        // Predicated region
        $region33: #{tpu_custom_call.1} parent=31 // pred_check
          %p203 = pneg %p78
        $region34: #{tpu_custom_call.1} parent=31 // pred_check_branch
          %205 = sbr.rel (%p203) target = $region36
        $region35: #{tpu_custom_call.1} parent=31 // pred_region
          %s206 = smul.u32 30, %s16
          %p207 = scmp.lt.s32.totalorder %s206, 59
          %s208 = scalar_select %p207, %s206, 59
          %s209 = smul.addr %s208, 8
          %s210 = scalar_lea.vmem %s2, %s209
          %s211 = smul.u32 30, %s16
        $region36: #{tpu_custom_call.1} parent=31 // pred_fallthru
          _
      $region32: #{tpu_custom_call.1} parent=5 // pred_fallthru
        _
      %p212 = scmp.le.s32.totalorder 1, %s16
      %p213 = scmp.lt.s32.totalorder %s16, 3
      %p214 = pnand %p212, %p213
      %p215 = pneg %p214
      // Predicated region
      $region37: #{tpu_custom_call.1} parent=5 // pred_check
        _
      $region38: #{tpu_custom_call.1} parent=5 // pred_check_branch
        %217 = sbr.rel (%p214) target = $region40
      $region39: #{tpu_custom_call.1} parent=5 // pred_region
        %s218 = ssub.s32 %s16, 1
        // Predicated region
        $region41: #{tpu_custom_call.1} parent=39 // pred_check
          %p219 = pneg %p37
        $region42: #{tpu_custom_call.1} parent=39 // pred_check_branch
          %221 = sbr.rel (%p219) target = $region44
        $region43: #{tpu_custom_call.1} parent=39 // pred_region
          %222 = dma.done [#allocation3], 8960
        $region44: #{tpu_custom_call.1} parent=39 // pred_fallthru
          _
        // Predicated region
        $region45: #{tpu_custom_call.1} parent=39 // pred_check
          %p223 = pneg %p58
        $region46: #{tpu_custom_call.1} parent=39 // pred_check_branch
          %225 = sbr.rel (%p223) target = $region48
        $region47: #{tpu_custom_call.1} parent=39 // pred_region
          %226 = dma.done [#allocation6], 8960
        $region48: #{tpu_custom_call.1} parent=39 // pred_fallthru
          _
        %p227 = pneg %p37
        %p228 = pneg %p34
        %p229 = pneg %p58
        %p230 = pneg %p55
        %s231 = smul.u32 30, %s21
        %p232 = scmp.lt.s32.totalorder %s231, 59
        %s233 = scalar_select %p232, %s231, 59
        %s234 = smul.addr %s233, 8
        %s235 = scalar_lea.vmem %s2, %s234
        %p236 = pneg %p84
        %p237 = pneg %p81
        %p238 = pneg %p105
        %p239 = pneg %p102
        %p240 = pneg %p126
        %p241 = pneg %p123
        %p242 = pneg %p152
        %p243 = pneg %p149
        %s244 = sand.u32 %s139, 1
        %s245 = scalar_lea.sflag [#allocation4], %s244
        %s246 = sand.u32 %s139, 1
        %s247 = smul.addr %s246, 1680
        %s248 = scalar_lea.vmem [#allocation7], %s247
        %s249 = smul.u32 30, %s21
        %p250 = scmp.lt.s32.totalorder %s249, 59
        %s251 = scalar_select %p250, %s249, 59
        %s252 = smul.addr %s251, 8
        %s253 = scalar_lea.vmem %s2, %s252
        %s254 = smul.u32 30, %s21
        %s255 = smul.u32 30, %s21
        %v256 = vld [vmem:[#allocation2] sm:$0xff]
        %v257 = vld [vmem:[#allocation2 + $0x8] sm:$0xff]
        %v258 = vld [vmem:[#allocation2 + $0x10] sm:$0xff]
        %v259 = vld [vmem:[#allocation2 + $0x18] sm:$0xff]
        %v260 = vld [vmem:[#allocation2 + $0x20] sm:$0xff]
        %v261 = vld [vmem:[#allocation2 + $0x28] sm:$0xff]
        %v262 = vld [vmem:[#allocation2 + $0x30] sm:$0xff]
        %v263 = vld [vmem:[#allocation2 + $0x38] sm:$0xff]
        %v264 = vld [vmem:[#allocation2 + $0x40] sm:$0xff]
        %v265 = vld [vmem:[#allocation2 + $0x48] sm:$0xff]
        %v266 = vld [vmem:[#allocation2 + $0x50] sm:$0xff]
        %v267 = vld [vmem:[#allocation2 + $0x58] sm:$0xff]
        %v268 = vld [vmem:[#allocation2 + $0x60] sm:$0xff]
        %v269 = vld [vmem:[#allocation2 + $0x68] sm:$0xff]
        %v270 = vld [vmem:[#allocation2 + $0x70] sm:$0xff]
        %v271 = vld [vmem:[#allocation2 + $0x78] sm:$0xff]
        %v272 = vld [vmem:[#allocation2 + $0x80] sm:$0xff]
        %v273 = vld [vmem:[#allocation2 + $0x88] sm:$0xff]
        %v274 = vld [vmem:[#allocation2 + $0x90] sm:$0xff]
        %v275 = vld [vmem:[#allocation2 + $0x98] sm:$0xff]
        %v276 = vld [vmem:[#allocation2 + $0xa0] sm:$0xff]
        %v277 = vld [vmem:[#allocation2 + $0xa8] sm:$0xff]
        %v278 = vld [vmem:[#allocation2 + $0xb0] sm:$0xff]
        %v279 = vld [vmem:[#allocation2 + $0xb8] sm:$0xff]
        %v280 = vld [vmem:[#allocation2 + $0xc0] sm:$0xff]
        %v281 = vld [vmem:[#allocation2 + $0xc8] sm:$0xff]
        %v282 = vld [vmem:[#allocation2 + $0xd0] sm:$0xff]
        %v283 = vld [vmem:[#allocation2 + $0xd8] sm:$0xff]
        %v284 = vld [vmem:[#allocation2 + $0xe0] sm:$0xff]
        %v285 = vld [vmem:[#allocation2 + $0xe8] sm:$0xff]
        %v286 = vld [vmem:[#allocation2 + $0xf0] sm:$0xff]
        %v287 = vld [vmem:[#allocation2 + $0xf8] sm:$0xff]
        %v288 = vld [vmem:[#allocation2 + $0x100] sm:$0xff]
        %v289 = vld [vmem:[#allocation2 + $0x108] sm:$0xff]
        %v290 = vld [vmem:[#allocation2 + $0x110] sm:$0xff]
        %v291 = vld [vmem:[#allocation2 + $0x118] sm:$0xff]
        %v292 = vld [vmem:[#allocation2 + $0x120] sm:$0xff]
        %v293 = vld [vmem:[#allocation2 + $0x128] sm:$0xff]
        %v294 = vld [vmem:[#allocation2 + $0x130] sm:$0xff]
        %v295 = vld [vmem:[#allocation2 + $0x138] sm:$0xff]
        %v296 = vld [vmem:[#allocation2 + $0x140] sm:$0xff]
        %v297 = vld [vmem:[#allocation2 + $0x148] sm:$0xff]
        %v298 = vld [vmem:[#allocation2 + $0x150] sm:$0xff]
        %v299 = vld [vmem:[#allocation2 + $0x158] sm:$0xff]
        %v300 = vld [vmem:[#allocation2 + $0x160] sm:$0xff]
        %v301 = vld [vmem:[#allocation2 + $0x168] sm:$0xff]
        %v302 = vld [vmem:[#allocation2 + $0x170] sm:$0xff]
        %v303 = vld [vmem:[#allocation2 + $0x178] sm:$0xff]
        %v304 = vld [vmem:[#allocation2 + $0x180] sm:$0xff]
        %v305 = vld [vmem:[#allocation2 + $0x188] sm:$0xff]
        %v306 = vld [vmem:[#allocation2 + $0x190] sm:$0xff]
        %v307 = vld [vmem:[#allocation2 + $0x198] sm:$0xff]
        %v308 = vld [vmem:[#allocation2 + $0x1a0] sm:$0xff]
        %v309 = vld [vmem:[#allocation2 + $0x1a8] sm:$0xff]
        %v310 = vld [vmem:[#allocation2 + $0x1b0] sm:$0xff]
        %v311 = vld [vmem:[#allocation2 + $0x1b8] sm:$0xff]
        %v312 = vld [vmem:[#allocation2 + $0x1c0] sm:$0xff]
        %v313 = vld [vmem:[#allocation2 + $0x1c8] sm:$0xff]
        %v314 = vld [vmem:[#allocation2 + $0x1d0] sm:$0xff]
        %v315 = vld [vmem:[#allocation2 + $0x1d8] sm:$0xff]
        %v316 = vld [vmem:[#allocation2 + $0x1e0] sm:$0xff]
        %v317 = vld [vmem:[#allocation2 + $0x1e8] sm:$0xff]
        %v318 = vld [vmem:[#allocation2 + $0x1f0] sm:$0xff]
        %v319 = vld [vmem:[#allocation2 + $0x1f8] sm:$0xff]
        %v320 = vld [vmem:[#allocation2 + $0x200] sm:$0xff]
        %v321 = vld [vmem:[#allocation2 + $0x208] sm:$0xff]
        %v322 = vld [vmem:[#allocation2 + $0x210] sm:$0xff]
        %v323 = vld [vmem:[#allocation2 + $0x218] sm:$0xff]
        %v324 = vld [vmem:[#allocation2 + $0x220] sm:$0xff]
        %v325 = vld [vmem:[#allocation2 + $0x228] sm:$0xff]
        %v326 = vld [vmem:[#allocation5] sm:$0xff]
        %v327 = vld [vmem:[#allocation5 + $0x8] sm:$0xff]
        %v328 = vld [vmem:[#allocation5 + $0x10] sm:$0xff]
        %v329 = vld [vmem:[#allocation5 + $0x18] sm:$0xff]
        %v330 = vld [vmem:[#allocation5 + $0x20] sm:$0xff]
        %v331 = vld [vmem:[#allocation5 + $0x28] sm:$0xff]
        %v332 = vld [vmem:[#allocation5 + $0x30] sm:$0xff]
        %v333 = vld [vmem:[#allocation5 + $0x38] sm:$0xff]
        %v334 = vld [vmem:[#allocation5 + $0x40] sm:$0xff]
        %v335 = vld [vmem:[#allocation5 + $0x48] sm:$0xff]
        %v336 = vld [vmem:[#allocation5 + $0x50] sm:$0xff]
        %v337 = vld [vmem:[#allocation5 + $0x58] sm:$0xff]
        %v338 = vld [vmem:[#allocation5 + $0x60] sm:$0xff]
        %v339 = vld [vmem:[#allocation5 + $0x68] sm:$0xff]
        %v340 = vld [vmem:[#allocation5 + $0x70] sm:$0xff]
        %v341 = vld [vmem:[#allocation5 + $0x78] sm:$0xff]
        %v342 = vld [vmem:[#allocation5 + $0x80] sm:$0xff]
        %v343 = vld [vmem:[#allocation5 + $0x88] sm:$0xff]
        %v344 = vld [vmem:[#allocation5 + $0x90] sm:$0xff]
        %v345 = vld [vmem:[#allocation5 + $0x98] sm:$0xff]
        %v346 = vld [vmem:[#allocation5 + $0xa0] sm:$0xff]
        %v347 = vld [vmem:[#allocation5 + $0xa8] sm:$0xff]
        %v348 = vld [vmem:[#allocation5 + $0xb0] sm:$0xff]
        %v349 = vld [vmem:[#allocation5 + $0xb8] sm:$0xff]
        %v350 = vld [vmem:[#allocation5 + $0xc0] sm:$0xff]
        %v351 = vld [vmem:[#allocation5 + $0xc8] sm:$0xff]
        %v352 = vld [vmem:[#allocation5 + $0xd0] sm:$0xff]
        %v353 = vld [vmem:[#allocation5 + $0xd8] sm:$0xff]
        %v354 = vld [vmem:[#allocation5 + $0xe0] sm:$0xff]
        %v355 = vld [vmem:[#allocation5 + $0xe8] sm:$0xff]
        %v356 = vld [vmem:[#allocation5 + $0xf0] sm:$0xff]
        %v357 = vld [vmem:[#allocation5 + $0xf8] sm:$0xff]
        %v358 = vld [vmem:[#allocation5 + $0x100] sm:$0xff]
        %v359 = vld [vmem:[#allocation5 + $0x108] sm:$0xff]
        %v360 = vld [vmem:[#allocation5 + $0x110] sm:$0xff]
        %v361 = vld [vmem:[#allocation5 + $0x118] sm:$0xff]
        %v362 = vld [vmem:[#allocation5 + $0x120] sm:$0xff]
        %v363 = vld [vmem:[#allocation5 + $0x128] sm:$0xff]
        %v364 = vld [vmem:[#allocation5 + $0x130] sm:$0xff]
        %v365 = vld [vmem:[#allocation5 + $0x138] sm:$0xff]
        %v366 = vld [vmem:[#allocation5 + $0x140] sm:$0xff]
        %v367 = vld [vmem:[#allocation5 + $0x148] sm:$0xff]
        %v368 = vld [vmem:[#allocation5 + $0x150] sm:$0xff]
        %v369 = vld [vmem:[#allocation5 + $0x158] sm:$0xff]
        %v370 = vld [vmem:[#allocation5 + $0x160] sm:$0xff]
        %v371 = vld [vmem:[#allocation5 + $0x168] sm:$0xff]
        %v372 = vld [vmem:[#allocation5 + $0x170] sm:$0xff]
        %v373 = vld [vmem:[#allocation5 + $0x178] sm:$0xff]
        %v374 = vld [vmem:[#allocation5 + $0x180] sm:$0xff]
        %v375 = vld [vmem:[#allocation5 + $0x188] sm:$0xff]
        %v376 = vld [vmem:[#allocation5 + $0x190] sm:$0xff]
        %v377 = vld [vmem:[#allocation5 + $0x198] sm:$0xff]
        %v378 = vld [vmem:[#allocation5 + $0x1a0] sm:$0xff]
        %v379 = vld [vmem:[#allocation5 + $0x1a8] sm:$0xff]
        %v380 = vld [vmem:[#allocation5 + $0x1b0] sm:$0xff]
        %v381 = vld [vmem:[#allocation5 + $0x1b8] sm:$0xff]
        %v382 = vld [vmem:[#allocation5 + $0x1c0] sm:$0xff]
        %v383 = vld [vmem:[#allocation5 + $0x1c8] sm:$0xff]
        %v384 = vld [vmem:[#allocation5 + $0x1d0] sm:$0xff]
        %v385 = vld [vmem:[#allocation5 + $0x1d8] sm:$0xff]
        %v386 = vld [vmem:[#allocation5 + $0x1e0] sm:$0xff]
        %v387 = vld [vmem:[#allocation5 + $0x1e8] sm:$0xff]
        %v388 = vld [vmem:[#allocation5 + $0x1f0] sm:$0xff]
        %v389 = vld [vmem:[#allocation5 + $0x1f8] sm:$0xff]
        %v390 = vld [vmem:[#allocation5 + $0x200] sm:$0xff]
        %v391 = vld [vmem:[#allocation5 + $0x208] sm:$0xff]
        %v392 = vld [vmem:[#allocation5 + $0x210] sm:$0xff]
        %v393 = vld [vmem:[#allocation5 + $0x218] sm:$0xff]
        %v394 = vld [vmem:[#allocation5 + $0x220] sm:$0xff]
        %v395 = vld [vmem:[#allocation5 + $0x228] sm:$0xff]
        %v396 = vadd.f32 %v256, %v326
        %v397 = vadd.f32 %v257, %v327
        %v398 = vadd.f32 %v258, %v328
        %v399 = vadd.f32 %v259, %v329
        %v400 = vadd.f32 %v260, %v330
        %v401 = vadd.f32 %v261, %v331
        %v402 = vadd.f32 %v262, %v332
        %v403 = vadd.f32 %v263, %v333
        %v404 = vadd.f32 %v264, %v334
        %v405 = vadd.f32 %v265, %v335
        %v406 = vadd.f32 %v266, %v336
        %v407 = vadd.f32 %v267, %v337
        %v408 = vadd.f32 %v268, %v338
        %v409 = vadd.f32 %v269, %v339
        %v410 = vadd.f32 %v270, %v340
        %v411 = vadd.f32 %v271, %v341
        %v412 = vadd.f32 %v272, %v342
        %v413 = vadd.f32 %v273, %v343
        %v414 = vadd.f32 %v274, %v344
        %v415 = vadd.f32 %v275, %v345
        %v416 = vadd.f32 %v276, %v346
        %v417 = vadd.f32 %v277, %v347
        %v418 = vadd.f32 %v278, %v348
        %v419 = vadd.f32 %v279, %v349
        %v420 = vadd.f32 %v280, %v350
        %v421 = vadd.f32 %v281, %v351
        %v422 = vadd.f32 %v282, %v352
        %v423 = vadd.f32 %v283, %v353
        %v424 = vadd.f32 %v284, %v354
        %v425 = vadd.f32 %v285, %v355
        %v426 = vadd.f32 %v286, %v356
        %v427 = vadd.f32 %v287, %v357
        %v428 = vadd.f32 %v288, %v358
        %v429 = vadd.f32 %v289, %v359
        %v430 = vadd.f32 %v290, %v360
        %v431 = vadd.f32 %v291, %v361
        %v432 = vadd.f32 %v292, %v362
        %v433 = vadd.f32 %v293, %v363
        %v434 = vadd.f32 %v294, %v364
        %v435 = vadd.f32 %v295, %v365
        %v436 = vadd.f32 %v296, %v366
        %v437 = vadd.f32 %v297, %v367
        %v438 = vadd.f32 %v298, %v368
        %v439 = vadd.f32 %v299, %v369
        %v440 = vadd.f32 %v300, %v370
        %v441 = vadd.f32 %v301, %v371
        %v442 = vadd.f32 %v302, %v372
        %v443 = vadd.f32 %v303, %v373
        %v444 = vadd.f32 %v304, %v374
        %v445 = vadd.f32 %v305, %v375
        %v446 = vadd.f32 %v306, %v376
        %v447 = vadd.f32 %v307, %v377
        %v448 = vadd.f32 %v308, %v378
        %v449 = vadd.f32 %v309, %v379
        %v450 = vadd.f32 %v310, %v380
        %v451 = vadd.f32 %v311, %v381
        %v452 = vadd.f32 %v312, %v382
        %v453 = vadd.f32 %v313, %v383
        %v454 = vadd.f32 %v314, %v384
        %v455 = vadd.f32 %v315, %v385
        %v456 = vadd.f32 %v316, %v386
        %v457 = vadd.f32 %v317, %v387
        %v458 = vadd.f32 %v318, %v388
        %v459 = vadd.f32 %v319, %v389
        %v460 = vadd.f32 %v320, %v390
        %v461 = vadd.f32 %v321, %v391
        %v462 = vadd.f32 %v322, %v392
        %v463 = vadd.f32 %v323, %v393
        %v464 = vadd.f32 %v324, %v394
        %v465 = vadd.f32 %v325, %v395
        %v466 = vld [vmem:[%s253] sm:$0xff]
        %v467 = vld [vmem:[%s253 + $0x8] sm:$0xff]
        %v468 = vld [vmem:[%s253 + $0x10] sm:$0xff]
        %v469 = vld [vmem:[%s253 + $0x18] sm:$0xff]
        %v470 = vld [vmem:[%s253 + $0x20] sm:$0xff]
        %v471 = vld [vmem:[%s253 + $0x28] sm:$0xff]
        %v472 = vld [vmem:[%s253 + $0x30] sm:$0xff]
        %v473 = vld [vmem:[%s253 + $0x38] sm:$0xff]
        %v474 = vld [vmem:[%s253 + $0x40] sm:$0xff]
        %v475 = vld [vmem:[%s253 + $0x48] sm:$0xff]
        %v476 = vld [vmem:[%s253 + $0x50] sm:$0xff]
        %v477 = vld [vmem:[%s253 + $0x58] sm:$0xff]
        %v478 = vld [vmem:[%s253 + $0x60] sm:$0xff]
        %v479 = vld [vmem:[%s253 + $0x68] sm:$0xff]
        %v480 = vld [vmem:[%s253 + $0x70] sm:$0xff]
        %v481 = vld [vmem:[%s253 + $0x78] sm:$0xff]
        %v482 = vld [vmem:[%s253 + $0x80] sm:$0xff]
        %v483 = vld [vmem:[%s253 + $0x88] sm:$0xff]
        %v484 = vld [vmem:[%s253 + $0x90] sm:$0xff]
        %v485 = vld [vmem:[%s253 + $0x98] sm:$0xff]
        %v486 = vld [vmem:[%s253 + $0xa0] sm:$0xff]
        %v487 = vld [vmem:[%s253 + $0xa8] sm:$0xff]
        %v488 = vld [vmem:[%s253 + $0xb0] sm:$0xff]
        %v489 = vld [vmem:[%s253 + $0xb8] sm:$0xff]
        %v490 = vld [vmem:[%s253 + $0xc0] sm:$0xff]
        %v491 = vld [vmem:[%s253 + $0xc8] sm:$0xff]
        %v492 = vld [vmem:[%s253 + $0xd0] sm:$0xff]
        %v493 = vld [vmem:[%s253 + $0xd8] sm:$0xff]
        %v494 = vld [vmem:[%s253 + $0xe0] sm:$0xff]
        %v495 = vld [vmem:[%s253 + $0xe8] sm:$0xff]
        %vm496 = vcmask 654336
        %v498 = vsel %vm496, %v466, 0
        %v501 = vsel %vm496, %v467, 0
        %v504 = vsel %vm496, %v468, 0
        %v507 = vsel %vm496, %v469, 0
        %v510 = vsel %vm496, %v470, 0
        %v513 = vsel %vm496, %v471, 0
        %v516 = vsel %vm496, %v472, 0
        %v519 = vsel %vm496, %v473, 0
        %v522 = vsel %vm496, %v474, 0
        %v525 = vsel %vm496, %v475, 0
        %v528 = vsel %vm496, %v476, 0
        %v531 = vsel %vm496, %v477, 0
        %v534 = vsel %vm496, %v478, 0
        %v537 = vsel %vm496, %v479, 0
        %v540 = vsel %vm496, %v480, 0
        %v543 = vsel %vm496, %v481, 0
        %v546 = vsel %vm496, %v482, 0
        %v549 = vsel %vm496, %v483, 0
        %v552 = vsel %vm496, %v484, 0
        %v555 = vsel %vm496, %v485, 0
        %v558 = vsel %vm496, %v486, 0
        %v561 = vsel %vm496, %v487, 0
        %v564 = vsel %vm496, %v488, 0
        %v567 = vsel %vm496, %v489, 0
        %v570 = vsel %vm496, %v490, 0
        %v573 = vsel %vm496, %v491, 0
        %v576 = vsel %vm496, %v492, 0
        %v579 = vsel %vm496, %v493, 0
        %v582 = vsel %vm496, %v494, 0
        %v585 = vsel %vm496, %v495, 0
        %587 = vmatprep.subr.mxu0 %v397
        %588 = vmatpush1.msra.mxu0 %v396
        %589 = vmatprep.subr.mxu0 %v404
        %590 = vmatpush1.msra.mxu0 %v403
        %591 = vmatprep.subr.mxu0 %v411
        %592 = vmatpush1.msra.mxu0 %v410
        %593 = vmatprep.subr.mxu0 %v418
        %594 = vmatpush1.msra.mxu0 %v417
        %595 = vmatprep.subr.mxu0 %v425
        %596 = vmatpush1.msra.mxu0 %v424
        %597 = vmatprep.subr.mxu0 %v432
        %598 = vmatpush1.msra.mxu0 %v431
        %599 = vmatprep.subr.mxu0 %v439
        %600 = vmatpush1.msra.mxu0 %v438
        %601 = vmatprep.subr.mxu0 %v446
        %602 = vmatpush1.msra.mxu0 %v445
        %603 = vmatprep.subr.mxu0 %v453
        %604 = vmatpush1.msra.mxu0 %v452
        %605 = vmatprep.subr.mxu0 %v460
        %606 = vmatpush1.msra.mxu0 %v459
        %607 = vmatprep.subr.mxu0 0.0
        %608 = vmatpush1.msra.mxu0 0.0
        %609 = vmatprep.subr.mxu0 0.0
        %610 = vmatpush1.msra.mxu0 0.0
        %611 = vmatprep.subr.mxu0 0.0
        %612 = vmatpush1.msra.mxu0 0.0
        %613 = vmatprep.subr.mxu0 0.0
        %614 = vmatpush1.msra.mxu0 0.0
        %615 = vmatprep.subr.mxu0 0.0
        %616 = vmatpush1.msra.mxu0 0.0
        %617 = vmatprep.subr.mxu0 0.0
        %618 = vmatpush1.msra.mxu0 0.0
        %619 = vmatprep.subr.mxu0 0.0
        %620 = vmatpush1.msra.mxu0 0.0
        %621 = vmatprep.subr.mxu0 0.0
        %622 = vmatpush1.msra.mxu0 0.0
        %623 = vmatprep.subr.mxu0 0.0
        %624 = vmatpush1.msra.mxu0 0.0
        %625 = vmatprep.subr.mxu0 0.0
        %626 = vmatpush1.msra.mxu0 0.0
        %627 = vmatprep.subr.mxu0 0.0
        %628 = vmatpush1.msra.mxu0 0.0
        %629 = vmatprep.subr.mxu0 0.0
        %630 = vmatpush1.msra.mxu0 0.0
        %631 = vmatprep.subr.mxu0 0.0
        %632 = vmatpush1.msra.mxu0 0.0
        %633 = vmatprep.subr.mxu0 0.0
        %634 = vmatpush1.msra.mxu0 0.0
        %635 = vmatprep.subr.mxu0 0.0
        %636 = vmatpush1.msra.mxu0 0.0
        %637 = vmatprep.subr.mxu0 0.0
        %638 = vmatpush1.msra.mxu0 0.0
        %639 = vmatprep.subr.mxu0 0.0
        %640 = vmatpush1.msra.mxu0 0.0
        %641 = vmatprep.subr.mxu0 0.0
        %642 = vmatpush1.msra.mxu0 0.0
        %643 = vmatprep.subr.mxu0 0.0
        %644 = vmatpush1.msra.mxu0 0.0
        %645 = vmatprep.subr.mxu0 0.0
        %646 = vmatpush1.msra.mxu0 0.0
        %647 = vmatprep.subr.mxu0 0.0
        %648 = vmatpush1.msra.mxu0 0.0
        %649 = vmatprep.subr.mxu0 0.0
        %650 = vmatpush1.msra.mxu0 0.0
        %651 = vmatprep.mubr.f32.mxu0 0.0
        %652 = vmatmul.mubr.f32.gmra.mrb[0].mxu0 %v498
        %v653 = vpop.f32.mrb[0].mxu0
        %v654 = vadd.f32 0.0, %v653
        %v655 = vpop.f32.mrb[0].mxu0
        %v656 = vadd.f32 0.0, %v655
        %657 = vmatprep.mubr.f32.mxu0 0.0
        %658 = vmatmul.mubr.f32.gmra.mrb[0].mxu0 %v501
        %v659 = vpop.f32.mrb[0].mxu0
        %v660 = vadd.f32 0.0, %v659
        %v661 = vpop.f32.mrb[0].mxu0
        %v662 = vadd.f32 0.0, %v661
        %663 = vmatprep.mubr.f32.mxu0 0.0
        %664 = vmatmul.mubr.f32.gmra.mrb[0].mxu0 %v504
        %v665 = vpop.f32.mrb[0].mxu0
        %v666 = vadd.f32 0.0, %v665
        %v667 = vpop.f32.mrb[0].mxu0
        %v668 = vadd.f32 0.0, %v667
        %669 = vmatprep.mubr.f32.mxu0 0.0
        %670 = vmatmul.mubr.f32.gmra.mrb[0].mxu0 %v507
        %v671 = vpop.f32.mrb[0].mxu0
        %v672 = vadd.f32 0.0, %v671
        %v673 = vpop.f32.mrb[0].mxu0
        %v674 = vadd.f32 0.0, %v673
        %675 = vmatprep.mubr.f32.mxu0 0.0
        %676 = vmatmul.mubr.f32.gmra.mrb[0].mxu0 %v510
        %v677 = vpop.f32.mrb[0].mxu0
        %v678 = vadd.f32 0.0, %v677
        %v679 = vpop.f32.mrb[0].mxu0
        %v680 = vadd.f32 0.0, %v679
        %681 = vmatprep.mubr.f32.mxu0 0.0
        %682 = vmatmul.mubr.f32.gmra.mrb[0].mxu0 %v513
        %v683 = vpop.f32.mrb[0].mxu0
        %v684 = vadd.f32 0.0, %v683
        %v685 = vpop.f32.mrb[0].mxu0
        %v686 = vadd.f32 0.0, %v685
        %687 = vmatprep.mubr.f32.mxu0 0.0
        %688 = vmatmul.mubr.f32.gmra.mrb[0].mxu0 %v516
        %v689 = vpop.f32.mrb[0].mxu0
        %v690 = vadd.f32 0.0, %v689
        %v691 = vpop.f32.mrb[0].mxu0
        %v692 = vadd.f32 0.0, %v691
        %693 = vmatprep.mubr.f32.mxu0 0.0
        %694 = vmatmul.mubr.f32.gmra.mrb[0].mxu0 %v519
        %v695 = vpop.f32.mrb[0].mxu0
        %v696 = vadd.f32 0.0, %v695
        %v697 = vpop.f32.mrb[0].mxu0
        %v698 = vadd.f32 0.0, %v697
        %699 = vmatprep.mubr.f32.mxu0 0.0
        %700 = vmatmul.mubr.f32.gmra.mrb[0].mxu0 %v522
        %v701 = vpop.f32.mrb[0].mxu0
        %v702 = vadd.f32 0.0, %v701
        %v703 = vpop.f32.mrb[0].mxu0
        %v704 = vadd.f32 0.0, %v703
        %705 = vmatprep.mubr.f32.mxu0 0.0
        %706 = vmatmul.mubr.f32.gmra.mrb[0].mxu0 %v525
        %v707 = vpop.f32.mrb[0].mxu0
        %v708 = vadd.f32 0.0, %v707
        %v709 = vpop.f32.mrb[0].mxu0
        %v710 = vadd.f32 0.0, %v709
        %711 = vmatprep.mubr.f32.mxu0 0.0
        %712 = vmatmul.mubr.f32.gmra.mrb[0].mxu0 %v528
        %v713 = vpop.f32.mrb[0].mxu0
        %v714 = vadd.f32 0.0, %v713
        %v715 = vpop.f32.mrb[0].mxu0
        %v716 = vadd.f32 0.0, %v715
        %717 = vmatprep.mubr.f32.mxu0 0.0
        %718 = vmatmul.mubr.f32.gmra.mrb[0].mxu0 %v531
        %v719 = vpop.f32.mrb[0].mxu0
        %v720 = vadd.f32 0.0, %v719
        %v721 = vpop.f32.mrb[0].mxu0
        %v722 = vadd.f32 0.0, %v721
        %723 = vmatprep.mubr.f32.mxu0 0.0
        %724 = vmatmul.mubr.f32.gmra.mrb[0].mxu0 %v534
        %v725 = vpop.f32.mrb[0].mxu0
        %v726 = vadd.f32 0.0, %v725
        %v727 = vpop.f32.mrb[0].mxu0
        %v728 = vadd.f32 0.0, %v727
        %729 = vmatprep.mubr.f32.mxu0 0.0
        %730 = vmatmul.mubr.f32.gmra.mrb[0].mxu0 %v537
        %v731 = vpop.f32.mrb[0].mxu0
        %v732 = vadd.f32 0.0, %v731
        %v733 = vpop.f32.mrb[0].mxu0
        %v734 = vadd.f32 0.0, %v733
        %735 = vmatprep.mubr.f32.mxu0 0.0
        %736 = vmatmul.mubr.f32.gmra.mrb[0].mxu0 %v540
        %v737 = vpop.f32.mrb[0].mxu0
        %v738 = vadd.f32 0.0, %v737
        %v739 = vpop.f32.mrb[0].mxu0
        %v740 = vadd.f32 0.0, %v739
        %741 = vmatprep.mubr.f32.mxu0 0.0
        %742 = vmatmul.mubr.f32.gmra.mrb[0].mxu0 %v543
        %v743 = vpop.f32.mrb[0].mxu0
        %v744 = vadd.f32 0.0, %v743
        %v745 = vpop.f32.mrb[0].mxu0
        %v746 = vadd.f32 0.0, %v745
        %747 = vmatprep.mubr.f32.mxu0 0.0
        %748 = vmatmul.mubr.f32.gmra.mrb[0].mxu0 %v546
        %v749 = vpop.f32.mrb[0].mxu0
        %v750 = vadd.f32 0.0, %v749
        %v751 = vpop.f32.mrb[0].mxu0
        %v752 = vadd.f32 0.0, %v751
        %753 = vmatprep.mubr.f32.mxu0 0.0
        %754 = vmatmul.mubr.f32.gmra.mrb[0].mxu0 %v549
        %v755 = vpop.f32.mrb[0].mxu0
        %v756 = vadd.f32 0.0, %v755
        %v757 = vpop.f32.mrb[0].mxu0
        %v758 = vadd.f32 0.0, %v757
        %759 = vmatprep.mubr.f32.mxu0 0.0
        %760 = vmatmul.mubr.f32.gmra.mrb[0].mxu0 %v552
        %v761 = vpop.f32.mrb[0].mxu0
        %v762 = vadd.f32 0.0, %v761
        %v763 = vpop.f32.mrb[0].mxu0
        %v764 = vadd.f32 0.0, %v763
        %765 = vmatprep.mubr.f32.mxu0 0.0
        %766 = vmatmul.mubr.f32.gmra.mrb[0].mxu0 %v555
        %v767 = vpop.f32.mrb[0].mxu0
        %v768 = vadd.f32 0.0, %v767
        %v769 = vpop.f32.mrb[0].mxu0
        %v770 = vadd.f32 0.0, %v769
        %771 = vmatprep.mubr.f32.mxu0 0.0
        %772 = vmatmul.mubr.f32.gmra.mrb[0].mxu0 %v558
        %v773 = vpop.f32.mrb[0].mxu0
        %v774 = vadd.f32 0.0, %v773
        %v775 = vpop.f32.mrb[0].mxu0
        %v776 = vadd.f32 0.0, %v775
        %777 = vmatprep.mubr.f32.mxu0 0.0
        %778 = vmatmul.mubr.f32.gmra.mrb[0].mxu0 %v561
        %v779 = vpop.f32.mrb[0].mxu0
        %v780 = vadd.f32 0.0, %v779
        %v781 = vpop.f32.mrb[0].mxu0
        %v782 = vadd.f32 0.0, %v781
        %783 = vmatprep.mubr.f32.mxu0 0.0
        %784 = vmatmul.mubr.f32.gmra.mrb[0].mxu0 %v564
        %v785 = vpop.f32.mrb[0].mxu0
        %v786 = vadd.f32 0.0, %v785
        %v787 = vpop.f32.mrb[0].mxu0
        %v788 = vadd.f32 0.0, %v787
        %789 = vmatprep.mubr.f32.mxu0 0.0
        %790 = vmatmul.mubr.f32.gmra.mrb[0].mxu0 %v567
        %v791 = vpop.f32.mrb[0].mxu0
        %v792 = vadd.f32 0.0, %v791
        %v793 = vpop.f32.mrb[0].mxu0
        %v794 = vadd.f32 0.0, %v793
        %795 = vmatprep.mubr.f32.mxu0 0.0
        %796 = vmatmul.mubr.f32.gmra.mrb[0].mxu0 %v570
        %v797 = vpop.f32.mrb[0].mxu0
        %v798 = vadd.f32 0.0, %v797
        %v799 = vpop.f32.mrb[0].mxu0
        %v800 = vadd.f32 0.0, %v799
        %801 = vmatprep.mubr.f32.mxu0 0.0
        %802 = vmatmul.mubr.f32.gmra.mrb[0].mxu0 %v573
        %v803 = vpop.f32.mrb[0].mxu0
        %v804 = vadd.f32 0.0, %v803
        %v805 = vpop.f32.mrb[0].mxu0
        %v806 = vadd.f32 0.0, %v805
        %807 = vmatprep.mubr.f32.mxu0 0.0
        %808 = vmatmul.mubr.f32.gmra.mrb[0].mxu0 %v576
        %v809 = vpop.f32.mrb[0].mxu0
        %v810 = vadd.f32 0.0, %v809
        %v811 = vpop.f32.mrb[0].mxu0
        %v812 = vadd.f32 0.0, %v811
        %813 = vmatprep.mubr.f32.mxu0 0.0
        %814 = vmatmul.mubr.f32.gmra.mrb[0].mxu0 %v579
        %v815 = vpop.f32.mrb[0].mxu0
        %v816 = vadd.f32 0.0, %v815
        %v817 = vpop.f32.mrb[0].mxu0
        %v818 = vadd.f32 0.0, %v817
        %819 = vmatprep.mubr.f32.mxu0 0.0
        %820 = vmatmul.mubr.f32.gmra.mrb[0].mxu0 %v582
        %v821 = vpop.f32.mrb[0].mxu0
        %v822 = vadd.f32 0.0, %v821
        %v823 = vpop.f32.mrb[0].mxu0
        %v824 = vadd.f32 0.0, %v823
        %825 = vmatprep.mubr.f32.mxu0 0.0
        %826 = vmatmul.mubr.f32.gmra.mrb[0].mxu0 %v585
        %v827 = vpop.f32.mrb[0].mxu0
        %v828 = vadd.f32 0.0, %v827
        %v829 = vpop.f32.mrb[0].mxu0
        %v830 = vadd.f32 0.0, %v829
        %831 = vdwg.mxu0
        %832 = vmatprep.subr.mxu0 %v399
        %833 = vmatpush1.msra.mxu0 %v398
        %834 = vmatprep.subr.mxu0 %v406
        %835 = vmatpush1.msra.mxu0 %v405
        %836 = vmatprep.subr.mxu0 %v413
        %837 = vmatpush1.msra.mxu0 %v412
        %838 = vmatprep.subr.mxu0 %v420
        %839 = vmatpush1.msra.mxu0 %v419
        %840 = vmatprep.subr.mxu0 %v427
        %841 = vmatpush1.msra.mxu0 %v426
        %842 = vmatprep.subr.mxu0 %v434
        %843 = vmatpush1.msra.mxu0 %v433
        %844 = vmatprep.subr.mxu0 %v441
        %845 = vmatpush1.msra.mxu0 %v440
        %846 = vmatprep.subr.mxu0 %v448
        %847 = vmatpush1.msra.mxu0 %v447
        %848 = vmatprep.subr.mxu0 %v455
        %849 = vmatpush1.msra.mxu0 %v454
        %850 = vmatprep.subr.mxu0 %v462
        %851 = vmatpush1.msra.mxu0 %v461
        %852 = vmatprep.subr.mxu0 0.0
        %853 = vmatpush1.msra.mxu0 0.0
        %854 = vmatprep.subr.mxu0 0.0
        %855 = vmatpush1.msra.mxu0 0.0
        %856 = vmatprep.subr.mxu0 0.0
        %857 = vmatpush1.msra.mxu0 0.0
        %858 = vmatprep.subr.mxu0 0.0
        %859 = vmatpush1.msra.mxu0 0.0
        %860 = vmatprep.subr.mxu0 0.0
        %861 = vmatpush1.msra.mxu0 0.0
        %862 = vmatprep.subr.mxu0 0.0
        %863 = vmatpush1.msra.mxu0 0.0
        %864 = vmatprep.subr.mxu0 0.0
        %865 = vmatpush1.msra.mxu0 0.0
        %866 = vmatprep.subr.mxu0 0.0
        %867 = vmatpush1.msra.mxu0 0.0
        %868 = vmatprep.subr.mxu0 0.0
        %869 = vmatpush1.msra.mxu0 0.0
        %870 = vmatprep.subr.mxu0 0.0
        %871 = vmatpush1.msra.mxu0 0.0
        %872 = vmatprep.subr.mxu0 0.0
        %873 = vmatpush1.msra.mxu0 0.0
        %874 = vmatprep.subr.mxu0 0.0
        %875 = vmatpush1.msra.mxu0 0.0
        %876 = vmatprep.subr.mxu0 0.0
        %877 = vmatpush1.msra.mxu0 0.0
        %878 = vmatprep.subr.mxu0 0.0
        %879 = vmatpush1.msra.mxu0 0.0
        %880 = vmatprep.subr.mxu0 0.0
        %881 = vmatpush1.msra.mxu0 0.0
        %882 = vmatprep.subr.mxu0 0.0
        %883 = vmatpush1.msra.mxu0 0.0
        %884 = vmatprep.subr.mxu0 0.0
        %885 = vmatpush1.msra.mxu0 0.0
        %886 = vmatprep.subr.mxu0 0.0
        %887 = vmatpush1.msra.mxu0 0.0
        %888 = vmatprep.subr.mxu0 0.0
        %889 = vmatpush1.msra.mxu0 0.0
        %890 = vmatprep.subr.mxu0 0.0
        %891 = vmatpush1.msra.mxu0 0.0
        %892 = vmatprep.subr.mxu0 0.0
        %893 = vmatpush1.msra.mxu0 0.0
        %894 = vmatprep.subr.mxu0 0.0
        %895 = vmatpush1.msra.mxu0 0.0
        %896 = vmatprep.mubr.f32.mxu0 0.0
        %897 = vmatmul.mubr.f32.gmra.mrb[0].mxu0 %v498
        %v898 = vpop.f32.mrb[0].mxu0
        %v899 = vadd.f32 0.0, %v898
        %v900 = vpop.f32.mrb[0].mxu0
        %v901 = vadd.f32 0.0, %v900
        %902 = vmatprep.mubr.f32.mxu0 0.0
        %903 = vmatmul.mubr.f32.gmra.mrb[0].mxu0 %v501
        %v904 = vpop.f32.mrb[0].mxu0
        %v905 = vadd.f32 0.0, %v904
        %v906 = vpop.f32.mrb[0].mxu0
        %v907 = vadd.f32 0.0, %v906
        %908 = vmatprep.mubr.f32.mxu0 0.0
        %909 = vmatmul.mubr.f32.gmra.mrb[0].mxu0 %v504
        %v910 = vpop.f32.mrb[0].mxu0
        %v911 = vadd.f32 0.0, %v910
        %v912 = vpop.f32.mrb[0].mxu0
        %v913 = vadd.f32 0.0, %v912
        %914 = vmatprep.mubr.f32.mxu0 0.0
        %915 = vmatmul.mubr.f32.gmra.mrb[0].mxu0 %v507
        %v916 = vpop.f32.mrb[0].mxu0
        %v917 = vadd.f32 0.0, %v916
        %v918 = vpop.f32.mrb[0].mxu0
        %v919 = vadd.f32 0.0, %v918
        %920 = vmatprep.mubr.f32.mxu0 0.0
        %921 = vmatmul.mubr.f32.gmra.mrb[0].mxu0 %v510
        %v922 = vpop.f32.mrb[0].mxu0
        %v923 = vadd.f32 0.0, %v922
        %v924 = vpop.f32.mrb[0].mxu0
        %v925 = vadd.f32 0.0, %v924
        %926 = vmatprep.mubr.f32.mxu0 0.0
        %927 = vmatmul.mubr.f32.gmra.mrb[0].mxu0 %v513
        %v928 = vpop.f32.mrb[0].mxu0
        %v929 = vadd.f32 0.0, %v928
        %v930 = vpop.f32.mrb[0].mxu0
        %v931 = vadd.f32 0.0, %v930
        %932 = vmatprep.mubr.f32.mxu0 0.0
        %933 = vmatmul.mubr.f32.gmra.mrb[0].mxu0 %v516
        %v934 = vpop.f32.mrb[0].mxu0
        %v935 = vadd.f32 0.0, %v934
        %v936 = vpop.f32.mrb[0].mxu0
        %v937 = vadd.f32 0.0, %v936
        %938 = vmatprep.mubr.f32.mxu0 0.0
        %939 = vmatmul.mubr.f32.gmra.mrb[0].mxu0 %v519
        %v940 = vpop.f32.mrb[0].mxu0
        %v941 = vadd.f32 0.0, %v940
        %v942 = vpop.f32.mrb[0].mxu0
        %v943 = vadd.f32 0.0, %v942
        %944 = vmatprep.mubr.f32.mxu0 0.0
        %945 = vmatmul.mubr.f32.gmra.mrb[0].mxu0 %v522
        %v946 = vpop.f32.mrb[0].mxu0
        %v947 = vadd.f32 0.0, %v946
        %v948 = vpop.f32.mrb[0].mxu0
        %v949 = vadd.f32 0.0, %v948
        %950 = vmatprep.mubr.f32.mxu0 0.0
        %951 = vmatmul.mubr.f32.gmra.mrb[0].mxu0 %v525
        %v952 = vpop.f32.mrb[0].mxu0
        %v953 = vadd.f32 0.0, %v952
        %v954 = vpop.f32.mrb[0].mxu0
        %v955 = vadd.f32 0.0, %v954
        %956 = vmatprep.mubr.f32.mxu0 0.0
        %957 = vmatmul.mubr.f32.gmra.mrb[0].mxu0 %v528
        %v958 = vpop.f32.mrb[0].mxu0
        %v959 = vadd.f32 0.0, %v958
        %v960 = vpop.f32.mrb[0].mxu0
        %v961 = vadd.f32 0.0, %v960
        %962 = vmatprep.mubr.f32.mxu0 0.0
        %963 = vmatmul.mubr.f32.gmra.mrb[0].mxu0 %v531
        %v964 = vpop.f32.mrb[0].mxu0
        %v965 = vadd.f32 0.0, %v964
        %v966 = vpop.f32.mrb[0].mxu0
        %v967 = vadd.f32 0.0, %v966
        %968 = vmatprep.mubr.f32.mxu0 0.0
        %969 = vmatmul.mubr.f32.gmra.mrb[0].mxu0 %v534
        %v970 = vpop.f32.mrb[0].mxu0
        %v971 = vadd.f32 0.0, %v970
        %v972 = vpop.f32.mrb[0].mxu0
        %v973 = vadd.f32 0.0, %v972
        %974 = vmatprep.mubr.f32.mxu0 0.0
        %975 = vmatmul.mubr.f32.gmra.mrb[0].mxu0 %v537
        %v976 = vpop.f32.mrb[0].mxu0
        %v977 = vadd.f32 0.0, %v976
        %v978 = vpop.f32.mrb[0].mxu0
        %v979 = vadd.f32 0.0, %v978
        %980 = vmatprep.mubr.f32.mxu0 0.0
        %981 = vmatmul.mubr.f32.gmra.mrb[0].mxu0 %v540
        %v982 = vpop.f32.mrb[0].mxu0
        %v983 = vadd.f32 0.0, %v982
        %v984 = vpop.f32.mrb[0].mxu0
        %v985 = vadd.f32 0.0, %v984
        %986 = vmatprep.mubr.f32.mxu0 0.0
        %987 = vmatmul.mubr.f32.gmra.mrb[0].mxu0 %v543
        %v988 = vpop.f32.mrb[0].mxu0
        %v989 = vadd.f32 0.0, %v988
        %v990 = vpop.f32.mrb[0].mxu0
        %v991 = vadd.f32 0.0, %v990
        %992 = vmatprep.mubr.f32.mxu0 0.0
        %993 = vmatmul.mubr.f32.gmra.mrb[0].mxu0 %v546
        %v994 = vpop.f32.mrb[0].mxu0
        %v995 = vadd.f32 0.0, %v994
        %v996 = vpop.f32.mrb[0].mxu0
        %v997 = vadd.f32 0.0, %v996
        %998 = vmatprep.mubr.f32.mxu0 0.0
        %999 = vmatmul.mubr.f32.gmra.mrb[0].mxu0 %v549
        %v1000 = vpop.f32.mrb[0].mxu0
        %v1001 = vadd.f32 0.0, %v1000
        %v1002 = vpop.f32.mrb[0].mxu0
        %v1003 = vadd.f32 0.0, %v1002
        %1004 = vmatprep.mubr.f32.mxu0 0.0
        %1005 = vmatmul.mubr.f32.gmra.mrb[0].mxu0 %v552
        %v1006 = vpop.f32.mrb[0].mxu0
        %v1007 = vadd.f32 0.0, %v1006
        %v1008 = vpop.f32.mrb[0].mxu0
        %v1009 = vadd.f32 0.0, %v1008
        %1010 = vmatprep.mubr.f32.mxu0 0.0
        %1011 = vmatmul.mubr.f32.gmra.mrb[0].mxu0 %v555
        %v1012 = vpop.f32.mrb[0].mxu0
        %v1013 = vadd.f32 0.0, %v1012
        %v1014 = vpop.f32.mrb[0].mxu0
        %v1015 = vadd.f32 0.0, %v1014
        %1016 = vmatprep.mubr.f32.mxu0 0.0
        %1017 = vmatmul.mubr.f32.gmra.mrb[0].mxu0 %v558
        %v1018 = vpop.f32.mrb[0].mxu0
        %v1019 = vadd.f32 0.0, %v1018
        %v1020 = vpop.f32.mrb[0].mxu0
        %v1021 = vadd.f32 0.0, %v1020
        %1022 = vmatprep.mubr.f32.mxu0 0.0
        %1023 = vmatmul.mubr.f32.gmra.mrb[0].mxu0 %v561
        %v1024 = vpop.f32.mrb[0].mxu0
        %v1025 = vadd.f32 0.0, %v1024
        %v1026 = vpop.f32.mrb[0].mxu0
        %v1027 = vadd.f32 0.0, %v1026
        %1028 = vmatprep.mubr.f32.mxu0 0.0
        %1029 = vmatmul.mubr.f32.gmra.mrb[0].mxu0 %v564
        %v1030 = vpop.f32.mrb[0].mxu0
        %v1031 = vadd.f32 0.0, %v1030
        %v1032 = vpop.f32.mrb[0].mxu0
        %v1033 = vadd.f32 0.0, %v1032
        %1034 = vmatprep.mubr.f32.mxu0 0.0
        %1035 = vmatmul.mubr.f32.gmra.mrb[0].mxu0 %v567
        %v1036 = vpop.f32.mrb[0].mxu0
        %v1037 = vadd.f32 0.0, %v1036
        %v1038 = vpop.f32.mrb[0].mxu0
        %v1039 = vadd.f32 0.0, %v1038
        %1040 = vmatprep.mubr.f32.mxu0 0.0
        %1041 = vmatmul.mubr.f32.gmra.mrb[0].mxu0 %v570
        %v1042 = vpop.f32.mrb[0].mxu0
        %v1043 = vadd.f32 0.0, %v1042
        %v1044 = vpop.f32.mrb[0].mxu0
        %v1045 = vadd.f32 0.0, %v1044
        %1046 = vmatprep.mubr.f32.mxu0 0.0
        %1047 = vmatmul.mubr.f32.gmra.mrb[0].mxu0 %v573
        %v1048 = vpop.f32.mrb[0].mxu0
        %v1049 = vadd.f32 0.0, %v1048
        %v1050 = vpop.f32.mrb[0].mxu0
        %v1051 = vadd.f32 0.0, %v1050
        %1052 = vmatprep.mubr.f32.mxu0 0.0
        %1053 = vmatmul.mubr.f32.gmra.mrb[0].mxu0 %v576
        %v1054 = vpop.f32.mrb[0].mxu0
        %v1055 = vadd.f32 0.0, %v1054
        %v1056 = vpop.f32.mrb[0].mxu0
        %v1057 = vadd.f32 0.0, %v1056
        %1058 = vmatprep.mubr.f32.mxu0 0.0
        %1059 = vmatmul.mubr.f32.gmra.mrb[0].mxu0 %v579
        %v1060 = vpop.f32.mrb[0].mxu0
        %v1061 = vadd.f32 0.0, %v1060
        %v1062 = vpop.f32.mrb[0].mxu0
        %v1063 = vadd.f32 0.0, %v1062
        %1064 = vmatprep.mubr.f32.mxu0 0.0
        %1065 = vmatmul.mubr.f32.gmra.mrb[0].mxu0 %v582
        %v1066 = vpop.f32.mrb[0].mxu0
        %v1067 = vadd.f32 0.0, %v1066
        %v1068 = vpop.f32.mrb[0].mxu0
        %v1069 = vadd.f32 0.0, %v1068
        %1070 = vmatprep.mubr.f32.mxu0 0.0
        %1071 = vmatmul.mubr.f32.gmra.mrb[0].mxu0 %v585
        %v1072 = vpop.f32.mrb[0].mxu0
        %v1073 = vadd.f32 0.0, %v1072
        %v1074 = vpop.f32.mrb[0].mxu0
        %v1075 = vadd.f32 0.0, %v1074
        %1076 = vdwg.mxu0
        %1077 = vmatprep.subr.mxu0 %v401
        %1078 = vmatpush1.msra.mxu0 %v400
        %1079 = vmatprep.subr.mxu0 %v408
        %1080 = vmatpush1.msra.mxu0 %v407
        %1081 = vmatprep.subr.mxu0 %v415
        %1082 = vmatpush1.msra.mxu0 %v414
        %1083 = vmatprep.subr.mxu0 %v422
        %1084 = vmatpush1.msra.mxu0 %v421
        %1085 = vmatprep.subr.mxu0 %v429
        %1086 = vmatpush1.msra.mxu0 %v428
        %1087 = vmatprep.subr.mxu0 %v436
        %1088 = vmatpush1.msra.mxu0 %v435
        %1089 = vmatprep.subr.mxu0 %v443
        %1090 = vmatpush1.msra.mxu0 %v442
        %1091 = vmatprep.subr.mxu0 %v450
        %1092 = vmatpush1.msra.mxu0 %v449
        %1093 = vmatprep.subr.mxu0 %v457
        %1094 = vmatpush1.msra.mxu0 %v456
        %1095 = vmatprep.subr.mxu0 %v464
        %1096 = vmatpush1.msra.mxu0 %v463
        %1097 = vmatprep.subr.mxu0 0.0
        %1098 = vmatpush1.msra.mxu0 0.0
        %1099 = vmatprep.subr.mxu0 0.0
        %1100 = vmatpush1.msra.mxu0 0.0
        %1101 = vmatprep.subr.mxu0 0.0
        %1102 = vmatpush1.msra.mxu0 0.0
        %1103 = vmatprep.subr.mxu0 0.0
        %1104 = vmatpush1.msra.mxu0 0.0
        %1105 = vmatprep.subr.mxu0 0.0
        %1106 = vmatpush1.msra.mxu0 0.0
        %1107 = vmatprep.subr.mxu0 0.0
        %1108 = vmatpush1.msra.mxu0 0.0
        %1109 = vmatprep.subr.mxu0 0.0
        %1110 = vmatpush1.msra.mxu0 0.0
        %1111 = vmatprep.subr.mxu0 0.0
        %1112 = vmatpush1.msra.mxu0 0.0
        %1113 = vmatprep.subr.mxu0 0.0
        %1114 = vmatpush1.msra.mxu0 0.0
        %1115 = vmatprep.subr.mxu0 0.0
        %1116 = vmatpush1.msra.mxu0 0.0
        %1117 = vmatprep.subr.mxu0 0.0
        %1118 = vmatpush1.msra.mxu0 0.0
        %1119 = vmatprep.subr.mxu0 0.0
        %1120 = vmatpush1.msra.mxu0 0.0
        %1121 = vmatprep.subr.mxu0 0.0
        %1122 = vmatpush1.msra.mxu0 0.0
        %1123 = vmatprep.subr.mxu0 0.0
        %1124 = vmatpush1.msra.mxu0 0.0
        %1125 = vmatprep.subr.mxu0 0.0
        %1126 = vmatpush1.msra.mxu0 0.0
        %1127 = vmatprep.subr.mxu0 0.0
        %1128 = vmatpush1.msra.mxu0 0.0
        %1129 = vmatprep.subr.mxu0 0.0
        %1130 = vmatpush1.msra.mxu0 0.0
        %1131 = vmatprep.subr.mxu0 0.0
        %1132 = vmatpush1.msra.mxu0 0.0
        %1133 = vmatprep.subr.mxu0 0.0
        %1134 = vmatpush1.msra.mxu0 0.0
        %1135 = vmatprep.subr.mxu0 0.0
        %1136 = vmatpush1.msra.mxu0 0.0
        %1137 = vmatprep.subr.mxu0 0.0
        %1138 = vmatpush1.msra.mxu0 0.0
        %1139 = vmatprep.subr.mxu0 0.0
        %1140 = vmatpush1.msra.mxu0 0.0
        %1141 = vmatprep.mubr.f32.mxu0 0.0
        %1142 = vmatmul.mubr.f32.gmra.mrb[0].mxu0 %v498
        %v1143 = vpop.f32.mrb[0].mxu0
        %v1144 = vadd.f32 0.0, %v1143
        %v1145 = vpop.f32.mrb[0].mxu0
        %v1146 = vadd.f32 0.0, %v1145
        %1147 = vmatprep.mubr.f32.mxu0 0.0
        %1148 = vmatmul.mubr.f32.gmra.mrb[0].mxu0 %v501
        %v1149 = vpop.f32.mrb[0].mxu0
        %v1150 = vadd.f32 0.0, %v1149
        %v1151 = vpop.f32.mrb[0].mxu0
        %v1152 = vadd.f32 0.0, %v1151
        %1153 = vmatprep.mubr.f32.mxu0 0.0
        %1154 = vmatmul.mubr.f32.gmra.mrb[0].mxu0 %v504
        %v1155 = vpop.f32.mrb[0].mxu0
        %v1156 = vadd.f32 0.0, %v1155
        %v1157 = vpop.f32.mrb[0].mxu0
        %v1158 = vadd.f32 0.0, %v1157
        %1159 = vmatprep.mubr.f32.mxu0 0.0
        %1160 = vmatmul.mubr.f32.gmra.mrb[0].mxu0 %v507
        %v1161 = vpop.f32.mrb[0].mxu0
        %v1162 = vadd.f32 0.0, %v1161
        %v1163 = vpop.f32.mrb[0].mxu0
        %v1164 = vadd.f32 0.0, %v1163
        %1165 = vmatprep.mubr.f32.mxu0 0.0
        %1166 = vmatmul.mubr.f32.gmra.mrb[0].mxu0 %v510
        %v1167 = vpop.f32.mrb[0].mxu0
        %v1168 = vadd.f32 0.0, %v1167
        %v1169 = vpop.f32.mrb[0].mxu0
        %v1170 = vadd.f32 0.0, %v1169
        %1171 = vmatprep.mubr.f32.mxu0 0.0
        %1172 = vmatmul.mubr.f32.gmra.mrb[0].mxu0 %v513
        %v1173 = vpop.f32.mrb[0].mxu0
        %v1174 = vadd.f32 0.0, %v1173
        %v1175 = vpop.f32.mrb[0].mxu0
        %v1176 = vadd.f32 0.0, %v1175
        %1177 = vmatprep.mubr.f32.mxu0 0.0
        %1178 = vmatmul.mubr.f32.gmra.mrb[0].mxu0 %v516
        %v1179 = vpop.f32.mrb[0].mxu0
        %v1180 = vadd.f32 0.0, %v1179
        %v1181 = vpop.f32.mrb[0].mxu0
        %v1182 = vadd.f32 0.0, %v1181
        %1183 = vmatprep.mubr.f32.mxu0 0.0
        %1184 = vmatmul.mubr.f32.gmra.mrb[0].mxu0 %v519
        %v1185 = vpop.f32.mrb[0].mxu0
        %v1186 = vadd.f32 0.0, %v1185
        %v1187 = vpop.f32.mrb[0].mxu0
        %v1188 = vadd.f32 0.0, %v1187
        %1189 = vmatprep.mubr.f32.mxu0 0.0
        %1190 = vmatmul.mubr.f32.gmra.mrb[0].mxu0 %v522
        %v1191 = vpop.f32.mrb[0].mxu0
        %v1192 = vadd.f32 0.0, %v1191
        %v1193 = vpop.f32.mrb[0].mxu0
        %v1194 = vadd.f32 0.0, %v1193
        %1195 = vmatprep.mubr.f32.mxu0 0.0
        %1196 = vmatmul.mubr.f32.gmra.mrb[0].mxu0 %v525
        %v1197 = vpop.f32.mrb[0].mxu0
        %v1198 = vadd.f32 0.0, %v1197
        %v1199 = vpop.f32.mrb[0].mxu0
        %v1200 = vadd.f32 0.0, %v1199
        %1201 = vmatprep.mubr.f32.mxu0 0.0
        %1202 = vmatmul.mubr.f32.gmra.mrb[0].mxu0 %v528
        %v1203 = vpop.f32.mrb[0].mxu0
        %v1204 = vadd.f32 0.0, %v1203
        %v1205 = vpop.f32.mrb[0].mxu0
        %v1206 = vadd.f32 0.0, %v1205
        %1207 = vmatprep.mubr.f32.mxu0 0.0
        %1208 = vmatmul.mubr.f32.gmra.mrb[0].mxu0 %v531
        %v1209 = vpop.f32.mrb[0].mxu0
        %v1210 = vadd.f32 0.0, %v1209
        %v1211 = vpop.f32.mrb[0].mxu0
        %v1212 = vadd.f32 0.0, %v1211
        %1213 = vmatprep.mubr.f32.mxu0 0.0
        %1214 = vmatmul.mubr.f32.gmra.mrb[0].mxu0 %v534
        %v1215 = vpop.f32.mrb[0].mxu0
        %v1216 = vadd.f32 0.0, %v1215
        %v1217 = vpop.f32.mrb[0].mxu0
        %v1218 = vadd.f32 0.0, %v1217
        %1219 = vmatprep.mubr.f32.mxu0 0.0
        %1220 = vmatmul.mubr.f32.gmra.mrb[0].mxu0 %v537
        %v1221 = vpop.f32.mrb[0].mxu0
        %v1222 = vadd.f32 0.0, %v1221
        %v1223 = vpop.f32.mrb[0].mxu0
        %v1224 = vadd.f32 0.0, %v1223
        %1225 = vmatprep.mubr.f32.mxu0 0.0
        %1226 = vmatmul.mubr.f32.gmra.mrb[0].mxu0 %v540
        %v1227 = vpop.f32.mrb[0].mxu0
        %v1228 = vadd.f32 0.0, %v1227
        %v1229 = vpop.f32.mrb[0].mxu0
        %v1230 = vadd.f32 0.0, %v1229
        %1231 = vmatprep.mubr.f32.mxu0 0.0
        %1232 = vmatmul.mubr.f32.gmra.mrb[0].mxu0 %v543
        %v1233 = vpop.f32.mrb[0].mxu0
        %v1234 = vadd.f32 0.0, %v1233
        %v1235 = vpop.f32.mrb[0].mxu0
        %v1236 = vadd.f32 0.0, %v1235
        %1237 = vmatprep.mubr.f32.mxu0 0.0
        %1238 = vmatmul.mubr.f32.gmra.mrb[0].mxu0 %v546
        %v1239 = vpop.f32.mrb[0].mxu0
        %v1240 = vadd.f32 0.0, %v1239
        %v1241 = vpop.f32.mrb[0].mxu0
        %v1242 = vadd.f32 0.0, %v1241
        %1243 = vmatprep.mubr.f32.mxu0 0.0
        %1244 = vmatmul.mubr.f32.gmra.mrb[0].mxu0 %v549
        %v1245 = vpop.f32.mrb[0].mxu0
        %v1246 = vadd.f32 0.0, %v1245
        %v1247 = vpop.f32.mrb[0].mxu0
        %v1248 = vadd.f32 0.0, %v1247
        %1249 = vmatprep.mubr.f32.mxu0 0.0
        %1250 = vmatmul.mubr.f32.gmra.mrb[0].mxu0 %v552
        %v1251 = vpop.f32.mrb[0].mxu0
        %v1252 = vadd.f32 0.0, %v1251
        %v1253 = vpop.f32.mrb[0].mxu0
        %v1254 = vadd.f32 0.0, %v1253
        %1255 = vmatprep.mubr.f32.mxu0 0.0
        %1256 = vmatmul.mubr.f32.gmra.mrb[0].mxu0 %v555
        %v1257 = vpop.f32.mrb[0].mxu0
        %v1258 = vadd.f32 0.0, %v1257
        %v1259 = vpop.f32.mrb[0].mxu0
        %v1260 = vadd.f32 0.0, %v1259
        %1261 = vmatprep.mubr.f32.mxu0 0.0
        %1262 = vmatmul.mubr.f32.gmra.mrb[0].mxu0 %v558
        %v1263 = vpop.f32.mrb[0].mxu0
        %v1264 = vadd.f32 0.0, %v1263
        %v1265 = vpop.f32.mrb[0].mxu0
        %v1266 = vadd.f32 0.0, %v1265
        %1267 = vmatprep.mubr.f32.mxu0 0.0
        %1268 = vmatmul.mubr.f32.gmra.mrb[0].mxu0 %v561
        %v1269 = vpop.f32.mrb[0].mxu0
        %v1270 = vadd.f32 0.0, %v1269
        %v1271 = vpop.f32.mrb[0].mxu0
        %v1272 = vadd.f32 0.0, %v1271
        %1273 = vmatprep.mubr.f32.mxu0 0.0
        %1274 = vmatmul.mubr.f32.gmra.mrb[0].mxu0 %v564
        %v1275 = vpop.f32.mrb[0].mxu0
        %v1276 = vadd.f32 0.0, %v1275
        %v1277 = vpop.f32.mrb[0].mxu0
        %v1278 = vadd.f32 0.0, %v1277
        %1279 = vmatprep.mubr.f32.mxu0 0.0
        %1280 = vmatmul.mubr.f32.gmra.mrb[0].mxu0 %v567
        %v1281 = vpop.f32.mrb[0].mxu0
        %v1282 = vadd.f32 0.0, %v1281
        %v1283 = vpop.f32.mrb[0].mxu0
        %v1284 = vadd.f32 0.0, %v1283
        %1285 = vmatprep.mubr.f32.mxu0 0.0
        %1286 = vmatmul.mubr.f32.gmra.mrb[0].mxu0 %v570
        %v1287 = vpop.f32.mrb[0].mxu0
        %v1288 = vadd.f32 0.0, %v1287
        %v1289 = vpop.f32.mrb[0].mxu0
        %v1290 = vadd.f32 0.0, %v1289
        %1291 = vmatprep.mubr.f32.mxu0 0.0
        %1292 = vmatmul.mubr.f32.gmra.mrb[0].mxu0 %v573
        %v1293 = vpop.f32.mrb[0].mxu0
        %v1294 = vadd.f32 0.0, %v1293
        %v1295 = vpop.f32.mrb[0].mxu0
        %v1296 = vadd.f32 0.0, %v1295
        %1297 = vmatprep.mubr.f32.mxu0 0.0
        %1298 = vmatmul.mubr.f32.gmra.mrb[0].mxu0 %v576
        %v1299 = vpop.f32.mrb[0].mxu0
        %v1300 = vadd.f32 0.0, %v1299
        %v1301 = vpop.f32.mrb[0].mxu0
        %v1302 = vadd.f32 0.0, %v1301
        %1303 = vmatprep.mubr.f32.mxu0 0.0
        %1304 = vmatmul.mubr.f32.gmra.mrb[0].mxu0 %v579
        %v1305 = vpop.f32.mrb[0].mxu0
        %v1306 = vadd.f32 0.0, %v1305
        %v1307 = vpop.f32.mrb[0].mxu0
        %v1308 = vadd.f32 0.0, %v1307
        %1309 = vmatprep.mubr.f32.mxu0 0.0
        %1310 = vmatmul.mubr.f32.gmra.mrb[0].mxu0 %v582
        %v1311 = vpop.f32.mrb[0].mxu0
        %v1312 = vadd.f32 0.0, %v1311
        %v1313 = vpop.f32.mrb[0].mxu0
        %v1314 = vadd.f32 0.0, %v1313
        %1315 = vmatprep.mubr.f32.mxu0 0.0
        %1316 = vmatmul.mubr.f32.gmra.mrb[0].mxu0 %v585
        %v1317 = vpop.f32.mrb[0].mxu0
        %v1318 = vadd.f32 0.0, %v1317
        %v1319 = vpop.f32.mrb[0].mxu0
        %v1320 = vadd.f32 0.0, %v1319
        %1321 = vdwg.mxu0
        %1322 = vmatprep.subr.mxu0 0.0
        %1323 = vmatpush1.msra.mxu0 %v402
        %1324 = vmatprep.subr.mxu0 0.0
        %1325 = vmatpush1.msra.mxu0 %v409
        %1326 = vmatprep.subr.mxu0 0.0
        %1327 = vmatpush1.msra.mxu0 %v416
        %1328 = vmatprep.subr.mxu0 0.0
        %1329 = vmatpush1.msra.mxu0 %v423
        %1330 = vmatprep.subr.mxu0 0.0
        %1331 = vmatpush1.msra.mxu0 %v430
        %1332 = vmatprep.subr.mxu0 0.0
        %1333 = vmatpush1.msra.mxu0 %v437
        %1334 = vmatprep.subr.mxu0 0.0
        %1335 = vmatpush1.msra.mxu0 %v444
        %1336 = vmatprep.subr.mxu0 0.0
        %1337 = vmatpush1.msra.mxu0 %v451
        %1338 = vmatprep.subr.mxu0 0.0
        %1339 = vmatpush1.msra.mxu0 %v458
        %1340 = vmatprep.subr.mxu0 0.0
        %1341 = vmatpush1.msra.mxu0 %v465
        %1342 = vmatprep.subr.mxu0 0.0
        %1343 = vmatpush1.msra.mxu0 0.0
        %1344 = vmatprep.subr.mxu0 0.0
        %1345 = vmatpush1.msra.mxu0 0.0
        %1346 = vmatprep.subr.mxu0 0.0
        %1347 = vmatpush1.msra.mxu0 0.0
        %1348 = vmatprep.subr.mxu0 0.0
        %1349 = vmatpush1.msra.mxu0 0.0
        %1350 = vmatprep.subr.mxu0 0.0
        %1351 = vmatpush1.msra.mxu0 0.0
        %1352 = vmatprep.subr.mxu0 0.0
        %1353 = vmatpush1.msra.mxu0 0.0
        %1354 = vmatprep.subr.mxu0 0.0
        %1355 = vmatpush1.msra.mxu0 0.0
        %1356 = vmatprep.subr.mxu0 0.0
        %1357 = vmatpush1.msra.mxu0 0.0
        %1358 = vmatprep.subr.mxu0 0.0
        %1359 = vmatpush1.msra.mxu0 0.0
        %1360 = vmatprep.subr.mxu0 0.0
        %1361 = vmatpush1.msra.mxu0 0.0
        %1362 = vmatprep.subr.mxu0 0.0
        %1363 = vmatpush1.msra.mxu0 0.0
        %1364 = vmatprep.subr.mxu0 0.0
        %1365 = vmatpush1.msra.mxu0 0.0
        %1366 = vmatprep.subr.mxu0 0.0
        %1367 = vmatpush1.msra.mxu0 0.0
        %1368 = vmatprep.subr.mxu0 0.0
        %1369 = vmatpush1.msra.mxu0 0.0
        %1370 = vmatprep.subr.mxu0 0.0
        %1371 = vmatpush1.msra.mxu0 0.0
        %1372 = vmatprep.subr.mxu0 0.0
        %1373 = vmatpush1.msra.mxu0 0.0
        %1374 = vmatprep.subr.mxu0 0.0
        %1375 = vmatpush1.msra.mxu0 0.0
        %1376 = vmatprep.subr.mxu0 0.0
        %1377 = vmatpush1.msra.mxu0 0.0
        %1378 = vmatprep.subr.mxu0 0.0
        %1379 = vmatpush1.msra.mxu0 0.0
        %1380 = vmatprep.subr.mxu0 0.0
        %1381 = vmatpush1.msra.mxu0 0.0
        %1382 = vmatprep.subr.mxu0 0.0
        %1383 = vmatpush1.msra.mxu0 0.0
        %1384 = vmatprep.subr.mxu0 0.0
        %1385 = vmatpush1.msra.mxu0 0.0
        %1386 = vmatprep.mubr.f32.mxu0 0.0
        %1387 = vmatmul.mubr.f32.gmra.mrb[0].mxu0 %v498
        %v1388 = vpop.f32.mrb[0].mxu0
        %v1389 = vadd.f32 0.0, %v1388
        %v1390 = vpop.f32.mrb[0].mxu0
        %1391 = vmatprep.mubr.f32.mxu0 0.0
        %1392 = vmatmul.mubr.f32.gmra.mrb[0].mxu0 %v501
        %v1393 = vpop.f32.mrb[0].mxu0
        %v1394 = vadd.f32 0.0, %v1393
        %v1395 = vpop.f32.mrb[0].mxu0
        %1396 = vmatprep.mubr.f32.mxu0 0.0
        %1397 = vmatmul.mubr.f32.gmra.mrb[0].mxu0 %v504
        %v1398 = vpop.f32.mrb[0].mxu0
        %v1399 = vadd.f32 0.0, %v1398
        %v1400 = vpop.f32.mrb[0].mxu0
        %1401 = vmatprep.mubr.f32.mxu0 0.0
        %1402 = vmatmul.mubr.f32.gmra.mrb[0].mxu0 %v507
        %v1403 = vpop.f32.mrb[0].mxu0
        %v1404 = vadd.f32 0.0, %v1403
        %v1405 = vpop.f32.mrb[0].mxu0
        %1406 = vmatprep.mubr.f32.mxu0 0.0
        %1407 = vmatmul.mubr.f32.gmra.mrb[0].mxu0 %v510
        %v1408 = vpop.f32.mrb[0].mxu0
        %v1409 = vadd.f32 0.0, %v1408
        %v1410 = vpop.f32.mrb[0].mxu0
        %1411 = vmatprep.mubr.f32.mxu0 0.0
        %1412 = vmatmul.mubr.f32.gmra.mrb[0].mxu0 %v513
        %v1413 = vpop.f32.mrb[0].mxu0
        %v1414 = vadd.f32 0.0, %v1413
        %v1415 = vpop.f32.mrb[0].mxu0
        %1416 = vmatprep.mubr.f32.mxu0 0.0
        %1417 = vmatmul.mubr.f32.gmra.mrb[0].mxu0 %v516
        %v1418 = vpop.f32.mrb[0].mxu0
        %v1419 = vadd.f32 0.0, %v1418
        %v1420 = vpop.f32.mrb[0].mxu0
        %1421 = vmatprep.mubr.f32.mxu0 0.0
        %1422 = vmatmul.mubr.f32.gmra.mrb[0].mxu0 %v519
        %v1423 = vpop.f32.mrb[0].mxu0
        %v1424 = vadd.f32 0.0, %v1423
        %v1425 = vpop.f32.mrb[0].mxu0
        %1426 = vmatprep.mubr.f32.mxu0 0.0
        %1427 = vmatmul.mubr.f32.gmra.mrb[0].mxu0 %v522
        %v1428 = vpop.f32.mrb[0].mxu0
        %v1429 = vadd.f32 0.0, %v1428
        %v1430 = vpop.f32.mrb[0].mxu0
        %1431 = vmatprep.mubr.f32.mxu0 0.0
        %1432 = vmatmul.mubr.f32.gmra.mrb[0].mxu0 %v525
        %v1433 = vpop.f32.mrb[0].mxu0
        %v1434 = vadd.f32 0.0, %v1433
        %v1435 = vpop.f32.mrb[0].mxu0
        %1436 = vmatprep.mubr.f32.mxu0 0.0
        %1437 = vmatmul.mubr.f32.gmra.mrb[0].mxu0 %v528
        %v1438 = vpop.f32.mrb[0].mxu0
        %v1439 = vadd.f32 0.0, %v1438
        %v1440 = vpop.f32.mrb[0].mxu0
        %1441 = vmatprep.mubr.f32.mxu0 0.0
        %1442 = vmatmul.mubr.f32.gmra.mrb[0].mxu0 %v531
        %v1443 = vpop.f32.mrb[0].mxu0
        %v1444 = vadd.f32 0.0, %v1443
        %v1445 = vpop.f32.mrb[0].mxu0
        %1446 = vmatprep.mubr.f32.mxu0 0.0
        %1447 = vmatmul.mubr.f32.gmra.mrb[0].mxu0 %v534
        %v1448 = vpop.f32.mrb[0].mxu0
        %v1449 = vadd.f32 0.0, %v1448
        %v1450 = vpop.f32.mrb[0].mxu0
        %1451 = vmatprep.mubr.f32.mxu0 0.0
        %1452 = vmatmul.mubr.f32.gmra.mrb[0].mxu0 %v537
        %v1453 = vpop.f32.mrb[0].mxu0
        %v1454 = vadd.f32 0.0, %v1453
        %v1455 = vpop.f32.mrb[0].mxu0
        %1456 = vmatprep.mubr.f32.mxu0 0.0
        %1457 = vmatmul.mubr.f32.gmra.mrb[0].mxu0 %v540
        %v1458 = vpop.f32.mrb[0].mxu0
        %v1459 = vadd.f32 0.0, %v1458
        %v1460 = vpop.f32.mrb[0].mxu0
        %1461 = vmatprep.mubr.f32.mxu0 0.0
        %1462 = vmatmul.mubr.f32.gmra.mrb[0].mxu0 %v543
        %v1463 = vpop.f32.mrb[0].mxu0
        %v1464 = vadd.f32 0.0, %v1463
        %v1465 = vpop.f32.mrb[0].mxu0
        %1466 = vmatprep.mubr.f32.mxu0 0.0
        %1467 = vmatmul.mubr.f32.gmra.mrb[0].mxu0 %v546
        %v1468 = vpop.f32.mrb[0].mxu0
        %v1469 = vadd.f32 0.0, %v1468
        %v1470 = vpop.f32.mrb[0].mxu0
        %1471 = vmatprep.mubr.f32.mxu0 0.0
        %1472 = vmatmul.mubr.f32.gmra.mrb[0].mxu0 %v549
        %v1473 = vpop.f32.mrb[0].mxu0
        %v1474 = vadd.f32 0.0, %v1473
        %v1475 = vpop.f32.mrb[0].mxu0
        %1476 = vmatprep.mubr.f32.mxu0 0.0
        %1477 = vmatmul.mubr.f32.gmra.mrb[0].mxu0 %v552
        %v1478 = vpop.f32.mrb[0].mxu0
        %v1479 = vadd.f32 0.0, %v1478
        %v1480 = vpop.f32.mrb[0].mxu0
        %1481 = vmatprep.mubr.f32.mxu0 0.0
        %1482 = vmatmul.mubr.f32.gmra.mrb[0].mxu0 %v555
        %v1483 = vpop.f32.mrb[0].mxu0
        %v1484 = vadd.f32 0.0, %v1483
        %v1485 = vpop.f32.mrb[0].mxu0
        %1486 = vmatprep.mubr.f32.mxu0 0.0
        %1487 = vmatmul.mubr.f32.gmra.mrb[0].mxu0 %v558
        %v1488 = vpop.f32.mrb[0].mxu0
        %v1489 = vadd.f32 0.0, %v1488
        %v1490 = vpop.f32.mrb[0].mxu0
        %1491 = vmatprep.mubr.f32.mxu0 0.0
        %1492 = vmatmul.mubr.f32.gmra.mrb[0].mxu0 %v561
        %v1493 = vpop.f32.mrb[0].mxu0
        %v1494 = vadd.f32 0.0, %v1493
        %v1495 = vpop.f32.mrb[0].mxu0
        %1496 = vmatprep.mubr.f32.mxu0 0.0
        %1497 = vmatmul.mubr.f32.gmra.mrb[0].mxu0 %v564
        %v1498 = vpop.f32.mrb[0].mxu0
        %v1499 = vadd.f32 0.0, %v1498
        %v1500 = vpop.f32.mrb[0].mxu0
        %1501 = vmatprep.mubr.f32.mxu0 0.0
        %1502 = vmatmul.mubr.f32.gmra.mrb[0].mxu0 %v567
        %v1503 = vpop.f32.mrb[0].mxu0
        %v1504 = vadd.f32 0.0, %v1503
        %v1505 = vpop.f32.mrb[0].mxu0
        %1506 = vmatprep.mubr.f32.mxu0 0.0
        %1507 = vmatmul.mubr.f32.gmra.mrb[0].mxu0 %v570
        %v1508 = vpop.f32.mrb[0].mxu0
        %v1509 = vadd.f32 0.0, %v1508
        %v1510 = vpop.f32.mrb[0].mxu0
        %1511 = vmatprep.mubr.f32.mxu0 0.0
        %1512 = vmatmul.mubr.f32.gmra.mrb[0].mxu0 %v573
        %v1513 = vpop.f32.mrb[0].mxu0
        %v1514 = vadd.f32 0.0, %v1513
        %v1515 = vpop.f32.mrb[0].mxu0
        %1516 = vmatprep.mubr.f32.mxu0 0.0
        %1517 = vmatmul.mubr.f32.gmra.mrb[0].mxu0 %v576
        %v1518 = vpop.f32.mrb[0].mxu0
        %v1519 = vadd.f32 0.0, %v1518
        %v1520 = vpop.f32.mrb[0].mxu0
        %1521 = vmatprep.mubr.f32.mxu0 0.0
        %1522 = vmatmul.mubr.f32.gmra.mrb[0].mxu0 %v579
        %v1523 = vpop.f32.mrb[0].mxu0
        %v1524 = vadd.f32 0.0, %v1523
        %v1525 = vpop.f32.mrb[0].mxu0
        %1526 = vmatprep.mubr.f32.mxu0 0.0
        %1527 = vmatmul.mubr.f32.gmra.mrb[0].mxu0 %v582
        %v1528 = vpop.f32.mrb[0].mxu0
        %v1529 = vadd.f32 0.0, %v1528
        %v1530 = vpop.f32.mrb[0].mxu0
        %1531 = vmatprep.mubr.f32.mxu0 0.0
        %1532 = vmatmul.mubr.f32.gmra.mrb[0].mxu0 %v585
        %v1533 = vpop.f32.mrb[0].mxu0
        %v1534 = vadd.f32 0.0, %v1533
        %v1535 = vpop.f32.mrb[0].mxu0
        %1536 = vdwg.mxu0
        %1537 = vmatprep.subr.mxu0 0.0
        %1538 = vmatpush1.msra.mxu0 1.0
        %1539 = vmatprep.subr.mxu0 0.0
        %1540 = vmatpush1.msra.mxu0 1.0
        %1541 = vmatprep.subr.mxu0 0.0
        %1542 = vmatpush1.msra.mxu0 1.0
        %1543 = vmatprep.subr.mxu0 0.0
        %1544 = vmatpush1.msra.mxu0 1.0
        %1545 = vmatprep.subr.mxu0 0.0
        %1546 = vmatpush1.msra.mxu0 1.0
        %1547 = vmatprep.subr.mxu0 0.0
        %1548 = vmatpush1.msra.mxu0 1.0
        %1549 = vmatprep.subr.mxu0 0.0
        %1550 = vmatpush1.msra.mxu0 1.0
        %1551 = vmatprep.subr.mxu0 0.0
        %1552 = vmatpush1.msra.mxu0 1.0
        %1553 = vmatprep.subr.mxu0 0.0
        %1554 = vmatpush1.msra.mxu0 1.0
        %1555 = vmatprep.subr.mxu0 0.0
        %1556 = vmatpush1.msra.mxu0 1.0
        %1557 = vmatprep.subr.mxu0 0.0
        %1558 = vmatpush1.msra.mxu0 1.0
        %1559 = vmatprep.subr.mxu0 0.0
        %1560 = vmatpush1.msra.mxu0 1.0
        %1561 = vmatprep.subr.mxu0 0.0
        %1562 = vmatpush1.msra.mxu0 1.0
        %1563 = vmatprep.subr.mxu0 0.0
        %1564 = vmatpush1.msra.mxu0 1.0
        %1565 = vmatprep.subr.mxu0 0.0
        %1566 = vmatpush1.msra.mxu0 1.0
        %1567 = vmatprep.subr.mxu0 0.0
        %1568 = vmatpush1.msra.mxu0 1.0
        %1569 = vmatprep.subr.mxu0 0.0
        %1570 = vmatpush1.msra.mxu0 1.0
        %1571 = vmatprep.subr.mxu0 0.0
        %1572 = vmatpush1.msra.mxu0 1.0
        %1573 = vmatprep.subr.mxu0 0.0
        %1574 = vmatpush1.msra.mxu0 1.0
        %1575 = vmatprep.subr.mxu0 0.0
        %1576 = vmatpush1.msra.mxu0 1.0
        %1577 = vmatprep.subr.mxu0 0.0
        %1578 = vmatpush1.msra.mxu0 1.0
        %1579 = vmatprep.subr.mxu0 0.0
        %1580 = vmatpush1.msra.mxu0 1.0
        %1581 = vmatprep.subr.mxu0 0.0
        %1582 = vmatpush1.msra.mxu0 1.0
        %1583 = vmatprep.subr.mxu0 0.0
        %1584 = vmatpush1.msra.mxu0 1.0
        %1585 = vmatprep.subr.mxu0 0.0
        %1586 = vmatpush1.msra.mxu0 1.0
        %1587 = vmatprep.subr.mxu0 0.0
        %1588 = vmatpush1.msra.mxu0 1.0
        %1589 = vmatprep.subr.mxu0 0.0
        %1590 = vmatpush1.msra.mxu0 1.0
        %1591 = vmatprep.subr.mxu0 0.0
        %1592 = vmatpush1.msra.mxu0 1.0
        %1593 = vmatprep.subr.mxu0 0.0
        %1594 = vmatpush1.msra.mxu0 1.0
        %1595 = vmatprep.subr.mxu0 0.0
        %1596 = vmatpush1.msra.mxu0 1.0
        %1597 = vmatprep.subr.mxu0 0.0
        %1598 = vmatpush1.msra.mxu0 1.0
        %1599 = vmatprep.subr.mxu0 0.0
        %1600 = vmatpush1.msra.mxu0 1.0
        %1601 = vmatprep.mubr.f32.mxu0 %v656
        %1602 = vmatmul.mubr.f32.gmra.mrb[0].mxu0 %v654
        %v1603 = vpop.f32.mrb[0].mxu0
        %v1604 = vadd.f32 0.0, %v1603
        %v1605 = vpop.f32.mrb[0].mxu0
        %1606 = vmatprep.mubr.f32.mxu0 %v662
        %1607 = vmatmul.mubr.f32.gmra.mrb[0].mxu0 %v660
        %v1608 = vpop.f32.mrb[0].mxu0
        %v1609 = vadd.f32 0.0, %v1608
        %v1610 = vpop.f32.mrb[0].mxu0
        %1611 = vmatprep.mubr.f32.mxu0 %v668
        %1612 = vmatmul.mubr.f32.gmra.mrb[0].mxu0 %v666
        %v1613 = vpop.f32.mrb[0].mxu0
        %v1614 = vadd.f32 0.0, %v1613
        %v1615 = vpop.f32.mrb[0].mxu0
        %1616 = vmatprep.mubr.f32.mxu0 %v674
        %1617 = vmatmul.mubr.f32.gmra.mrb[0].mxu0 %v672
        %v1618 = vpop.f32.mrb[0].mxu0
        %v1619 = vadd.f32 0.0, %v1618
        %v1620 = vpop.f32.mrb[0].mxu0
        %1621 = vmatprep.mubr.f32.mxu0 %v680
        %1622 = vmatmul.mubr.f32.gmra.mrb[0].mxu0 %v678
        %v1623 = vpop.f32.mrb[0].mxu0
        %v1624 = vadd.f32 0.0, %v1623
        %v1625 = vpop.f32.mrb[0].mxu0
        %1626 = vmatprep.mubr.f32.mxu0 %v686
        %1627 = vmatmul.mubr.f32.gmra.mrb[0].mxu0 %v684
        %v1628 = vpop.f32.mrb[0].mxu0
        %v1629 = vadd.f32 0.0, %v1628
        %v1630 = vpop.f32.mrb[0].mxu0
        %1631 = vmatprep.mubr.f32.mxu0 %v692
        %1632 = vmatmul.mubr.f32.gmra.mrb[0].mxu0 %v690
        %v1633 = vpop.f32.mrb[0].mxu0
        %v1634 = vadd.f32 0.0, %v1633
        %v1635 = vpop.f32.mrb[0].mxu0
        %1636 = vmatprep.mubr.f32.mxu0 %v698
        %1637 = vmatmul.mubr.f32.gmra.mrb[0].mxu0 %v696
        %v1638 = vpop.f32.mrb[0].mxu0
        %v1639 = vadd.f32 0.0, %v1638
        %v1640 = vpop.f32.mrb[0].mxu0
        %1641 = vmatprep.mubr.f32.mxu0 %v704
        %1642 = vmatmul.mubr.f32.gmra.mrb[0].mxu0 %v702
        %v1643 = vpop.f32.mrb[0].mxu0
        %v1644 = vadd.f32 0.0, %v1643
        %v1645 = vpop.f32.mrb[0].mxu0
        %1646 = vmatprep.mubr.f32.mxu0 %v710
        %1647 = vmatmul.mubr.f32.gmra.mrb[0].mxu0 %v708
        %v1648 = vpop.f32.mrb[0].mxu0
        %v1649 = vadd.f32 0.0, %v1648
        %v1650 = vpop.f32.mrb[0].mxu0
        %1651 = vmatprep.mubr.f32.mxu0 %v716
        %1652 = vmatmul.mubr.f32.gmra.mrb[0].mxu0 %v714
        %v1653 = vpop.f32.mrb[0].mxu0
        %v1654 = vadd.f32 0.0, %v1653
        %v1655 = vpop.f32.mrb[0].mxu0
        %1656 = vmatprep.mubr.f32.mxu0 %v722
        %1657 = vmatmul.mubr.f32.gmra.mrb[0].mxu0 %v720
        %v1658 = vpop.f32.mrb[0].mxu0
        %v1659 = vadd.f32 0.0, %v1658
        %v1660 = vpop.f32.mrb[0].mxu0
        %1661 = vmatprep.mubr.f32.mxu0 %v728
        %1662 = vmatmul.mubr.f32.gmra.mrb[0].mxu0 %v726
        %v1663 = vpop.f32.mrb[0].mxu0
        %v1664 = vadd.f32 0.0, %v1663
        %v1665 = vpop.f32.mrb[0].mxu0
        %1666 = vmatprep.mubr.f32.mxu0 %v734
        %1667 = vmatmul.mubr.f32.gmra.mrb[0].mxu0 %v732
        %v1668 = vpop.f32.mrb[0].mxu0
        %v1669 = vadd.f32 0.0, %v1668
        %v1670 = vpop.f32.mrb[0].mxu0
        %1671 = vmatprep.mubr.f32.mxu0 %v740
        %1672 = vmatmul.mubr.f32.gmra.mrb[0].mxu0 %v738
        %v1673 = vpop.f32.mrb[0].mxu0
        %v1674 = vadd.f32 0.0, %v1673
        %v1675 = vpop.f32.mrb[0].mxu0
        %1676 = vmatprep.mubr.f32.mxu0 %v746
        %1677 = vmatmul.mubr.f32.gmra.mrb[0].mxu0 %v744
        %v1678 = vpop.f32.mrb[0].mxu0
        %v1679 = vadd.f32 0.0, %v1678
        %v1680 = vpop.f32.mrb[0].mxu0
        %1681 = vmatprep.mubr.f32.mxu0 %v752
        %1682 = vmatmul.mubr.f32.gmra.mrb[0].mxu0 %v750
        %v1683 = vpop.f32.mrb[0].mxu0
        %v1684 = vadd.f32 0.0, %v1683
        %v1685 = vpop.f32.mrb[0].mxu0
        %1686 = vmatprep.mubr.f32.mxu0 %v758
        %1687 = vmatmul.mubr.f32.gmra.mrb[0].mxu0 %v756
        %v1688 = vpop.f32.mrb[0].mxu0
        %v1689 = vadd.f32 0.0, %v1688
        %v1690 = vpop.f32.mrb[0].mxu0
        %1691 = vmatprep.mubr.f32.mxu0 %v764
        %1692 = vmatmul.mubr.f32.gmra.mrb[0].mxu0 %v762
        %v1693 = vpop.f32.mrb[0].mxu0
        %v1694 = vadd.f32 0.0, %v1693
        %v1695 = vpop.f32.mrb[0].mxu0
        %1696 = vmatprep.mubr.f32.mxu0 %v770
        %1697 = vmatmul.mubr.f32.gmra.mrb[0].mxu0 %v768
        %v1698 = vpop.f32.mrb[0].mxu0
        %v1699 = vadd.f32 0.0, %v1698
        %v1700 = vpop.f32.mrb[0].mxu0
        %1701 = vmatprep.mubr.f32.mxu0 %v776
        %1702 = vmatmul.mubr.f32.gmra.mrb[0].mxu0 %v774
        %v1703 = vpop.f32.mrb[0].mxu0
        %v1704 = vadd.f32 0.0, %v1703
        %v1705 = vpop.f32.mrb[0].mxu0
        %1706 = vmatprep.mubr.f32.mxu0 %v782
        %1707 = vmatmul.mubr.f32.gmra.mrb[0].mxu0 %v780
        %v1708 = vpop.f32.mrb[0].mxu0
        %v1709 = vadd.f32 0.0, %v1708
        %v1710 = vpop.f32.mrb[0].mxu0
        %1711 = vmatprep.mubr.f32.mxu0 %v788
        %1712 = vmatmul.mubr.f32.gmra.mrb[0].mxu0 %v786
        %v1713 = vpop.f32.mrb[0].mxu0
        %v1714 = vadd.f32 0.0, %v1713
        %v1715 = vpop.f32.mrb[0].mxu0
        %1716 = vmatprep.mubr.f32.mxu0 %v794
        %1717 = vmatmul.mubr.f32.gmra.mrb[0].mxu0 %v792
        %v1718 = vpop.f32.mrb[0].mxu0
        %v1719 = vadd.f32 0.0, %v1718
        %v1720 = vpop.f32.mrb[0].mxu0
        %1721 = vmatprep.mubr.f32.mxu0 %v800
        %1722 = vmatmul.mubr.f32.gmra.mrb[0].mxu0 %v798
        %v1723 = vpop.f32.mrb[0].mxu0
        %v1724 = vadd.f32 0.0, %v1723
        %v1725 = vpop.f32.mrb[0].mxu0
        %1726 = vmatprep.mubr.f32.mxu0 %v806
        %1727 = vmatmul.mubr.f32.gmra.mrb[0].mxu0 %v804
        %v1728 = vpop.f32.mrb[0].mxu0
        %v1729 = vadd.f32 0.0, %v1728
        %v1730 = vpop.f32.mrb[0].mxu0
        %1731 = vmatprep.mubr.f32.mxu0 %v812
        %1732 = vmatmul.mubr.f32.gmra.mrb[0].mxu0 %v810
        %v1733 = vpop.f32.mrb[0].mxu0
        %v1734 = vadd.f32 0.0, %v1733
        %v1735 = vpop.f32.mrb[0].mxu0
        %1736 = vmatprep.mubr.f32.mxu0 %v818
        %1737 = vmatmul.mubr.f32.gmra.mrb[0].mxu0 %v816
        %v1738 = vpop.f32.mrb[0].mxu0
        %v1739 = vadd.f32 0.0, %v1738
        %v1740 = vpop.f32.mrb[0].mxu0
        %1741 = vmatprep.mubr.f32.mxu0 %v824
        %1742 = vmatmul.mubr.f32.gmra.mrb[0].mxu0 %v822
        %v1743 = vpop.f32.mrb[0].mxu0
        %v1744 = vadd.f32 0.0, %v1743
        %v1745 = vpop.f32.mrb[0].mxu0
        %1746 = vmatprep.mubr.f32.mxu0 %v830
        %1747 = vmatmul.mubr.f32.gmra.mrb[0].mxu0 %v828
        %v1748 = vpop.f32.mrb[0].mxu0
        %v1749 = vadd.f32 0.0, %v1748
        %v1750 = vpop.f32.mrb[0].mxu0
        %1751 = vdwg.mxu0
        %1752 = vmatprep.subr.mxu0 0.0
        %1753 = vmatpush1.msra.mxu0 1.0
        %1754 = vmatprep.subr.mxu0 0.0
        %1755 = vmatpush1.msra.mxu0 1.0
        %1756 = vmatprep.subr.mxu0 0.0
        %1757 = vmatpush1.msra.mxu0 1.0
        %1758 = vmatprep.subr.mxu0 0.0
        %1759 = vmatpush1.msra.mxu0 1.0
        %1760 = vmatprep.subr.mxu0 0.0
        %1761 = vmatpush1.msra.mxu0 1.0
        %1762 = vmatprep.subr.mxu0 0.0
        %1763 = vmatpush1.msra.mxu0 1.0
        %1764 = vmatprep.subr.mxu0 0.0
        %1765 = vmatpush1.msra.mxu0 1.0
        %1766 = vmatprep.subr.mxu0 0.0
        %1767 = vmatpush1.msra.mxu0 1.0
        %1768 = vmatprep.subr.mxu0 0.0
        %1769 = vmatpush1.msra.mxu0 1.0
        %1770 = vmatprep.subr.mxu0 0.0
        %1771 = vmatpush1.msra.mxu0 1.0
        %1772 = vmatprep.subr.mxu0 0.0
        %1773 = vmatpush1.msra.mxu0 1.0
        %1774 = vmatprep.subr.mxu0 0.0
        %1775 = vmatpush1.msra.mxu0 1.0
        %1776 = vmatprep.subr.mxu0 0.0
        %1777 = vmatpush1.msra.mxu0 1.0
        %1778 = vmatprep.subr.mxu0 0.0
        %1779 = vmatpush1.msra.mxu0 1.0
        %1780 = vmatprep.subr.mxu0 0.0
        %1781 = vmatpush1.msra.mxu0 1.0
        %1782 = vmatprep.subr.mxu0 0.0
        %1783 = vmatpush1.msra.mxu0 1.0
        %1784 = vmatprep.subr.mxu0 0.0
        %1785 = vmatpush1.msra.mxu0 1.0
        %1786 = vmatprep.subr.mxu0 0.0
        %1787 = vmatpush1.msra.mxu0 1.0
        %1788 = vmatprep.subr.mxu0 0.0
        %1789 = vmatpush1.msra.mxu0 1.0
        %1790 = vmatprep.subr.mxu0 0.0
        %1791 = vmatpush1.msra.mxu0 1.0
        %1792 = vmatprep.subr.mxu0 0.0
        %1793 = vmatpush1.msra.mxu0 1.0
        %1794 = vmatprep.subr.mxu0 0.0
        %1795 = vmatpush1.msra.mxu0 1.0
        %1796 = vmatprep.subr.mxu0 0.0
        %1797 = vmatpush1.msra.mxu0 1.0
        %1798 = vmatprep.subr.mxu0 0.0
        %1799 = vmatpush1.msra.mxu0 1.0
        %1800 = vmatprep.subr.mxu0 0.0
        %1801 = vmatpush1.msra.mxu0 1.0
        %1802 = vmatprep.subr.mxu0 0.0
        %1803 = vmatpush1.msra.mxu0 1.0
        %1804 = vmatprep.subr.mxu0 0.0
        %1805 = vmatpush1.msra.mxu0 1.0
        %1806 = vmatprep.subr.mxu0 0.0
        %1807 = vmatpush1.msra.mxu0 1.0
        %1808 = vmatprep.subr.mxu0 0.0
        %1809 = vmatpush1.msra.mxu0 1.0
        %1810 = vmatprep.subr.mxu0 0.0
        %1811 = vmatpush1.msra.mxu0 1.0
        %1812 = vmatprep.subr.mxu0 0.0
        %1813 = vmatpush1.msra.mxu0 1.0
        %1814 = vmatprep.subr.mxu0 0.0
        %1815 = vmatpush1.msra.mxu0 1.0
        %1816 = vmatprep.mubr.f32.mxu0 %v901
        %1817 = vmatmul.mubr.f32.gmra.mrb[0].mxu0 %v899
        %v1818 = vpop.f32.mrb[0].mxu0
        %v1819 = vadd.f32 %v1604, %v1818
        %v1820 = vpop.f32.mrb[0].mxu0
        %1821 = vmatprep.mubr.f32.mxu0 %v907
        %1822 = vmatmul.mubr.f32.gmra.mrb[0].mxu0 %v905
        %v1823 = vpop.f32.mrb[0].mxu0
        %v1824 = vadd.f32 %v1609, %v1823
        %v1825 = vpop.f32.mrb[0].mxu0
        %1826 = vmatprep.mubr.f32.mxu0 %v913
        %1827 = vmatmul.mubr.f32.gmra.mrb[0].mxu0 %v911
        %v1828 = vpop.f32.mrb[0].mxu0
        %v1829 = vadd.f32 %v1614, %v1828
        %v1830 = vpop.f32.mrb[0].mxu0
        %1831 = vmatprep.mubr.f32.mxu0 %v919
        %1832 = vmatmul.mubr.f32.gmra.mrb[0].mxu0 %v917
        %v1833 = vpop.f32.mrb[0].mxu0
        %v1834 = vadd.f32 %v1619, %v1833
        %v1835 = vpop.f32.mrb[0].mxu0
        %1836 = vmatprep.mubr.f32.mxu0 %v925
        %1837 = vmatmul.mubr.f32.gmra.mrb[0].mxu0 %v923
        %v1838 = vpop.f32.mrb[0].mxu0
        %v1839 = vadd.f32 %v1624, %v1838
        %v1840 = vpop.f32.mrb[0].mxu0
        %1841 = vmatprep.mubr.f32.mxu0 %v931
        %1842 = vmatmul.mubr.f32.gmra.mrb[0].mxu0 %v929
        %v1843 = vpop.f32.mrb[0].mxu0
        %v1844 = vadd.f32 %v1629, %v1843
        %v1845 = vpop.f32.mrb[0].mxu0
        %1846 = vmatprep.mubr.f32.mxu0 %v937
        %1847 = vmatmul.mubr.f32.gmra.mrb[0].mxu0 %v935
        %v1848 = vpop.f32.mrb[0].mxu0
        %v1849 = vadd.f32 %v1634, %v1848
        %v1850 = vpop.f32.mrb[0].mxu0
        %1851 = vmatprep.mubr.f32.mxu0 %v943
        %1852 = vmatmul.mubr.f32.gmra.mrb[0].mxu0 %v941
        %v1853 = vpop.f32.mrb[0].mxu0
        %v1854 = vadd.f32 %v1639, %v1853
        %v1855 = vpop.f32.mrb[0].mxu0
        %1856 = vmatprep.mubr.f32.mxu0 %v949
        %1857 = vmatmul.mubr.f32.gmra.mrb[0].mxu0 %v947
        %v1858 = vpop.f32.mrb[0].mxu0
        %v1859 = vadd.f32 %v1644, %v1858
        %v1860 = vpop.f32.mrb[0].mxu0
        %1861 = vmatprep.mubr.f32.mxu0 %v955
        %1862 = vmatmul.mubr.f32.gmra.mrb[0].mxu0 %v953
        %v1863 = vpop.f32.mrb[0].mxu0
        %v1864 = vadd.f32 %v1649, %v1863
        %v1865 = vpop.f32.mrb[0].mxu0
        %1866 = vmatprep.mubr.f32.mxu0 %v961
        %1867 = vmatmul.mubr.f32.gmra.mrb[0].mxu0 %v959
        %v1868 = vpop.f32.mrb[0].mxu0
        %v1869 = vadd.f32 %v1654, %v1868
        %v1870 = vpop.f32.mrb[0].mxu0
        %1871 = vmatprep.mubr.f32.mxu0 %v967
        %1872 = vmatmul.mubr.f32.gmra.mrb[0].mxu0 %v965
        %v1873 = vpop.f32.mrb[0].mxu0
        %v1874 = vadd.f32 %v1659, %v1873
        %v1875 = vpop.f32.mrb[0].mxu0
        %1876 = vmatprep.mubr.f32.mxu0 %v973
        %1877 = vmatmul.mubr.f32.gmra.mrb[0].mxu0 %v971
        %v1878 = vpop.f32.mrb[0].mxu0
        %v1879 = vadd.f32 %v1664, %v1878
        %v1880 = vpop.f32.mrb[0].mxu0
        %1881 = vmatprep.mubr.f32.mxu0 %v979
        %1882 = vmatmul.mubr.f32.gmra.mrb[0].mxu0 %v977
        %v1883 = vpop.f32.mrb[0].mxu0
        %v1884 = vadd.f32 %v1669, %v1883
        %v1885 = vpop.f32.mrb[0].mxu0
        %1886 = vmatprep.mubr.f32.mxu0 %v985
        %1887 = vmatmul.mubr.f32.gmra.mrb[0].mxu0 %v983
        %v1888 = vpop.f32.mrb[0].mxu0
        %v1889 = vadd.f32 %v1674, %v1888
        %v1890 = vpop.f32.mrb[0].mxu0
        %1891 = vmatprep.mubr.f32.mxu0 %v991
        %1892 = vmatmul.mubr.f32.gmra.mrb[0].mxu0 %v989
        %v1893 = vpop.f32.mrb[0].mxu0
        %v1894 = vadd.f32 %v1679, %v1893
        %v1895 = vpop.f32.mrb[0].mxu0
        %1896 = vmatprep.mubr.f32.mxu0 %v997
        %1897 = vmatmul.mubr.f32.gmra.mrb[0].mxu0 %v995
        %v1898 = vpop.f32.mrb[0].mxu0
        %v1899 = vadd.f32 %v1684, %v1898
        %v1900 = vpop.f32.mrb[0].mxu0
        %1901 = vmatprep.mubr.f32.mxu0 %v1003
        %1902 = vmatmul.mubr.f32.gmra.mrb[0].mxu0 %v1001
        %v1903 = vpop.f32.mrb[0].mxu0
        %v1904 = vadd.f32 %v1689, %v1903
        %v1905 = vpop.f32.mrb[0].mxu0
        %1906 = vmatprep.mubr.f32.mxu0 %v1009
        %1907 = vmatmul.mubr.f32.gmra.mrb[0].mxu0 %v1007
        %v1908 = vpop.f32.mrb[0].mxu0
        %v1909 = vadd.f32 %v1694, %v1908
        %v1910 = vpop.f32.mrb[0].mxu0
        %1911 = vmatprep.mubr.f32.mxu0 %v1015
        %1912 = vmatmul.mubr.f32.gmra.mrb[0].mxu0 %v1013
        %v1913 = vpop.f32.mrb[0].mxu0
        %v1914 = vadd.f32 %v1699, %v1913
        %v1915 = vpop.f32.mrb[0].mxu0
        %1916 = vmatprep.mubr.f32.mxu0 %v1021
        %1917 = vmatmul.mubr.f32.gmra.mrb[0].mxu0 %v1019
        %v1918 = vpop.f32.mrb[0].mxu0
        %v1919 = vadd.f32 %v1704, %v1918
        %v1920 = vpop.f32.mrb[0].mxu0
        %1921 = vmatprep.mubr.f32.mxu0 %v1027
        %1922 = vmatmul.mubr.f32.gmra.mrb[0].mxu0 %v1025
        %v1923 = vpop.f32.mrb[0].mxu0
        %v1924 = vadd.f32 %v1709, %v1923
        %v1925 = vpop.f32.mrb[0].mxu0
        %1926 = vmatprep.mubr.f32.mxu0 %v1033
        %1927 = vmatmul.mubr.f32.gmra.mrb[0].mxu0 %v1031
        %v1928 = vpop.f32.mrb[0].mxu0
        %v1929 = vadd.f32 %v1714, %v1928
        %v1930 = vpop.f32.mrb[0].mxu0
        %1931 = vmatprep.mubr.f32.mxu0 %v1039
        %1932 = vmatmul.mubr.f32.gmra.mrb[0].mxu0 %v1037
        %v1933 = vpop.f32.mrb[0].mxu0
        %v1934 = vadd.f32 %v1719, %v1933
        %v1935 = vpop.f32.mrb[0].mxu0
        %1936 = vmatprep.mubr.f32.mxu0 %v1045
        %1937 = vmatmul.mubr.f32.gmra.mrb[0].mxu0 %v1043
        %v1938 = vpop.f32.mrb[0].mxu0
        %v1939 = vadd.f32 %v1724, %v1938
        %v1940 = vpop.f32.mrb[0].mxu0
        %1941 = vmatprep.mubr.f32.mxu0 %v1051
        %1942 = vmatmul.mubr.f32.gmra.mrb[0].mxu0 %v1049
        %v1943 = vpop.f32.mrb[0].mxu0
        %v1944 = vadd.f32 %v1729, %v1943
        %v1945 = vpop.f32.mrb[0].mxu0
        %1946 = vmatprep.mubr.f32.mxu0 %v1057
        %1947 = vmatmul.mubr.f32.gmra.mrb[0].mxu0 %v1055
        %v1948 = vpop.f32.mrb[0].mxu0
        %v1949 = vadd.f32 %v1734, %v1948
        %v1950 = vpop.f32.mrb[0].mxu0
        %1951 = vmatprep.mubr.f32.mxu0 %v1063
        %1952 = vmatmul.mubr.f32.gmra.mrb[0].mxu0 %v1061
        %v1953 = vpop.f32.mrb[0].mxu0
        %v1954 = vadd.f32 %v1739, %v1953
        %v1955 = vpop.f32.mrb[0].mxu0
        %1956 = vmatprep.mubr.f32.mxu0 %v1069
        %1957 = vmatmul.mubr.f32.gmra.mrb[0].mxu0 %v1067
        %v1958 = vpop.f32.mrb[0].mxu0
        %v1959 = vadd.f32 %v1744, %v1958
        %v1960 = vpop.f32.mrb[0].mxu0
        %1961 = vmatprep.mubr.f32.mxu0 %v1075
        %1962 = vmatmul.mubr.f32.gmra.mrb[0].mxu0 %v1073
        %v1963 = vpop.f32.mrb[0].mxu0
        %v1964 = vadd.f32 %v1749, %v1963
        %v1965 = vpop.f32.mrb[0].mxu0
        %1966 = vdwg.mxu0
        %1967 = vmatprep.subr.mxu0 0.0
        %1968 = vmatpush1.msra.mxu0 1.0
        %1969 = vmatprep.subr.mxu0 0.0
        %1970 = vmatpush1.msra.mxu0 1.0
        %1971 = vmatprep.subr.mxu0 0.0
        %1972 = vmatpush1.msra.mxu0 1.0
        %1973 = vmatprep.subr.mxu0 0.0
        %1974 = vmatpush1.msra.mxu0 1.0
        %1975 = vmatprep.subr.mxu0 0.0
        %1976 = vmatpush1.msra.mxu0 1.0
        %1977 = vmatprep.subr.mxu0 0.0
        %1978 = vmatpush1.msra.mxu0 1.0
        %1979 = vmatprep.subr.mxu0 0.0
        %1980 = vmatpush1.msra.mxu0 1.0
        %1981 = vmatprep.subr.mxu0 0.0
        %1982 = vmatpush1.msra.mxu0 1.0
        %1983 = vmatprep.subr.mxu0 0.0
        %1984 = vmatpush1.msra.mxu0 1.0
        %1985 = vmatprep.subr.mxu0 0.0
        %1986 = vmatpush1.msra.mxu0 1.0
        %1987 = vmatprep.subr.mxu0 0.0
        %1988 = vmatpush1.msra.mxu0 1.0
        %1989 = vmatprep.subr.mxu0 0.0
        %1990 = vmatpush1.msra.mxu0 1.0
        %1991 = vmatprep.subr.mxu0 0.0
        %1992 = vmatpush1.msra.mxu0 1.0
        %1993 = vmatprep.subr.mxu0 0.0
        %1994 = vmatpush1.msra.mxu0 1.0
        %1995 = vmatprep.subr.mxu0 0.0
        %1996 = vmatpush1.msra.mxu0 1.0
        %1997 = vmatprep.subr.mxu0 0.0
        %1998 = vmatpush1.msra.mxu0 1.0
        %1999 = vmatprep.subr.mxu0 0.0
        %2000 = vmatpush1.msra.mxu0 1.0
        %2001 = vmatprep.subr.mxu0 0.0
        %2002 = vmatpush1.msra.mxu0 1.0
        %2003 = vmatprep.subr.mxu0 0.0
        %2004 = vmatpush1.msra.mxu0 1.0
        %2005 = vmatprep.subr.mxu0 0.0
        %2006 = vmatpush1.msra.mxu0 1.0
        %2007 = vmatprep.subr.mxu0 0.0
        %2008 = vmatpush1.msra.mxu0 1.0
        %2009 = vmatprep.subr.mxu0 0.0
        %2010 = vmatpush1.msra.mxu0 1.0
        %2011 = vmatprep.subr.mxu0 0.0
        %2012 = vmatpush1.msra.mxu0 1.0
        %2013 = vmatprep.subr.mxu0 0.0
        %2014 = vmatpush1.msra.mxu0 1.0
        %2015 = vmatprep.subr.mxu0 0.0
        %2016 = vmatpush1.msra.mxu0 1.0
        %2017 = vmatprep.subr.mxu0 0.0
        %2018 = vmatpush1.msra.mxu0 1.0
        %2019 = vmatprep.subr.mxu0 0.0
        %2020 = vmatpush1.msra.mxu0 1.0
        %2021 = vmatprep.subr.mxu0 0.0
        %2022 = vmatpush1.msra.mxu0 1.0
        %2023 = vmatprep.subr.mxu0 0.0
        %2024 = vmatpush1.msra.mxu0 1.0
        %2025 = vmatprep.subr.mxu0 0.0
        %2026 = vmatpush1.msra.mxu0 1.0
        %2027 = vmatprep.subr.mxu0 0.0
        %2028 = vmatpush1.msra.mxu0 1.0
        %2029 = vmatprep.subr.mxu0 0.0
        %2030 = vmatpush1.msra.mxu0 1.0
        %2031 = vmatprep.mubr.f32.mxu0 %v1146
        %2032 = vmatmul.mubr.f32.gmra.mrb[0].mxu0 %v1144
        %v2033 = vpop.f32.mrb[0].mxu0
        %v2034 = vadd.f32 %v1819, %v2033
        %v2035 = vpop.f32.mrb[0].mxu0
        %2036 = vmatprep.mubr.f32.mxu0 %v1152
        %2037 = vmatmul.mubr.f32.gmra.mrb[0].mxu0 %v1150
        %v2038 = vpop.f32.mrb[0].mxu0
        %v2039 = vadd.f32 %v1824, %v2038
        %v2040 = vpop.f32.mrb[0].mxu0
        %2041 = vmatprep.mubr.f32.mxu0 %v1158
        %2042 = vmatmul.mubr.f32.gmra.mrb[0].mxu0 %v1156
        %v2043 = vpop.f32.mrb[0].mxu0
        %v2044 = vadd.f32 %v1829, %v2043
        %v2045 = vpop.f32.mrb[0].mxu0
        %2046 = vmatprep.mubr.f32.mxu0 %v1164
        %2047 = vmatmul.mubr.f32.gmra.mrb[0].mxu0 %v1162
        %v2048 = vpop.f32.mrb[0].mxu0
        %v2049 = vadd.f32 %v1834, %v2048
        %v2050 = vpop.f32.mrb[0].mxu0
        %2051 = vmatprep.mubr.f32.mxu0 %v1170
        %2052 = vmatmul.mubr.f32.gmra.mrb[0].mxu0 %v1168
        %v2053 = vpop.f32.mrb[0].mxu0
        %v2054 = vadd.f32 %v1839, %v2053
        %v2055 = vpop.f32.mrb[0].mxu0
        %2056 = vmatprep.mubr.f32.mxu0 %v1176
        %2057 = vmatmul.mubr.f32.gmra.mrb[0].mxu0 %v1174
        %v2058 = vpop.f32.mrb[0].mxu0
        %v2059 = vadd.f32 %v1844, %v2058
        %v2060 = vpop.f32.mrb[0].mxu0
        %2061 = vmatprep.mubr.f32.mxu0 %v1182
        %2062 = vmatmul.mubr.f32.gmra.mrb[0].mxu0 %v1180
        %v2063 = vpop.f32.mrb[0].mxu0
        %v2064 = vadd.f32 %v1849, %v2063
        %v2065 = vpop.f32.mrb[0].mxu0
        %2066 = vmatprep.mubr.f32.mxu0 %v1188
        %2067 = vmatmul.mubr.f32.gmra.mrb[0].mxu0 %v1186
        %v2068 = vpop.f32.mrb[0].mxu0
        %v2069 = vadd.f32 %v1854, %v2068
        %v2070 = vpop.f32.mrb[0].mxu0
        %2071 = vmatprep.mubr.f32.mxu0 %v1194
        %2072 = vmatmul.mubr.f32.gmra.mrb[0].mxu0 %v1192
        %v2073 = vpop.f32.mrb[0].mxu0
        %v2074 = vadd.f32 %v1859, %v2073
        %v2075 = vpop.f32.mrb[0].mxu0
        %2076 = vmatprep.mubr.f32.mxu0 %v1200
        %2077 = vmatmul.mubr.f32.gmra.mrb[0].mxu0 %v1198
        %v2078 = vpop.f32.mrb[0].mxu0
        %v2079 = vadd.f32 %v1864, %v2078
        %v2080 = vpop.f32.mrb[0].mxu0
        %2081 = vmatprep.mubr.f32.mxu0 %v1206
        %2082 = vmatmul.mubr.f32.gmra.mrb[0].mxu0 %v1204
        %v2083 = vpop.f32.mrb[0].mxu0
        %v2084 = vadd.f32 %v1869, %v2083
        %v2085 = vpop.f32.mrb[0].mxu0
        %2086 = vmatprep.mubr.f32.mxu0 %v1212
        %2087 = vmatmul.mubr.f32.gmra.mrb[0].mxu0 %v1210
        %v2088 = vpop.f32.mrb[0].mxu0
        %v2089 = vadd.f32 %v1874, %v2088
        %v2090 = vpop.f32.mrb[0].mxu0
        %2091 = vmatprep.mubr.f32.mxu0 %v1218
        %2092 = vmatmul.mubr.f32.gmra.mrb[0].mxu0 %v1216
        %v2093 = vpop.f32.mrb[0].mxu0
        %v2094 = vadd.f32 %v1879, %v2093
        %v2095 = vpop.f32.mrb[0].mxu0
        %2096 = vmatprep.mubr.f32.mxu0 %v1224
        %2097 = vmatmul.mubr.f32.gmra.mrb[0].mxu0 %v1222
        %v2098 = vpop.f32.mrb[0].mxu0
        %v2099 = vadd.f32 %v1884, %v2098
        %v2100 = vpop.f32.mrb[0].mxu0
        %2101 = vmatprep.mubr.f32.mxu0 %v1230
        %2102 = vmatmul.mubr.f32.gmra.mrb[0].mxu0 %v1228
        %v2103 = vpop.f32.mrb[0].mxu0
        %v2104 = vadd.f32 %v1889, %v2103
        %v2105 = vpop.f32.mrb[0].mxu0
        %2106 = vmatprep.mubr.f32.mxu0 %v1236
        %2107 = vmatmul.mubr.f32.gmra.mrb[0].mxu0 %v1234
        %v2108 = vpop.f32.mrb[0].mxu0
        %v2109 = vadd.f32 %v1894, %v2108
        %v2110 = vpop.f32.mrb[0].mxu0
        %2111 = vmatprep.mubr.f32.mxu0 %v1242
        %2112 = vmatmul.mubr.f32.gmra.mrb[0].mxu0 %v1240
        %v2113 = vpop.f32.mrb[0].mxu0
        %v2114 = vadd.f32 %v1899, %v2113
        %v2115 = vpop.f32.mrb[0].mxu0
        %2116 = vmatprep.mubr.f32.mxu0 %v1248
        %2117 = vmatmul.mubr.f32.gmra.mrb[0].mxu0 %v1246
        %v2118 = vpop.f32.mrb[0].mxu0
        %v2119 = vadd.f32 %v1904, %v2118
        %v2120 = vpop.f32.mrb[0].mxu0
        %2121 = vmatprep.mubr.f32.mxu0 %v1254
        %2122 = vmatmul.mubr.f32.gmra.mrb[0].mxu0 %v1252
        %v2123 = vpop.f32.mrb[0].mxu0
        %v2124 = vadd.f32 %v1909, %v2123
        %v2125 = vpop.f32.mrb[0].mxu0
        %2126 = vmatprep.mubr.f32.mxu0 %v1260
        %2127 = vmatmul.mubr.f32.gmra.mrb[0].mxu0 %v1258
        %v2128 = vpop.f32.mrb[0].mxu0
        %v2129 = vadd.f32 %v1914, %v2128
        %v2130 = vpop.f32.mrb[0].mxu0
        %2131 = vmatprep.mubr.f32.mxu0 %v1266
        %2132 = vmatmul.mubr.f32.gmra.mrb[0].mxu0 %v1264
        %v2133 = vpop.f32.mrb[0].mxu0
        %v2134 = vadd.f32 %v1919, %v2133
        %v2135 = vpop.f32.mrb[0].mxu0
        %2136 = vmatprep.mubr.f32.mxu0 %v1272
        %2137 = vmatmul.mubr.f32.gmra.mrb[0].mxu0 %v1270
        %v2138 = vpop.f32.mrb[0].mxu0
        %v2139 = vadd.f32 %v1924, %v2138
        %v2140 = vpop.f32.mrb[0].mxu0
        %2141 = vmatprep.mubr.f32.mxu0 %v1278
        %2142 = vmatmul.mubr.f32.gmra.mrb[0].mxu0 %v1276
        %v2143 = vpop.f32.mrb[0].mxu0
        %v2144 = vadd.f32 %v1929, %v2143
        %v2145 = vpop.f32.mrb[0].mxu0
        %2146 = vmatprep.mubr.f32.mxu0 %v1284
        %2147 = vmatmul.mubr.f32.gmra.mrb[0].mxu0 %v1282
        %v2148 = vpop.f32.mrb[0].mxu0
        %v2149 = vadd.f32 %v1934, %v2148
        %v2150 = vpop.f32.mrb[0].mxu0
        %2151 = vmatprep.mubr.f32.mxu0 %v1290
        %2152 = vmatmul.mubr.f32.gmra.mrb[0].mxu0 %v1288
        %v2153 = vpop.f32.mrb[0].mxu0
        %v2154 = vadd.f32 %v1939, %v2153
        %v2155 = vpop.f32.mrb[0].mxu0
        %2156 = vmatprep.mubr.f32.mxu0 %v1296
        %2157 = vmatmul.mubr.f32.gmra.mrb[0].mxu0 %v1294
        %v2158 = vpop.f32.mrb[0].mxu0
        %v2159 = vadd.f32 %v1944, %v2158
        %v2160 = vpop.f32.mrb[0].mxu0
        %2161 = vmatprep.mubr.f32.mxu0 %v1302
        %2162 = vmatmul.mubr.f32.gmra.mrb[0].mxu0 %v1300
        %v2163 = vpop.f32.mrb[0].mxu0
        %v2164 = vadd.f32 %v1949, %v2163
        %v2165 = vpop.f32.mrb[0].mxu0
        %2166 = vmatprep.mubr.f32.mxu0 %v1308
        %2167 = vmatmul.mubr.f32.gmra.mrb[0].mxu0 %v1306
        %v2168 = vpop.f32.mrb[0].mxu0
        %v2169 = vadd.f32 %v1954, %v2168
        %v2170 = vpop.f32.mrb[0].mxu0
        %2171 = vmatprep.mubr.f32.mxu0 %v1314
        %2172 = vmatmul.mubr.f32.gmra.mrb[0].mxu0 %v1312
        %v2173 = vpop.f32.mrb[0].mxu0
        %v2174 = vadd.f32 %v1959, %v2173
        %v2175 = vpop.f32.mrb[0].mxu0
        %2176 = vmatprep.mubr.f32.mxu0 %v1320
        %2177 = vmatmul.mubr.f32.gmra.mrb[0].mxu0 %v1318
        %v2178 = vpop.f32.mrb[0].mxu0
        %v2179 = vadd.f32 %v1964, %v2178
        %v2180 = vpop.f32.mrb[0].mxu0
        %2181 = vdwg.mxu0
        %2182 = vmatprep.subr.mxu0 0.0
        %2183 = vmatpush1.msra.mxu0 1.0
        %2184 = vmatprep.subr.mxu0 0.0
        %2185 = vmatpush1.msra.mxu0 1.0
        %2186 = vmatprep.subr.mxu0 0.0
        %2187 = vmatpush1.msra.mxu0 1.0
        %2188 = vmatprep.subr.mxu0 0.0
        %2189 = vmatpush1.msra.mxu0 1.0
        %2190 = vmatprep.subr.mxu0 0.0
        %2191 = vmatpush1.msra.mxu0 1.0
        %2192 = vmatprep.subr.mxu0 0.0
        %2193 = vmatpush1.msra.mxu0 1.0
        %2194 = vmatprep.subr.mxu0 0.0
        %2195 = vmatpush1.msra.mxu0 1.0
        %2196 = vmatprep.subr.mxu0 0.0
        %2197 = vmatpush1.msra.mxu0 1.0
        %2198 = vmatprep.subr.mxu0 0.0
        %2199 = vmatpush1.msra.mxu0 1.0
        %2200 = vmatprep.subr.mxu0 0.0
        %2201 = vmatpush1.msra.mxu0 1.0
        %2202 = vmatprep.subr.mxu0 0.0
        %2203 = vmatpush1.msra.mxu0 1.0
        %2204 = vmatprep.subr.mxu0 0.0
        %2205 = vmatpush1.msra.mxu0 1.0
        %2206 = vmatprep.subr.mxu0 0.0
        %2207 = vmatpush1.msra.mxu0 1.0
        %2208 = vmatprep.subr.mxu0 0.0
        %2209 = vmatpush1.msra.mxu0 1.0
        %2210 = vmatprep.subr.mxu0 0.0
        %2211 = vmatpush1.msra.mxu0 1.0
        %2212 = vmatprep.subr.mxu0 0.0
        %2213 = vmatpush1.msra.mxu0 1.0
        %2214 = vmatprep.subr.mxu0 0.0
        %2215 = vmatpush1.msra.mxu0 0.0
        %2216 = vmatprep.subr.mxu0 0.0
        %2217 = vmatpush1.msra.mxu0 0.0
        %2218 = vmatprep.subr.mxu0 0.0
        %2219 = vmatpush1.msra.mxu0 0.0
        %2220 = vmatprep.subr.mxu0 0.0
        %2221 = vmatpush1.msra.mxu0 0.0
        %2222 = vmatprep.subr.mxu0 0.0
        %2223 = vmatpush1.msra.mxu0 0.0
        %2224 = vmatprep.subr.mxu0 0.0
        %2225 = vmatpush1.msra.mxu0 0.0
        %2226 = vmatprep.subr.mxu0 0.0
        %2227 = vmatpush1.msra.mxu0 0.0
        %2228 = vmatprep.subr.mxu0 0.0
        %2229 = vmatpush1.msra.mxu0 0.0
        %2230 = vmatprep.subr.mxu0 0.0
        %2231 = vmatpush1.msra.mxu0 0.0
        %2232 = vmatprep.subr.mxu0 0.0
        %2233 = vmatpush1.msra.mxu0 0.0
        %2234 = vmatprep.subr.mxu0 0.0
        %2235 = vmatpush1.msra.mxu0 0.0
        %2236 = vmatprep.subr.mxu0 0.0
        %2237 = vmatpush1.msra.mxu0 0.0
        %2238 = vmatprep.subr.mxu0 0.0
        %2239 = vmatpush1.msra.mxu0 0.0
        %2240 = vmatprep.subr.mxu0 0.0
        %2241 = vmatpush1.msra.mxu0 0.0
        %2242 = vmatprep.subr.mxu0 0.0
        %2243 = vmatpush1.msra.mxu0 0.0
        %2244 = vmatprep.subr.mxu0 0.0
        %2245 = vmatpush1.msra.mxu0 0.0
        %2246 = vmatprep.mubr.f32.mxu0 0.0
        %2247 = vmatmul.mubr.f32.gmra.mrb[0].mxu0 %v1389
        %v2248 = vpop.f32.mrb[0].mxu0
        %v2249 = vadd.f32 %v2034, %v2248
        %v2250 = vpop.f32.mrb[0].mxu0
        %2251 = vmatprep.mubr.f32.mxu0 0.0
        %2252 = vmatmul.mubr.f32.gmra.mrb[0].mxu0 %v1394
        %v2253 = vpop.f32.mrb[0].mxu0
        %v2254 = vadd.f32 %v2039, %v2253
        %v2255 = vpop.f32.mrb[0].mxu0
        %2256 = vmatprep.mubr.f32.mxu0 0.0
        %2257 = vmatmul.mubr.f32.gmra.mrb[0].mxu0 %v1399
        %v2258 = vpop.f32.mrb[0].mxu0
        %v2259 = vadd.f32 %v2044, %v2258
        %v2260 = vpop.f32.mrb[0].mxu0
        %2261 = vmatprep.mubr.f32.mxu0 0.0
        %2262 = vmatmul.mubr.f32.gmra.mrb[0].mxu0 %v1404
        %v2263 = vpop.f32.mrb[0].mxu0
        %v2264 = vadd.f32 %v2049, %v2263
        %v2265 = vpop.f32.mrb[0].mxu0
        %2266 = vmatprep.mubr.f32.mxu0 0.0
        %2267 = vmatmul.mubr.f32.gmra.mrb[0].mxu0 %v1409
        %v2268 = vpop.f32.mrb[0].mxu0
        %v2269 = vadd.f32 %v2054, %v2268
        %v2270 = vpop.f32.mrb[0].mxu0
        %2271 = vmatprep.mubr.f32.mxu0 0.0
        %2272 = vmatmul.mubr.f32.gmra.mrb[0].mxu0 %v1414
        %v2273 = vpop.f32.mrb[0].mxu0
        %v2274 = vadd.f32 %v2059, %v2273
        %v2275 = vpop.f32.mrb[0].mxu0
        %2276 = vmatprep.mubr.f32.mxu0 0.0
        %2277 = vmatmul.mubr.f32.gmra.mrb[0].mxu0 %v1419
        %v2278 = vpop.f32.mrb[0].mxu0
        %v2279 = vadd.f32 %v2064, %v2278
        %v2280 = vpop.f32.mrb[0].mxu0
        %2281 = vmatprep.mubr.f32.mxu0 0.0
        %2282 = vmatmul.mubr.f32.gmra.mrb[0].mxu0 %v1424
        %v2283 = vpop.f32.mrb[0].mxu0
        %v2284 = vadd.f32 %v2069, %v2283
        %v2285 = vpop.f32.mrb[0].mxu0
        %2286 = vmatprep.mubr.f32.mxu0 0.0
        %2287 = vmatmul.mubr.f32.gmra.mrb[0].mxu0 %v1429
        %v2288 = vpop.f32.mrb[0].mxu0
        %v2289 = vadd.f32 %v2074, %v2288
        %v2290 = vpop.f32.mrb[0].mxu0
        %2291 = vmatprep.mubr.f32.mxu0 0.0
        %2292 = vmatmul.mubr.f32.gmra.mrb[0].mxu0 %v1434
        %v2293 = vpop.f32.mrb[0].mxu0
        %v2294 = vadd.f32 %v2079, %v2293
        %v2295 = vpop.f32.mrb[0].mxu0
        %2296 = vmatprep.mubr.f32.mxu0 0.0
        %2297 = vmatmul.mubr.f32.gmra.mrb[0].mxu0 %v1439
        %v2298 = vpop.f32.mrb[0].mxu0
        %v2299 = vadd.f32 %v2084, %v2298
        %v2300 = vpop.f32.mrb[0].mxu0
        %2301 = vmatprep.mubr.f32.mxu0 0.0
        %2302 = vmatmul.mubr.f32.gmra.mrb[0].mxu0 %v1444
        %v2303 = vpop.f32.mrb[0].mxu0
        %v2304 = vadd.f32 %v2089, %v2303
        %v2305 = vpop.f32.mrb[0].mxu0
        %2306 = vmatprep.mubr.f32.mxu0 0.0
        %2307 = vmatmul.mubr.f32.gmra.mrb[0].mxu0 %v1449
        %v2308 = vpop.f32.mrb[0].mxu0
        %v2309 = vadd.f32 %v2094, %v2308
        %v2310 = vpop.f32.mrb[0].mxu0
        %2311 = vmatprep.mubr.f32.mxu0 0.0
        %2312 = vmatmul.mubr.f32.gmra.mrb[0].mxu0 %v1454
        %v2313 = vpop.f32.mrb[0].mxu0
        %v2314 = vadd.f32 %v2099, %v2313
        %v2315 = vpop.f32.mrb[0].mxu0
        %2316 = vmatprep.mubr.f32.mxu0 0.0
        %2317 = vmatmul.mubr.f32.gmra.mrb[0].mxu0 %v1459
        %v2318 = vpop.f32.mrb[0].mxu0
        %v2319 = vadd.f32 %v2104, %v2318
        %v2320 = vpop.f32.mrb[0].mxu0
        %2321 = vmatprep.mubr.f32.mxu0 0.0
        %2322 = vmatmul.mubr.f32.gmra.mrb[0].mxu0 %v1464
        %v2323 = vpop.f32.mrb[0].mxu0
        %v2324 = vadd.f32 %v2109, %v2323
        %v2325 = vpop.f32.mrb[0].mxu0
        %2326 = vmatprep.mubr.f32.mxu0 0.0
        %2327 = vmatmul.mubr.f32.gmra.mrb[0].mxu0 %v1469
        %v2328 = vpop.f32.mrb[0].mxu0
        %v2329 = vadd.f32 %v2114, %v2328
        %v2330 = vpop.f32.mrb[0].mxu0
        %2331 = vmatprep.mubr.f32.mxu0 0.0
        %2332 = vmatmul.mubr.f32.gmra.mrb[0].mxu0 %v1474
        %v2333 = vpop.f32.mrb[0].mxu0
        %v2334 = vadd.f32 %v2119, %v2333
        %v2335 = vpop.f32.mrb[0].mxu0
        %2336 = vmatprep.mubr.f32.mxu0 0.0
        %2337 = vmatmul.mubr.f32.gmra.mrb[0].mxu0 %v1479
        %v2338 = vpop.f32.mrb[0].mxu0
        %v2339 = vadd.f32 %v2124, %v2338
        %v2340 = vpop.f32.mrb[0].mxu0
        %2341 = vmatprep.mubr.f32.mxu0 0.0
        %2342 = vmatmul.mubr.f32.gmra.mrb[0].mxu0 %v1484
        %v2343 = vpop.f32.mrb[0].mxu0
        %v2344 = vadd.f32 %v2129, %v2343
        %v2345 = vpop.f32.mrb[0].mxu0
        %2346 = vmatprep.mubr.f32.mxu0 0.0
        %2347 = vmatmul.mubr.f32.gmra.mrb[0].mxu0 %v1489
        %v2348 = vpop.f32.mrb[0].mxu0
        %v2349 = vadd.f32 %v2134, %v2348
        %v2350 = vpop.f32.mrb[0].mxu0
        %2351 = vmatprep.mubr.f32.mxu0 0.0
        %2352 = vmatmul.mubr.f32.gmra.mrb[0].mxu0 %v1494
        %v2353 = vpop.f32.mrb[0].mxu0
        %v2354 = vadd.f32 %v2139, %v2353
        %v2355 = vpop.f32.mrb[0].mxu0
        %2356 = vmatprep.mubr.f32.mxu0 0.0
        %2357 = vmatmul.mubr.f32.gmra.mrb[0].mxu0 %v1499
        %v2358 = vpop.f32.mrb[0].mxu0
        %v2359 = vadd.f32 %v2144, %v2358
        %v2360 = vpop.f32.mrb[0].mxu0
        %2361 = vmatprep.mubr.f32.mxu0 0.0
        %2362 = vmatmul.mubr.f32.gmra.mrb[0].mxu0 %v1504
        %v2363 = vpop.f32.mrb[0].mxu0
        %v2364 = vadd.f32 %v2149, %v2363
        %v2365 = vpop.f32.mrb[0].mxu0
        %2366 = vmatprep.mubr.f32.mxu0 0.0
        %2367 = vmatmul.mubr.f32.gmra.mrb[0].mxu0 %v1509
        %v2368 = vpop.f32.mrb[0].mxu0
        %v2369 = vadd.f32 %v2154, %v2368
        %v2370 = vpop.f32.mrb[0].mxu0
        %2371 = vmatprep.mubr.f32.mxu0 0.0
        %2372 = vmatmul.mubr.f32.gmra.mrb[0].mxu0 %v1514
        %v2373 = vpop.f32.mrb[0].mxu0
        %v2374 = vadd.f32 %v2159, %v2373
        %v2375 = vpop.f32.mrb[0].mxu0
        %2376 = vmatprep.mubr.f32.mxu0 0.0
        %2377 = vmatmul.mubr.f32.gmra.mrb[0].mxu0 %v1519
        %v2378 = vpop.f32.mrb[0].mxu0
        %v2379 = vadd.f32 %v2164, %v2378
        %v2380 = vpop.f32.mrb[0].mxu0
        %2381 = vmatprep.mubr.f32.mxu0 0.0
        %2382 = vmatmul.mubr.f32.gmra.mrb[0].mxu0 %v1524
        %v2383 = vpop.f32.mrb[0].mxu0
        %v2384 = vadd.f32 %v2169, %v2383
        %v2385 = vpop.f32.mrb[0].mxu0
        %2386 = vmatprep.mubr.f32.mxu0 0.0
        %2387 = vmatmul.mubr.f32.gmra.mrb[0].mxu0 %v1529
        %v2388 = vpop.f32.mrb[0].mxu0
        %v2389 = vadd.f32 %v2174, %v2388
        %v2390 = vpop.f32.mrb[0].mxu0
        %2391 = vmatprep.mubr.f32.mxu0 0.0
        %2392 = vmatmul.mubr.f32.gmra.mrb[0].mxu0 %v1534
        %v2393 = vpop.f32.mrb[0].mxu0
        %v2394 = vadd.f32 %v2179, %v2393
        %v2395 = vpop.f32.mrb[0].mxu0
        %2396 = vdwg.mxu0
        %v2397 = vmul.f32 %v654, %v654
        %v2398 = vmul.f32 %v656, %v656
        %v2399 = vmul.f32 %v899, %v899
        %v2400 = vmul.f32 %v901, %v901
        %v2401 = vmul.f32 %v1144, %v1144
        %v2402 = vmul.f32 %v1146, %v1146
        %v2403 = vmul.f32 %v1389, %v1389
        %v2404 = vmul.f32 %v660, %v660
        %v2405 = vmul.f32 %v662, %v662
        %v2406 = vmul.f32 %v905, %v905
        %v2407 = vmul.f32 %v907, %v907
        %v2408 = vmul.f32 %v1150, %v1150
        %v2409 = vmul.f32 %v1152, %v1152
        %v2410 = vmul.f32 %v1394, %v1394
        %v2411 = vmul.f32 %v666, %v666
        %v2412 = vmul.f32 %v668, %v668
        %v2413 = vmul.f32 %v911, %v911
        %v2414 = vmul.f32 %v913, %v913
        %v2415 = vmul.f32 %v1156, %v1156
        %v2416 = vmul.f32 %v1158, %v1158
        %v2417 = vmul.f32 %v1399, %v1399
        %v2418 = vmul.f32 %v672, %v672
        %v2419 = vmul.f32 %v674, %v674
        %v2420 = vmul.f32 %v917, %v917
        %v2421 = vmul.f32 %v919, %v919
        %v2422 = vmul.f32 %v1162, %v1162
        %v2423 = vmul.f32 %v1164, %v1164
        %v2424 = vmul.f32 %v1404, %v1404
        %v2425 = vmul.f32 %v678, %v678
        %v2426 = vmul.f32 %v680, %v680
        %v2427 = vmul.f32 %v923, %v923
        %v2428 = vmul.f32 %v925, %v925
        %v2429 = vmul.f32 %v1168, %v1168
        %v2430 = vmul.f32 %v1170, %v1170
        %v2431 = vmul.f32 %v1409, %v1409
        %v2432 = vmul.f32 %v684, %v684
        %v2433 = vmul.f32 %v686, %v686
        %v2434 = vmul.f32 %v929, %v929
        %v2435 = vmul.f32 %v931, %v931
        %v2436 = vmul.f32 %v1174, %v1174
        %v2437 = vmul.f32 %v1176, %v1176
        %v2438 = vmul.f32 %v1414, %v1414
        %v2439 = vmul.f32 %v690, %v690
        %v2440 = vmul.f32 %v692, %v692
        %v2441 = vmul.f32 %v935, %v935
        %v2442 = vmul.f32 %v937, %v937
        %v2443 = vmul.f32 %v1180, %v1180
        %v2444 = vmul.f32 %v1182, %v1182
        %v2445 = vmul.f32 %v1419, %v1419
        %v2446 = vmul.f32 %v696, %v696
        %v2447 = vmul.f32 %v698, %v698
        %v2448 = vmul.f32 %v941, %v941
        %v2449 = vmul.f32 %v943, %v943
        %v2450 = vmul.f32 %v1186, %v1186
        %v2451 = vmul.f32 %v1188, %v1188
        %v2452 = vmul.f32 %v1424, %v1424
        %v2453 = vmul.f32 %v702, %v702
        %v2454 = vmul.f32 %v704, %v704
        %v2455 = vmul.f32 %v947, %v947
        %v2456 = vmul.f32 %v949, %v949
        %v2457 = vmul.f32 %v1192, %v1192
        %v2458 = vmul.f32 %v1194, %v1194
        %v2459 = vmul.f32 %v1429, %v1429
        %v2460 = vmul.f32 %v708, %v708
        %v2461 = vmul.f32 %v710, %v710
        %v2462 = vmul.f32 %v953, %v953
        %v2463 = vmul.f32 %v955, %v955
        %v2464 = vmul.f32 %v1198, %v1198
        %v2465 = vmul.f32 %v1200, %v1200
        %v2466 = vmul.f32 %v1434, %v1434
        %v2467 = vmul.f32 %v714, %v714
        %v2468 = vmul.f32 %v716, %v716
        %v2469 = vmul.f32 %v959, %v959
        %v2470 = vmul.f32 %v961, %v961
        %v2471 = vmul.f32 %v1204, %v1204
        %v2472 = vmul.f32 %v1206, %v1206
        %v2473 = vmul.f32 %v1439, %v1439
        %v2474 = vmul.f32 %v720, %v720
        %v2475 = vmul.f32 %v722, %v722
        %v2476 = vmul.f32 %v965, %v965
        %v2477 = vmul.f32 %v967, %v967
        %v2478 = vmul.f32 %v1210, %v1210
        %v2479 = vmul.f32 %v1212, %v1212
        %v2480 = vmul.f32 %v1444, %v1444
        %v2481 = vmul.f32 %v726, %v726
        %v2482 = vmul.f32 %v728, %v728
        %v2483 = vmul.f32 %v971, %v971
        %v2484 = vmul.f32 %v973, %v973
        %v2485 = vmul.f32 %v1216, %v1216
        %v2486 = vmul.f32 %v1218, %v1218
        %v2487 = vmul.f32 %v1449, %v1449
        %v2488 = vmul.f32 %v732, %v732
        %v2489 = vmul.f32 %v734, %v734
        %v2490 = vmul.f32 %v977, %v977
        %v2491 = vmul.f32 %v979, %v979
        %v2492 = vmul.f32 %v1222, %v1222
        %v2493 = vmul.f32 %v1224, %v1224
        %v2494 = vmul.f32 %v1454, %v1454
        %v2495 = vmul.f32 %v738, %v738
        %v2496 = vmul.f32 %v740, %v740
        %v2497 = vmul.f32 %v983, %v983
        %v2498 = vmul.f32 %v985, %v985
        %v2499 = vmul.f32 %v1228, %v1228
        %v2500 = vmul.f32 %v1230, %v1230
        %v2501 = vmul.f32 %v1459, %v1459
        %v2502 = vmul.f32 %v744, %v744
        %v2503 = vmul.f32 %v746, %v746
        %v2504 = vmul.f32 %v989, %v989
        %v2505 = vmul.f32 %v991, %v991
        %v2506 = vmul.f32 %v1234, %v1234
        %v2507 = vmul.f32 %v1236, %v1236
        %v2508 = vmul.f32 %v1464, %v1464
        %v2509 = vmul.f32 %v750, %v750
        %v2510 = vmul.f32 %v752, %v752
        %v2511 = vmul.f32 %v995, %v995
        %v2512 = vmul.f32 %v997, %v997
        %v2513 = vmul.f32 %v1240, %v1240
        %v2514 = vmul.f32 %v1242, %v1242
        %v2515 = vmul.f32 %v1469, %v1469
        %v2516 = vmul.f32 %v756, %v756
        %v2517 = vmul.f32 %v758, %v758
        %v2518 = vmul.f32 %v1001, %v1001
        %v2519 = vmul.f32 %v1003, %v1003
        %v2520 = vmul.f32 %v1246, %v1246
        %v2521 = vmul.f32 %v1248, %v1248
        %v2522 = vmul.f32 %v1474, %v1474
        %v2523 = vmul.f32 %v762, %v762
        %v2524 = vmul.f32 %v764, %v764
        %v2525 = vmul.f32 %v1007, %v1007
        %v2526 = vmul.f32 %v1009, %v1009
        %v2527 = vmul.f32 %v1252, %v1252
        %v2528 = vmul.f32 %v1254, %v1254
        %v2529 = vmul.f32 %v1479, %v1479
        %v2530 = vmul.f32 %v768, %v768
        %v2531 = vmul.f32 %v770, %v770
        %v2532 = vmul.f32 %v1013, %v1013
        %v2533 = vmul.f32 %v1015, %v1015
        %v2534 = vmul.f32 %v1258, %v1258
        %v2535 = vmul.f32 %v1260, %v1260
        %v2536 = vmul.f32 %v1484, %v1484
        %v2537 = vmul.f32 %v774, %v774
        %v2538 = vmul.f32 %v776, %v776
        %v2539 = vmul.f32 %v1019, %v1019
        %v2540 = vmul.f32 %v1021, %v1021
        %v2541 = vmul.f32 %v1264, %v1264
        %v2542 = vmul.f32 %v1266, %v1266
        %v2543 = vmul.f32 %v1489, %v1489
        %v2544 = vmul.f32 %v780, %v780
        %v2545 = vmul.f32 %v782, %v782
        %v2546 = vmul.f32 %v1025, %v1025
        %v2547 = vmul.f32 %v1027, %v1027
        %v2548 = vmul.f32 %v1270, %v1270
        %v2549 = vmul.f32 %v1272, %v1272
        %v2550 = vmul.f32 %v1494, %v1494
        %v2551 = vmul.f32 %v786, %v786
        %v2552 = vmul.f32 %v788, %v788
        %v2553 = vmul.f32 %v1031, %v1031
        %v2554 = vmul.f32 %v1033, %v1033
        %v2555 = vmul.f32 %v1276, %v1276
        %v2556 = vmul.f32 %v1278, %v1278
        %v2557 = vmul.f32 %v1499, %v1499
        %v2558 = vmul.f32 %v792, %v792
        %v2559 = vmul.f32 %v794, %v794
        %v2560 = vmul.f32 %v1037, %v1037
        %v2561 = vmul.f32 %v1039, %v1039
        %v2562 = vmul.f32 %v1282, %v1282
        %v2563 = vmul.f32 %v1284, %v1284
        %v2564 = vmul.f32 %v1504, %v1504
        %v2565 = vmul.f32 %v798, %v798
        %v2566 = vmul.f32 %v800, %v800
        %v2567 = vmul.f32 %v1043, %v1043
        %v2568 = vmul.f32 %v1045, %v1045
        %v2569 = vmul.f32 %v1288, %v1288
        %v2570 = vmul.f32 %v1290, %v1290
        %v2571 = vmul.f32 %v1509, %v1509
        %v2572 = vmul.f32 %v804, %v804
        %v2573 = vmul.f32 %v806, %v806
        %v2574 = vmul.f32 %v1049, %v1049
        %v2575 = vmul.f32 %v1051, %v1051
        %v2576 = vmul.f32 %v1294, %v1294
        %v2577 = vmul.f32 %v1296, %v1296
        %v2578 = vmul.f32 %v1514, %v1514
        %v2579 = vmul.f32 %v810, %v810
        %v2580 = vmul.f32 %v812, %v812
        %v2581 = vmul.f32 %v1055, %v1055
        %v2582 = vmul.f32 %v1057, %v1057
        %v2583 = vmul.f32 %v1300, %v1300
        %v2584 = vmul.f32 %v1302, %v1302
        %v2585 = vmul.f32 %v1519, %v1519
        %v2586 = vmul.f32 %v816, %v816
        %v2587 = vmul.f32 %v818, %v818
        %v2588 = vmul.f32 %v1061, %v1061
        %v2589 = vmul.f32 %v1063, %v1063
        %v2590 = vmul.f32 %v1306, %v1306
        %v2591 = vmul.f32 %v1308, %v1308
        %v2592 = vmul.f32 %v1524, %v1524
        %v2593 = vmul.f32 %v822, %v822
        %v2594 = vmul.f32 %v824, %v824
        %v2595 = vmul.f32 %v1067, %v1067
        %v2596 = vmul.f32 %v1069, %v1069
        %v2597 = vmul.f32 %v1312, %v1312
        %v2598 = vmul.f32 %v1314, %v1314
        %v2599 = vmul.f32 %v1529, %v1529
        %v2600 = vmul.f32 %v828, %v828
        %v2601 = vmul.f32 %v830, %v830
        %v2602 = vmul.f32 %v1073, %v1073
        %v2603 = vmul.f32 %v1075, %v1075
        %v2604 = vmul.f32 %v1318, %v1318
        %v2605 = vmul.f32 %v1320, %v1320
        %v2606 = vmul.f32 %v1534, %v1534
        %2607 = vmatprep.subr.mxu0 0.0
        %2608 = vmatpush1.msra.mxu0 1.0
        %2609 = vmatprep.subr.mxu0 0.0
        %2610 = vmatpush1.msra.mxu0 1.0
        %2611 = vmatprep.subr.mxu0 0.0
        %2612 = vmatpush1.msra.mxu0 1.0
        %2613 = vmatprep.subr.mxu0 0.0
        %2614 = vmatpush1.msra.mxu0 1.0
        %2615 = vmatprep.subr.mxu0 0.0
        %2616 = vmatpush1.msra.mxu0 1.0
        %2617 = vmatprep.subr.mxu0 0.0
        %2618 = vmatpush1.msra.mxu0 1.0
        %2619 = vmatprep.subr.mxu0 0.0
        %2620 = vmatpush1.msra.mxu0 1.0
        %2621 = vmatprep.subr.mxu0 0.0
        %2622 = vmatpush1.msra.mxu0 1.0
        %2623 = vmatprep.subr.mxu0 0.0
        %2624 = vmatpush1.msra.mxu0 1.0
        %2625 = vmatprep.subr.mxu0 0.0
        %2626 = vmatpush1.msra.mxu0 1.0
        %2627 = vmatprep.subr.mxu0 0.0
        %2628 = vmatpush1.msra.mxu0 1.0
        %2629 = vmatprep.subr.mxu0 0.0
        %2630 = vmatpush1.msra.mxu0 1.0
        %2631 = vmatprep.subr.mxu0 0.0
        %2632 = vmatpush1.msra.mxu0 1.0
        %2633 = vmatprep.subr.mxu0 0.0
        %2634 = vmatpush1.msra.mxu0 1.0
        %2635 = vmatprep.subr.mxu0 0.0
        %2636 = vmatpush1.msra.mxu0 1.0
        %2637 = vmatprep.subr.mxu0 0.0
        %2638 = vmatpush1.msra.mxu0 1.0
        %2639 = vmatprep.subr.mxu0 0.0
        %2640 = vmatpush1.msra.mxu0 1.0
        %2641 = vmatprep.subr.mxu0 0.0
        %2642 = vmatpush1.msra.mxu0 1.0
        %2643 = vmatprep.subr.mxu0 0.0
        %2644 = vmatpush1.msra.mxu0 1.0
        %2645 = vmatprep.subr.mxu0 0.0
        %2646 = vmatpush1.msra.mxu0 1.0
        %2647 = vmatprep.subr.mxu0 0.0
        %2648 = vmatpush1.msra.mxu0 1.0
        %2649 = vmatprep.subr.mxu0 0.0
        %2650 = vmatpush1.msra.mxu0 1.0
        %2651 = vmatprep.subr.mxu0 0.0
        %2652 = vmatpush1.msra.mxu0 1.0
        %2653 = vmatprep.subr.mxu0 0.0
        %2654 = vmatpush1.msra.mxu0 1.0
        %2655 = vmatprep.subr.mxu0 0.0
        %2656 = vmatpush1.msra.mxu0 1.0
        %2657 = vmatprep.subr.mxu0 0.0
        %2658 = vmatpush1.msra.mxu0 1.0
        %2659 = vmatprep.subr.mxu0 0.0
        %2660 = vmatpush1.msra.mxu0 1.0
        %2661 = vmatprep.subr.mxu0 0.0
        %2662 = vmatpush1.msra.mxu0 1.0
        %2663 = vmatprep.subr.mxu0 0.0
        %2664 = vmatpush1.msra.mxu0 1.0
        %2665 = vmatprep.subr.mxu0 0.0
        %2666 = vmatpush1.msra.mxu0 1.0
        %2667 = vmatprep.subr.mxu0 0.0
        %2668 = vmatpush1.msra.mxu0 1.0
        %2669 = vmatprep.subr.mxu0 0.0
        %2670 = vmatpush1.msra.mxu0 1.0
        %2671 = vmatprep.mubr.f32.mxu0 %v2398
        %2672 = vmatmul.mubr.f32.gmra.mrb[0].mxu0 %v2397
        %v2673 = vpop.f32.mrb[0].mxu0
        %v2674 = vadd.f32 0.0, %v2673
        %v2675 = vpop.f32.mrb[0].mxu0
        %2676 = vmatprep.mubr.f32.mxu0 %v2405
        %2677 = vmatmul.mubr.f32.gmra.mrb[0].mxu0 %v2404
        %v2678 = vpop.f32.mrb[0].mxu0
        %v2679 = vadd.f32 0.0, %v2678
        %v2680 = vpop.f32.mrb[0].mxu0
        %2681 = vmatprep.mubr.f32.mxu0 %v2412
        %2682 = vmatmul.mubr.f32.gmra.mrb[0].mxu0 %v2411
        %v2683 = vpop.f32.mrb[0].mxu0
        %v2684 = vadd.f32 0.0, %v2683
        %v2685 = vpop.f32.mrb[0].mxu0
        %2686 = vmatprep.mubr.f32.mxu0 %v2419
        %2687 = vmatmul.mubr.f32.gmra.mrb[0].mxu0 %v2418
        %v2688 = vpop.f32.mrb[0].mxu0
        %v2689 = vadd.f32 0.0, %v2688
        %v2690 = vpop.f32.mrb[0].mxu0
        %2691 = vmatprep.mubr.f32.mxu0 %v2426
        %2692 = vmatmul.mubr.f32.gmra.mrb[0].mxu0 %v2425
        %v2693 = vpop.f32.mrb[0].mxu0
        %v2694 = vadd.f32 0.0, %v2693
        %v2695 = vpop.f32.mrb[0].mxu0
        %2696 = vmatprep.mubr.f32.mxu0 %v2433
        %2697 = vmatmul.mubr.f32.gmra.mrb[0].mxu0 %v2432
        %v2698 = vpop.f32.mrb[0].mxu0
        %v2699 = vadd.f32 0.0, %v2698
        %v2700 = vpop.f32.mrb[0].mxu0
        %2701 = vmatprep.mubr.f32.mxu0 %v2440
        %2702 = vmatmul.mubr.f32.gmra.mrb[0].mxu0 %v2439
        %v2703 = vpop.f32.mrb[0].mxu0
        %v2704 = vadd.f32 0.0, %v2703
        %v2705 = vpop.f32.mrb[0].mxu0
        %2706 = vmatprep.mubr.f32.mxu0 %v2447
        %2707 = vmatmul.mubr.f32.gmra.mrb[0].mxu0 %v2446
        %v2708 = vpop.f32.mrb[0].mxu0
        %v2709 = vadd.f32 0.0, %v2708
        %v2710 = vpop.f32.mrb[0].mxu0
        %2711 = vmatprep.mubr.f32.mxu0 %v2454
        %2712 = vmatmul.mubr.f32.gmra.mrb[0].mxu0 %v2453
        %v2713 = vpop.f32.mrb[0].mxu0
        %v2714 = vadd.f32 0.0, %v2713
        %v2715 = vpop.f32.mrb[0].mxu0
        %2716 = vmatprep.mubr.f32.mxu0 %v2461
        %2717 = vmatmul.mubr.f32.gmra.mrb[0].mxu0 %v2460
        %v2718 = vpop.f32.mrb[0].mxu0
        %v2719 = vadd.f32 0.0, %v2718
        %v2720 = vpop.f32.mrb[0].mxu0
        %2721 = vmatprep.mubr.f32.mxu0 %v2468
        %2722 = vmatmul.mubr.f32.gmra.mrb[0].mxu0 %v2467
        %v2723 = vpop.f32.mrb[0].mxu0
        %v2724 = vadd.f32 0.0, %v2723
        %v2725 = vpop.f32.mrb[0].mxu0
        %2726 = vmatprep.mubr.f32.mxu0 %v2475
        %2727 = vmatmul.mubr.f32.gmra.mrb[0].mxu0 %v2474
        %v2728 = vpop.f32.mrb[0].mxu0
        %v2729 = vadd.f32 0.0, %v2728
        %v2730 = vpop.f32.mrb[0].mxu0
        %2731 = vmatprep.mubr.f32.mxu0 %v2482
        %2732 = vmatmul.mubr.f32.gmra.mrb[0].mxu0 %v2481
        %v2733 = vpop.f32.mrb[0].mxu0
        %v2734 = vadd.f32 0.0, %v2733
        %v2735 = vpop.f32.mrb[0].mxu0
        %2736 = vmatprep.mubr.f32.mxu0 %v2489
        %2737 = vmatmul.mubr.f32.gmra.mrb[0].mxu0 %v2488
        %v2738 = vpop.f32.mrb[0].mxu0
        %v2739 = vadd.f32 0.0, %v2738
        %v2740 = vpop.f32.mrb[0].mxu0
        %2741 = vmatprep.mubr.f32.mxu0 %v2496
        %2742 = vmatmul.mubr.f32.gmra.mrb[0].mxu0 %v2495
        %v2743 = vpop.f32.mrb[0].mxu0
        %v2744 = vadd.f32 0.0, %v2743
        %v2745 = vpop.f32.mrb[0].mxu0
        %2746 = vmatprep.mubr.f32.mxu0 %v2503
        %2747 = vmatmul.mubr.f32.gmra.mrb[0].mxu0 %v2502
        %v2748 = vpop.f32.mrb[0].mxu0
        %v2749 = vadd.f32 0.0, %v2748
        %v2750 = vpop.f32.mrb[0].mxu0
        %2751 = vmatprep.mubr.f32.mxu0 %v2510
        %2752 = vmatmul.mubr.f32.gmra.mrb[0].mxu0 %v2509
        %v2753 = vpop.f32.mrb[0].mxu0
        %v2754 = vadd.f32 0.0, %v2753
        %v2755 = vpop.f32.mrb[0].mxu0
        %2756 = vmatprep.mubr.f32.mxu0 %v2517
        %2757 = vmatmul.mubr.f32.gmra.mrb[0].mxu0 %v2516
        %v2758 = vpop.f32.mrb[0].mxu0
        %v2759 = vadd.f32 0.0, %v2758
        %v2760 = vpop.f32.mrb[0].mxu0
        %2761 = vmatprep.mubr.f32.mxu0 %v2524
        %2762 = vmatmul.mubr.f32.gmra.mrb[0].mxu0 %v2523
        %v2763 = vpop.f32.mrb[0].mxu0
        %v2764 = vadd.f32 0.0, %v2763
        %v2765 = vpop.f32.mrb[0].mxu0
        %2766 = vmatprep.mubr.f32.mxu0 %v2531
        %2767 = vmatmul.mubr.f32.gmra.mrb[0].mxu0 %v2530
        %v2768 = vpop.f32.mrb[0].mxu0
        %v2769 = vadd.f32 0.0, %v2768
        %v2770 = vpop.f32.mrb[0].mxu0
        %2771 = vmatprep.mubr.f32.mxu0 %v2538
        %2772 = vmatmul.mubr.f32.gmra.mrb[0].mxu0 %v2537
        %v2773 = vpop.f32.mrb[0].mxu0
        %v2774 = vadd.f32 0.0, %v2773
        %v2775 = vpop.f32.mrb[0].mxu0
        %2776 = vmatprep.mubr.f32.mxu0 %v2545
        %2777 = vmatmul.mubr.f32.gmra.mrb[0].mxu0 %v2544
        %v2778 = vpop.f32.mrb[0].mxu0
        %v2779 = vadd.f32 0.0, %v2778
        %v2780 = vpop.f32.mrb[0].mxu0
        %2781 = vmatprep.mubr.f32.mxu0 %v2552
        %2782 = vmatmul.mubr.f32.gmra.mrb[0].mxu0 %v2551
        %v2783 = vpop.f32.mrb[0].mxu0
        %v2784 = vadd.f32 0.0, %v2783
        %v2785 = vpop.f32.mrb[0].mxu0
        %2786 = vmatprep.mubr.f32.mxu0 %v2559
        %2787 = vmatmul.mubr.f32.gmra.mrb[0].mxu0 %v2558
        %v2788 = vpop.f32.mrb[0].mxu0
        %v2789 = vadd.f32 0.0, %v2788
        %v2790 = vpop.f32.mrb[0].mxu0
        %2791 = vmatprep.mubr.f32.mxu0 %v2566
        %2792 = vmatmul.mubr.f32.gmra.mrb[0].mxu0 %v2565
        %v2793 = vpop.f32.mrb[0].mxu0
        %v2794 = vadd.f32 0.0, %v2793
        %v2795 = vpop.f32.mrb[0].mxu0
        %2796 = vmatprep.mubr.f32.mxu0 %v2573
        %2797 = vmatmul.mubr.f32.gmra.mrb[0].mxu0 %v2572
        %v2798 = vpop.f32.mrb[0].mxu0
        %v2799 = vadd.f32 0.0, %v2798
        %v2800 = vpop.f32.mrb[0].mxu0
        %2801 = vmatprep.mubr.f32.mxu0 %v2580
        %2802 = vmatmul.mubr.f32.gmra.mrb[0].mxu0 %v2579
        %v2803 = vpop.f32.mrb[0].mxu0
        %v2804 = vadd.f32 0.0, %v2803
        %v2805 = vpop.f32.mrb[0].mxu0
        %2806 = vmatprep.mubr.f32.mxu0 %v2587
        %2807 = vmatmul.mubr.f32.gmra.mrb[0].mxu0 %v2586
        %v2808 = vpop.f32.mrb[0].mxu0
        %v2809 = vadd.f32 0.0, %v2808
        %v2810 = vpop.f32.mrb[0].mxu0
        %2811 = vmatprep.mubr.f32.mxu0 %v2594
        %2812 = vmatmul.mubr.f32.gmra.mrb[0].mxu0 %v2593
        %v2813 = vpop.f32.mrb[0].mxu0
        %v2814 = vadd.f32 0.0, %v2813
        %v2815 = vpop.f32.mrb[0].mxu0
        %2816 = vmatprep.mubr.f32.mxu0 %v2601
        %2817 = vmatmul.mubr.f32.gmra.mrb[0].mxu0 %v2600
        %v2818 = vpop.f32.mrb[0].mxu0
        %v2819 = vadd.f32 0.0, %v2818
        %v2820 = vpop.f32.mrb[0].mxu0
        %2821 = vdwg.mxu0
        %2822 = vmatprep.subr.mxu0 0.0
        %2823 = vmatpush1.msra.mxu0 1.0
        %2824 = vmatprep.subr.mxu0 0.0
        %2825 = vmatpush1.msra.mxu0 1.0
        %2826 = vmatprep.subr.mxu0 0.0
        %2827 = vmatpush1.msra.mxu0 1.0
        %2828 = vmatprep.subr.mxu0 0.0
        %2829 = vmatpush1.msra.mxu0 1.0
        %2830 = vmatprep.subr.mxu0 0.0
        %2831 = vmatpush1.msra.mxu0 1.0
        %2832 = vmatprep.subr.mxu0 0.0
        %2833 = vmatpush1.msra.mxu0 1.0
        %2834 = vmatprep.subr.mxu0 0.0
        %2835 = vmatpush1.msra.mxu0 1.0
        %2836 = vmatprep.subr.mxu0 0.0
        %2837 = vmatpush1.msra.mxu0 1.0
        %2838 = vmatprep.subr.mxu0 0.0
        %2839 = vmatpush1.msra.mxu0 1.0
        %2840 = vmatprep.subr.mxu0 0.0
        %2841 = vmatpush1.msra.mxu0 1.0
        %2842 = vmatprep.subr.mxu0 0.0
        %2843 = vmatpush1.msra.mxu0 1.0
        %2844 = vmatprep.subr.mxu0 0.0
        %2845 = vmatpush1.msra.mxu0 1.0
        %2846 = vmatprep.subr.mxu0 0.0
        %2847 = vmatpush1.msra.mxu0 1.0
        %2848 = vmatprep.subr.mxu0 0.0
        %2849 = vmatpush1.msra.mxu0 1.0
        %2850 = vmatprep.subr.mxu0 0.0
        %2851 = vmatpush1.msra.mxu0 1.0
        %2852 = vmatprep.subr.mxu0 0.0
        %2853 = vmatpush1.msra.mxu0 1.0
        %2854 = vmatprep.subr.mxu0 0.0
        %2855 = vmatpush1.msra.mxu0 1.0
        %2856 = vmatprep.subr.mxu0 0.0
        %2857 = vmatpush1.msra.mxu0 1.0
        %2858 = vmatprep.subr.mxu0 0.0
        %2859 = vmatpush1.msra.mxu0 1.0
        %2860 = vmatprep.subr.mxu0 0.0
        %2861 = vmatpush1.msra.mxu0 1.0
        %2862 = vmatprep.subr.mxu0 0.0
        %2863 = vmatpush1.msra.mxu0 1.0
        %2864 = vmatprep.subr.mxu0 0.0
        %2865 = vmatpush1.msra.mxu0 1.0
        %2866 = vmatprep.subr.mxu0 0.0
        %2867 = vmatpush1.msra.mxu0 1.0
        %2868 = vmatprep.subr.mxu0 0.0
        %2869 = vmatpush1.msra.mxu0 1.0
        %2870 = vmatprep.subr.mxu0 0.0
        %2871 = vmatpush1.msra.mxu0 1.0
        %2872 = vmatprep.subr.mxu0 0.0
        %2873 = vmatpush1.msra.mxu0 1.0
        %2874 = vmatprep.subr.mxu0 0.0
        %2875 = vmatpush1.msra.mxu0 1.0
        %2876 = vmatprep.subr.mxu0 0.0
        %2877 = vmatpush1.msra.mxu0 1.0
        %2878 = vmatprep.subr.mxu0 0.0
        %2879 = vmatpush1.msra.mxu0 1.0
        %2880 = vmatprep.subr.mxu0 0.0
        %2881 = vmatpush1.msra.mxu0 1.0
        %2882 = vmatprep.subr.mxu0 0.0
        %2883 = vmatpush1.msra.mxu0 1.0
        %2884 = vmatprep.subr.mxu0 0.0
        %2885 = vmatpush1.msra.mxu0 1.0
        %2886 = vmatprep.mubr.f32.mxu0 %v2400
        %2887 = vmatmul.mubr.f32.gmra.mrb[0].mxu0 %v2399
        %v2888 = vpop.f32.mrb[0].mxu0
        %v2889 = vadd.f32 %v2674, %v2888
        %v2890 = vpop.f32.mrb[0].mxu0
        %2891 = vmatprep.mubr.f32.mxu0 %v2407
        %2892 = vmatmul.mubr.f32.gmra.mrb[0].mxu0 %v2406
        %v2893 = vpop.f32.mrb[0].mxu0
        %v2894 = vadd.f32 %v2679, %v2893
        %v2895 = vpop.f32.mrb[0].mxu0
        %2896 = vmatprep.mubr.f32.mxu0 %v2414
        %2897 = vmatmul.mubr.f32.gmra.mrb[0].mxu0 %v2413
        %v2898 = vpop.f32.mrb[0].mxu0
        %v2899 = vadd.f32 %v2684, %v2898
        %v2900 = vpop.f32.mrb[0].mxu0
        %2901 = vmatprep.mubr.f32.mxu0 %v2421
        %2902 = vmatmul.mubr.f32.gmra.mrb[0].mxu0 %v2420
        %v2903 = vpop.f32.mrb[0].mxu0
        %v2904 = vadd.f32 %v2689, %v2903
        %v2905 = vpop.f32.mrb[0].mxu0
        %2906 = vmatprep.mubr.f32.mxu0 %v2428
        %2907 = vmatmul.mubr.f32.gmra.mrb[0].mxu0 %v2427
        %v2908 = vpop.f32.mrb[0].mxu0
        %v2909 = vadd.f32 %v2694, %v2908
        %v2910 = vpop.f32.mrb[0].mxu0
        %2911 = vmatprep.mubr.f32.mxu0 %v2435
        %2912 = vmatmul.mubr.f32.gmra.mrb[0].mxu0 %v2434
        %v2913 = vpop.f32.mrb[0].mxu0
        %v2914 = vadd.f32 %v2699, %v2913
        %v2915 = vpop.f32.mrb[0].mxu0
        %2916 = vmatprep.mubr.f32.mxu0 %v2442
        %2917 = vmatmul.mubr.f32.gmra.mrb[0].mxu0 %v2441
        %v2918 = vpop.f32.mrb[0].mxu0
        %v2919 = vadd.f32 %v2704, %v2918
        %v2920 = vpop.f32.mrb[0].mxu0
        %2921 = vmatprep.mubr.f32.mxu0 %v2449
        %2922 = vmatmul.mubr.f32.gmra.mrb[0].mxu0 %v2448
        %v2923 = vpop.f32.mrb[0].mxu0
        %v2924 = vadd.f32 %v2709, %v2923
        %v2925 = vpop.f32.mrb[0].mxu0
        %2926 = vmatprep.mubr.f32.mxu0 %v2456
        %2927 = vmatmul.mubr.f32.gmra.mrb[0].mxu0 %v2455
        %v2928 = vpop.f32.mrb[0].mxu0
        %v2929 = vadd.f32 %v2714, %v2928
        %v2930 = vpop.f32.mrb[0].mxu0
        %2931 = vmatprep.mubr.f32.mxu0 %v2463
        %2932 = vmatmul.mubr.f32.gmra.mrb[0].mxu0 %v2462
        %v2933 = vpop.f32.mrb[0].mxu0
        %v2934 = vadd.f32 %v2719, %v2933
        %v2935 = vpop.f32.mrb[0].mxu0
        %2936 = vmatprep.mubr.f32.mxu0 %v2470
        %2937 = vmatmul.mubr.f32.gmra.mrb[0].mxu0 %v2469
        %v2938 = vpop.f32.mrb[0].mxu0
        %v2939 = vadd.f32 %v2724, %v2938
        %v2940 = vpop.f32.mrb[0].mxu0
        %2941 = vmatprep.mubr.f32.mxu0 %v2477
        %2942 = vmatmul.mubr.f32.gmra.mrb[0].mxu0 %v2476
        %v2943 = vpop.f32.mrb[0].mxu0
        %v2944 = vadd.f32 %v2729, %v2943
        %v2945 = vpop.f32.mrb[0].mxu0
        %2946 = vmatprep.mubr.f32.mxu0 %v2484
        %2947 = vmatmul.mubr.f32.gmra.mrb[0].mxu0 %v2483
        %v2948 = vpop.f32.mrb[0].mxu0
        %v2949 = vadd.f32 %v2734, %v2948
        %v2950 = vpop.f32.mrb[0].mxu0
        %2951 = vmatprep.mubr.f32.mxu0 %v2491
        %2952 = vmatmul.mubr.f32.gmra.mrb[0].mxu0 %v2490
        %v2953 = vpop.f32.mrb[0].mxu0
        %v2954 = vadd.f32 %v2739, %v2953
        %v2955 = vpop.f32.mrb[0].mxu0
        %2956 = vmatprep.mubr.f32.mxu0 %v2498
        %2957 = vmatmul.mubr.f32.gmra.mrb[0].mxu0 %v2497
        %v2958 = vpop.f32.mrb[0].mxu0
        %v2959 = vadd.f32 %v2744, %v2958
        %v2960 = vpop.f32.mrb[0].mxu0
        %2961 = vmatprep.mubr.f32.mxu0 %v2505
        %2962 = vmatmul.mubr.f32.gmra.mrb[0].mxu0 %v2504
        %v2963 = vpop.f32.mrb[0].mxu0
        %v2964 = vadd.f32 %v2749, %v2963
        %v2965 = vpop.f32.mrb[0].mxu0
        %2966 = vmatprep.mubr.f32.mxu0 %v2512
        %2967 = vmatmul.mubr.f32.gmra.mrb[0].mxu0 %v2511
        %v2968 = vpop.f32.mrb[0].mxu0
        %v2969 = vadd.f32 %v2754, %v2968
        %v2970 = vpop.f32.mrb[0].mxu0
        %2971 = vmatprep.mubr.f32.mxu0 %v2519
        %2972 = vmatmul.mubr.f32.gmra.mrb[0].mxu0 %v2518
        %v2973 = vpop.f32.mrb[0].mxu0
        %v2974 = vadd.f32 %v2759, %v2973
        %v2975 = vpop.f32.mrb[0].mxu0
        %2976 = vmatprep.mubr.f32.mxu0 %v2526
        %2977 = vmatmul.mubr.f32.gmra.mrb[0].mxu0 %v2525
        %v2978 = vpop.f32.mrb[0].mxu0
        %v2979 = vadd.f32 %v2764, %v2978
        %v2980 = vpop.f32.mrb[0].mxu0
        %2981 = vmatprep.mubr.f32.mxu0 %v2533
        %2982 = vmatmul.mubr.f32.gmra.mrb[0].mxu0 %v2532
        %v2983 = vpop.f32.mrb[0].mxu0
        %v2984 = vadd.f32 %v2769, %v2983
        %v2985 = vpop.f32.mrb[0].mxu0
        %2986 = vmatprep.mubr.f32.mxu0 %v2540
        %2987 = vmatmul.mubr.f32.gmra.mrb[0].mxu0 %v2539
        %v2988 = vpop.f32.mrb[0].mxu0
        %v2989 = vadd.f32 %v2774, %v2988
        %v2990 = vpop.f32.mrb[0].mxu0
        %2991 = vmatprep.mubr.f32.mxu0 %v2547
        %2992 = vmatmul.mubr.f32.gmra.mrb[0].mxu0 %v2546
        %v2993 = vpop.f32.mrb[0].mxu0
        %v2994 = vadd.f32 %v2779, %v2993
        %v2995 = vpop.f32.mrb[0].mxu0
        %2996 = vmatprep.mubr.f32.mxu0 %v2554
        %2997 = vmatmul.mubr.f32.gmra.mrb[0].mxu0 %v2553
        %v2998 = vpop.f32.mrb[0].mxu0
        %v2999 = vadd.f32 %v2784, %v2998
        %v3000 = vpop.f32.mrb[0].mxu0
        %3001 = vmatprep.mubr.f32.mxu0 %v2561
        %3002 = vmatmul.mubr.f32.gmra.mrb[0].mxu0 %v2560
        %v3003 = vpop.f32.mrb[0].mxu0
        %v3004 = vadd.f32 %v2789, %v3003
        %v3005 = vpop.f32.mrb[0].mxu0
        %3006 = vmatprep.mubr.f32.mxu0 %v2568
        %3007 = vmatmul.mubr.f32.gmra.mrb[0].mxu0 %v2567
        %v3008 = vpop.f32.mrb[0].mxu0
        %v3009 = vadd.f32 %v2794, %v3008
        %v3010 = vpop.f32.mrb[0].mxu0
        %3011 = vmatprep.mubr.f32.mxu0 %v2575
        %3012 = vmatmul.mubr.f32.gmra.mrb[0].mxu0 %v2574
        %v3013 = vpop.f32.mrb[0].mxu0
        %v3014 = vadd.f32 %v2799, %v3013
        %v3015 = vpop.f32.mrb[0].mxu0
        %3016 = vmatprep.mubr.f32.mxu0 %v2582
        %3017 = vmatmul.mubr.f32.gmra.mrb[0].mxu0 %v2581
        %v3018 = vpop.f32.mrb[0].mxu0
        %v3019 = vadd.f32 %v2804, %v3018
        %v3020 = vpop.f32.mrb[0].mxu0
        %3021 = vmatprep.mubr.f32.mxu0 %v2589
        %3022 = vmatmul.mubr.f32.gmra.mrb[0].mxu0 %v2588
        %v3023 = vpop.f32.mrb[0].mxu0
        %v3024 = vadd.f32 %v2809, %v3023
        %v3025 = vpop.f32.mrb[0].mxu0
        %3026 = vmatprep.mubr.f32.mxu0 %v2596
        %3027 = vmatmul.mubr.f32.gmra.mrb[0].mxu0 %v2595
        %v3028 = vpop.f32.mrb[0].mxu0
        %v3029 = vadd.f32 %v2814, %v3028
        %v3030 = vpop.f32.mrb[0].mxu0
        %3031 = vmatprep.mubr.f32.mxu0 %v2603
        %3032 = vmatmul.mubr.f32.gmra.mrb[0].mxu0 %v2602
        %v3033 = vpop.f32.mrb[0].mxu0
        %v3034 = vadd.f32 %v2819, %v3033
        %v3035 = vpop.f32.mrb[0].mxu0
        %3036 = vdwg.mxu0
        %3037 = vmatprep.subr.mxu0 0.0
        %3038 = vmatpush1.msra.mxu0 1.0
        %3039 = vmatprep.subr.mxu0 0.0
        %3040 = vmatpush1.msra.mxu0 1.0
        %3041 = vmatprep.subr.mxu0 0.0
        %3042 = vmatpush1.msra.mxu0 1.0
        %3043 = vmatprep.subr.mxu0 0.0
        %3044 = vmatpush1.msra.mxu0 1.0
        %3045 = vmatprep.subr.mxu0 0.0
        %3046 = vmatpush1.msra.mxu0 1.0
        %3047 = vmatprep.subr.mxu0 0.0
        %3048 = vmatpush1.msra.mxu0 1.0
        %3049 = vmatprep.subr.mxu0 0.0
        %3050 = vmatpush1.msra.mxu0 1.0
        %3051 = vmatprep.subr.mxu0 0.0
        %3052 = vmatpush1.msra.mxu0 1.0
        %3053 = vmatprep.subr.mxu0 0.0
        %3054 = vmatpush1.msra.mxu0 1.0
        %3055 = vmatprep.subr.mxu0 0.0
        %3056 = vmatpush1.msra.mxu0 1.0
        %3057 = vmatprep.subr.mxu0 0.0
        %3058 = vmatpush1.msra.mxu0 1.0
        %3059 = vmatprep.subr.mxu0 0.0
        %3060 = vmatpush1.msra.mxu0 1.0
        %3061 = vmatprep.subr.mxu0 0.0
        %3062 = vmatpush1.msra.mxu0 1.0
        %3063 = vmatprep.subr.mxu0 0.0
        %3064 = vmatpush1.msra.mxu0 1.0
        %3065 = vmatprep.subr.mxu0 0.0
        %3066 = vmatpush1.msra.mxu0 1.0
        %3067 = vmatprep.subr.mxu0 0.0
        %3068 = vmatpush1.msra.mxu0 1.0
        %3069 = vmatprep.subr.mxu0 0.0
        %3070 = vmatpush1.msra.mxu0 1.0
        %3071 = vmatprep.subr.mxu0 0.0
        %3072 = vmatpush1.msra.mxu0 1.0
        %3073 = vmatprep.subr.mxu0 0.0
        %3074 = vmatpush1.msra.mxu0 1.0
        %3075 = vmatprep.subr.mxu0 0.0
        %3076 = vmatpush1.msra.mxu0 1.0
        %3077 = vmatprep.subr.mxu0 0.0
        %3078 = vmatpush1.msra.mxu0 1.0
        %3079 = vmatprep.subr.mxu0 0.0
        %3080 = vmatpush1.msra.mxu0 1.0
        %3081 = vmatprep.subr.mxu0 0.0
        %3082 = vmatpush1.msra.mxu0 1.0
        %3083 = vmatprep.subr.mxu0 0.0
        %3084 = vmatpush1.msra.mxu0 1.0
        %3085 = vmatprep.subr.mxu0 0.0
        %3086 = vmatpush1.msra.mxu0 1.0
        %3087 = vmatprep.subr.mxu0 0.0
        %3088 = vmatpush1.msra.mxu0 1.0
        %3089 = vmatprep.subr.mxu0 0.0
        %3090 = vmatpush1.msra.mxu0 1.0
        %3091 = vmatprep.subr.mxu0 0.0
        %3092 = vmatpush1.msra.mxu0 1.0
        %3093 = vmatprep.subr.mxu0 0.0
        %3094 = vmatpush1.msra.mxu0 1.0
        %3095 = vmatprep.subr.mxu0 0.0
        %3096 = vmatpush1.msra.mxu0 1.0
        %3097 = vmatprep.subr.mxu0 0.0
        %3098 = vmatpush1.msra.mxu0 1.0
        %3099 = vmatprep.subr.mxu0 0.0
        %3100 = vmatpush1.msra.mxu0 1.0
        %3101 = vmatprep.mubr.f32.mxu0 %v2402
        %3102 = vmatmul.mubr.f32.gmra.mrb[0].mxu0 %v2401
        %v3103 = vpop.f32.mrb[0].mxu0
        %v3104 = vadd.f32 %v2889, %v3103
        %v3105 = vpop.f32.mrb[0].mxu0
        %3106 = vmatprep.mubr.f32.mxu0 %v2409
        %3107 = vmatmul.mubr.f32.gmra.mrb[0].mxu0 %v2408
        %v3108 = vpop.f32.mrb[0].mxu0
        %v3109 = vadd.f32 %v2894, %v3108
        %v3110 = vpop.f32.mrb[0].mxu0
        %3111 = vmatprep.mubr.f32.mxu0 %v2416
        %3112 = vmatmul.mubr.f32.gmra.mrb[0].mxu0 %v2415
        %v3113 = vpop.f32.mrb[0].mxu0
        %v3114 = vadd.f32 %v2899, %v3113
        %v3115 = vpop.f32.mrb[0].mxu0
        %3116 = vmatprep.mubr.f32.mxu0 %v2423
        %3117 = vmatmul.mubr.f32.gmra.mrb[0].mxu0 %v2422
        %v3118 = vpop.f32.mrb[0].mxu0
        %v3119 = vadd.f32 %v2904, %v3118
        %v3120 = vpop.f32.mrb[0].mxu0
        %3121 = vmatprep.mubr.f32.mxu0 %v2430
        %3122 = vmatmul.mubr.f32.gmra.mrb[0].mxu0 %v2429
        %v3123 = vpop.f32.mrb[0].mxu0
        %v3124 = vadd.f32 %v2909, %v3123
        %v3125 = vpop.f32.mrb[0].mxu0
        %3126 = vmatprep.mubr.f32.mxu0 %v2437
        %3127 = vmatmul.mubr.f32.gmra.mrb[0].mxu0 %v2436
        %v3128 = vpop.f32.mrb[0].mxu0
        %v3129 = vadd.f32 %v2914, %v3128
        %v3130 = vpop.f32.mrb[0].mxu0
        %3131 = vmatprep.mubr.f32.mxu0 %v2444
        %3132 = vmatmul.mubr.f32.gmra.mrb[0].mxu0 %v2443
        %v3133 = vpop.f32.mrb[0].mxu0
        %v3134 = vadd.f32 %v2919, %v3133
        %v3135 = vpop.f32.mrb[0].mxu0
        %3136 = vmatprep.mubr.f32.mxu0 %v2451
        %3137 = vmatmul.mubr.f32.gmra.mrb[0].mxu0 %v2450
        %v3138 = vpop.f32.mrb[0].mxu0
        %v3139 = vadd.f32 %v2924, %v3138
        %v3140 = vpop.f32.mrb[0].mxu0
        %3141 = vmatprep.mubr.f32.mxu0 %v2458
        %3142 = vmatmul.mubr.f32.gmra.mrb[0].mxu0 %v2457
        %v3143 = vpop.f32.mrb[0].mxu0
        %v3144 = vadd.f32 %v2929, %v3143
        %v3145 = vpop.f32.mrb[0].mxu0
        %3146 = vmatprep.mubr.f32.mxu0 %v2465
        %3147 = vmatmul.mubr.f32.gmra.mrb[0].mxu0 %v2464
        %v3148 = vpop.f32.mrb[0].mxu0
        %v3149 = vadd.f32 %v2934, %v3148
        %v3150 = vpop.f32.mrb[0].mxu0
        %3151 = vmatprep.mubr.f32.mxu0 %v2472
        %3152 = vmatmul.mubr.f32.gmra.mrb[0].mxu0 %v2471
        %v3153 = vpop.f32.mrb[0].mxu0
        %v3154 = vadd.f32 %v2939, %v3153
        %v3155 = vpop.f32.mrb[0].mxu0
        %3156 = vmatprep.mubr.f32.mxu0 %v2479
        %3157 = vmatmul.mubr.f32.gmra.mrb[0].mxu0 %v2478
        %v3158 = vpop.f32.mrb[0].mxu0
        %v3159 = vadd.f32 %v2944, %v3158
        %v3160 = vpop.f32.mrb[0].mxu0
        %3161 = vmatprep.mubr.f32.mxu0 %v2486
        %3162 = vmatmul.mubr.f32.gmra.mrb[0].mxu0 %v2485
        %v3163 = vpop.f32.mrb[0].mxu0
        %v3164 = vadd.f32 %v2949, %v3163
        %v3165 = vpop.f32.mrb[0].mxu0
        %3166 = vmatprep.mubr.f32.mxu0 %v2493
        %3167 = vmatmul.mubr.f32.gmra.mrb[0].mxu0 %v2492
        %v3168 = vpop.f32.mrb[0].mxu0
        %v3169 = vadd.f32 %v2954, %v3168
        %v3170 = vpop.f32.mrb[0].mxu0
        %3171 = vmatprep.mubr.f32.mxu0 %v2500
        %3172 = vmatmul.mubr.f32.gmra.mrb[0].mxu0 %v2499
        %v3173 = vpop.f32.mrb[0].mxu0
        %v3174 = vadd.f32 %v2959, %v3173
        %v3175 = vpop.f32.mrb[0].mxu0
        %3176 = vmatprep.mubr.f32.mxu0 %v2507
        %3177 = vmatmul.mubr.f32.gmra.mrb[0].mxu0 %v2506
        %v3178 = vpop.f32.mrb[0].mxu0
        %v3179 = vadd.f32 %v2964, %v3178
        %v3180 = vpop.f32.mrb[0].mxu0
        %3181 = vmatprep.mubr.f32.mxu0 %v2514
        %3182 = vmatmul.mubr.f32.gmra.mrb[0].mxu0 %v2513
        %v3183 = vpop.f32.mrb[0].mxu0
        %v3184 = vadd.f32 %v2969, %v3183
        %v3185 = vpop.f32.mrb[0].mxu0
        %3186 = vmatprep.mubr.f32.mxu0 %v2521
        %3187 = vmatmul.mubr.f32.gmra.mrb[0].mxu0 %v2520
        %v3188 = vpop.f32.mrb[0].mxu0
        %v3189 = vadd.f32 %v2974, %v3188
        %v3190 = vpop.f32.mrb[0].mxu0
        %3191 = vmatprep.mubr.f32.mxu0 %v2528
        %3192 = vmatmul.mubr.f32.gmra.mrb[0].mxu0 %v2527
        %v3193 = vpop.f32.mrb[0].mxu0
        %v3194 = vadd.f32 %v2979, %v3193
        %v3195 = vpop.f32.mrb[0].mxu0
        %3196 = vmatprep.mubr.f32.mxu0 %v2535
        %3197 = vmatmul.mubr.f32.gmra.mrb[0].mxu0 %v2534
        %v3198 = vpop.f32.mrb[0].mxu0
        %v3199 = vadd.f32 %v2984, %v3198
        %v3200 = vpop.f32.mrb[0].mxu0
        %3201 = vmatprep.mubr.f32.mxu0 %v2542
        %3202 = vmatmul.mubr.f32.gmra.mrb[0].mxu0 %v2541
        %v3203 = vpop.f32.mrb[0].mxu0
        %v3204 = vadd.f32 %v2989, %v3203
        %v3205 = vpop.f32.mrb[0].mxu0
        %3206 = vmatprep.mubr.f32.mxu0 %v2549
        %3207 = vmatmul.mubr.f32.gmra.mrb[0].mxu0 %v2548
        %v3208 = vpop.f32.mrb[0].mxu0
        %v3209 = vadd.f32 %v2994, %v3208
        %v3210 = vpop.f32.mrb[0].mxu0
        %3211 = vmatprep.mubr.f32.mxu0 %v2556
        %3212 = vmatmul.mubr.f32.gmra.mrb[0].mxu0 %v2555
        %v3213 = vpop.f32.mrb[0].mxu0
        %v3214 = vadd.f32 %v2999, %v3213
        %v3215 = vpop.f32.mrb[0].mxu0
        %3216 = vmatprep.mubr.f32.mxu0 %v2563
        %3217 = vmatmul.mubr.f32.gmra.mrb[0].mxu0 %v2562
        %v3218 = vpop.f32.mrb[0].mxu0
        %v3219 = vadd.f32 %v3004, %v3218
        %v3220 = vpop.f32.mrb[0].mxu0
        %3221 = vmatprep.mubr.f32.mxu0 %v2570
        %3222 = vmatmul.mubr.f32.gmra.mrb[0].mxu0 %v2569
        %v3223 = vpop.f32.mrb[0].mxu0
        %v3224 = vadd.f32 %v3009, %v3223
        %v3225 = vpop.f32.mrb[0].mxu0
        %3226 = vmatprep.mubr.f32.mxu0 %v2577
        %3227 = vmatmul.mubr.f32.gmra.mrb[0].mxu0 %v2576
        %v3228 = vpop.f32.mrb[0].mxu0
        %v3229 = vadd.f32 %v3014, %v3228
        %v3230 = vpop.f32.mrb[0].mxu0
        %3231 = vmatprep.mubr.f32.mxu0 %v2584
        %3232 = vmatmul.mubr.f32.gmra.mrb[0].mxu0 %v2583
        %v3233 = vpop.f32.mrb[0].mxu0
        %v3234 = vadd.f32 %v3019, %v3233
        %v3235 = vpop.f32.mrb[0].mxu0
        %3236 = vmatprep.mubr.f32.mxu0 %v2591
        %3237 = vmatmul.mubr.f32.gmra.mrb[0].mxu0 %v2590
        %v3238 = vpop.f32.mrb[0].mxu0
        %v3239 = vadd.f32 %v3024, %v3238
        %v3240 = vpop.f32.mrb[0].mxu0
        %3241 = vmatprep.mubr.f32.mxu0 %v2598
        %3242 = vmatmul.mubr.f32.gmra.mrb[0].mxu0 %v2597
        %v3243 = vpop.f32.mrb[0].mxu0
        %v3244 = vadd.f32 %v3029, %v3243
        %v3245 = vpop.f32.mrb[0].mxu0
        %3246 = vmatprep.mubr.f32.mxu0 %v2605
        %3247 = vmatmul.mubr.f32.gmra.mrb[0].mxu0 %v2604
        %v3248 = vpop.f32.mrb[0].mxu0
        %v3249 = vadd.f32 %v3034, %v3248
        %v3250 = vpop.f32.mrb[0].mxu0
        %3251 = vdwg.mxu0
        %3252 = vmatprep.subr.mxu0 0.0
        %3253 = vmatpush1.msra.mxu0 1.0
        %3254 = vmatprep.subr.mxu0 0.0
        %3255 = vmatpush1.msra.mxu0 1.0
        %3256 = vmatprep.subr.mxu0 0.0
        %3257 = vmatpush1.msra.mxu0 1.0
        %3258 = vmatprep.subr.mxu0 0.0
        %3259 = vmatpush1.msra.mxu0 1.0
        %3260 = vmatprep.subr.mxu0 0.0
        %3261 = vmatpush1.msra.mxu0 1.0
        %3262 = vmatprep.subr.mxu0 0.0
        %3263 = vmatpush1.msra.mxu0 1.0
        %3264 = vmatprep.subr.mxu0 0.0
        %3265 = vmatpush1.msra.mxu0 1.0
        %3266 = vmatprep.subr.mxu0 0.0
        %3267 = vmatpush1.msra.mxu0 1.0
        %3268 = vmatprep.subr.mxu0 0.0
        %3269 = vmatpush1.msra.mxu0 1.0
        %3270 = vmatprep.subr.mxu0 0.0
        %3271 = vmatpush1.msra.mxu0 1.0
        %3272 = vmatprep.subr.mxu0 0.0
        %3273 = vmatpush1.msra.mxu0 1.0
        %3274 = vmatprep.subr.mxu0 0.0
        %3275 = vmatpush1.msra.mxu0 1.0
        %3276 = vmatprep.subr.mxu0 0.0
        %3277 = vmatpush1.msra.mxu0 1.0
        %3278 = vmatprep.subr.mxu0 0.0
        %3279 = vmatpush1.msra.mxu0 1.0
        %3280 = vmatprep.subr.mxu0 0.0
        %3281 = vmatpush1.msra.mxu0 1.0
        %3282 = vmatprep.subr.mxu0 0.0
        %3283 = vmatpush1.msra.mxu0 1.0
        %3284 = vmatprep.subr.mxu0 0.0
        %3285 = vmatpush1.msra.mxu0 0.0
        %3286 = vmatprep.subr.mxu0 0.0
        %3287 = vmatpush1.msra.mxu0 0.0
        %3288 = vmatprep.subr.mxu0 0.0
        %3289 = vmatpush1.msra.mxu0 0.0
        %3290 = vmatprep.subr.mxu0 0.0
        %3291 = vmatpush1.msra.mxu0 0.0
        %3292 = vmatprep.subr.mxu0 0.0
        %3293 = vmatpush1.msra.mxu0 0.0
        %3294 = vmatprep.subr.mxu0 0.0
        %3295 = vmatpush1.msra.mxu0 0.0
        %3296 = vmatprep.subr.mxu0 0.0
        %3297 = vmatpush1.msra.mxu0 0.0
        %3298 = vmatprep.subr.mxu0 0.0
        %3299 = vmatpush1.msra.mxu0 0.0
        %3300 = vmatprep.subr.mxu0 0.0
        %3301 = vmatpush1.msra.mxu0 0.0
        %3302 = vmatprep.subr.mxu0 0.0
        %3303 = vmatpush1.msra.mxu0 0.0
        %3304 = vmatprep.subr.mxu0 0.0
        %3305 = vmatpush1.msra.mxu0 0.0
        %3306 = vmatprep.subr.mxu0 0.0
        %3307 = vmatpush1.msra.mxu0 0.0
        %3308 = vmatprep.subr.mxu0 0.0
        %3309 = vmatpush1.msra.mxu0 0.0
        %3310 = vmatprep.subr.mxu0 0.0
        %3311 = vmatpush1.msra.mxu0 0.0
        %3312 = vmatprep.subr.mxu0 0.0
        %3313 = vmatpush1.msra.mxu0 0.0
        %3314 = vmatprep.subr.mxu0 0.0
        %3315 = vmatpush1.msra.mxu0 0.0
        %3316 = vmatprep.mubr.f32.mxu0 0.0
        %3317 = vmatmul.mubr.f32.gmra.mrb[0].mxu0 %v2403
        %v3318 = vpop.f32.mrb[0].mxu0
        %v3319 = vadd.f32 %v3104, %v3318
        %v3320 = vpop.f32.mrb[0].mxu0
        %3321 = vmatprep.mubr.f32.mxu0 0.0
        %3322 = vmatmul.mubr.f32.gmra.mrb[0].mxu0 %v2410
        %v3323 = vpop.f32.mrb[0].mxu0
        %v3324 = vadd.f32 %v3109, %v3323
        %v3325 = vpop.f32.mrb[0].mxu0
        %3326 = vmatprep.mubr.f32.mxu0 0.0
        %3327 = vmatmul.mubr.f32.gmra.mrb[0].mxu0 %v2417
        %v3328 = vpop.f32.mrb[0].mxu0
        %v3329 = vadd.f32 %v3114, %v3328
        %v3330 = vpop.f32.mrb[0].mxu0
        %3331 = vmatprep.mubr.f32.mxu0 0.0
        %3332 = vmatmul.mubr.f32.gmra.mrb[0].mxu0 %v2424
        %v3333 = vpop.f32.mrb[0].mxu0
        %v3334 = vadd.f32 %v3119, %v3333
        %v3335 = vpop.f32.mrb[0].mxu0
        %3336 = vmatprep.mubr.f32.mxu0 0.0
        %3337 = vmatmul.mubr.f32.gmra.mrb[0].mxu0 %v2431
        %v3338 = vpop.f32.mrb[0].mxu0
        %v3339 = vadd.f32 %v3124, %v3338
        %v3340 = vpop.f32.mrb[0].mxu0
        %3341 = vmatprep.mubr.f32.mxu0 0.0
        %3342 = vmatmul.mubr.f32.gmra.mrb[0].mxu0 %v2438
        %v3343 = vpop.f32.mrb[0].mxu0
        %v3344 = vadd.f32 %v3129, %v3343
        %v3345 = vpop.f32.mrb[0].mxu0
        %3346 = vmatprep.mubr.f32.mxu0 0.0
        %3347 = vmatmul.mubr.f32.gmra.mrb[0].mxu0 %v2445
        %v3348 = vpop.f32.mrb[0].mxu0
        %v3349 = vadd.f32 %v3134, %v3348
        %v3350 = vpop.f32.mrb[0].mxu0
        %3351 = vmatprep.mubr.f32.mxu0 0.0
        %3352 = vmatmul.mubr.f32.gmra.mrb[0].mxu0 %v2452
        %v3353 = vpop.f32.mrb[0].mxu0
        %v3354 = vadd.f32 %v3139, %v3353
        %v3355 = vpop.f32.mrb[0].mxu0
        %3356 = vmatprep.mubr.f32.mxu0 0.0
        %3357 = vmatmul.mubr.f32.gmra.mrb[0].mxu0 %v2459
        %v3358 = vpop.f32.mrb[0].mxu0
        %v3359 = vadd.f32 %v3144, %v3358
        %v3360 = vpop.f32.mrb[0].mxu0
        %3361 = vmatprep.mubr.f32.mxu0 0.0
        %3362 = vmatmul.mubr.f32.gmra.mrb[0].mxu0 %v2466
        %v3363 = vpop.f32.mrb[0].mxu0
        %v3364 = vadd.f32 %v3149, %v3363
        %v3365 = vpop.f32.mrb[0].mxu0
        %3366 = vmatprep.mubr.f32.mxu0 0.0
        %3367 = vmatmul.mubr.f32.gmra.mrb[0].mxu0 %v2473
        %v3368 = vpop.f32.mrb[0].mxu0
        %v3369 = vadd.f32 %v3154, %v3368
        %v3370 = vpop.f32.mrb[0].mxu0
        %3371 = vmatprep.mubr.f32.mxu0 0.0
        %3372 = vmatmul.mubr.f32.gmra.mrb[0].mxu0 %v2480
        %v3373 = vpop.f32.mrb[0].mxu0
        %v3374 = vadd.f32 %v3159, %v3373
        %v3375 = vpop.f32.mrb[0].mxu0
        %3376 = vmatprep.mubr.f32.mxu0 0.0
        %3377 = vmatmul.mubr.f32.gmra.mrb[0].mxu0 %v2487
        %v3378 = vpop.f32.mrb[0].mxu0
        %v3379 = vadd.f32 %v3164, %v3378
        %v3380 = vpop.f32.mrb[0].mxu0
        %3381 = vmatprep.mubr.f32.mxu0 0.0
        %3382 = vmatmul.mubr.f32.gmra.mrb[0].mxu0 %v2494
        %v3383 = vpop.f32.mrb[0].mxu0
        %v3384 = vadd.f32 %v3169, %v3383
        %v3385 = vpop.f32.mrb[0].mxu0
        %3386 = vmatprep.mubr.f32.mxu0 0.0
        %3387 = vmatmul.mubr.f32.gmra.mrb[0].mxu0 %v2501
        %v3388 = vpop.f32.mrb[0].mxu0
        %v3389 = vadd.f32 %v3174, %v3388
        %v3390 = vpop.f32.mrb[0].mxu0
        %3391 = vmatprep.mubr.f32.mxu0 0.0
        %3392 = vmatmul.mubr.f32.gmra.mrb[0].mxu0 %v2508
        %v3393 = vpop.f32.mrb[0].mxu0
        %v3394 = vadd.f32 %v3179, %v3393
        %v3395 = vpop.f32.mrb[0].mxu0
        %3396 = vmatprep.mubr.f32.mxu0 0.0
        %3397 = vmatmul.mubr.f32.gmra.mrb[0].mxu0 %v2515
        %v3398 = vpop.f32.mrb[0].mxu0
        %v3399 = vadd.f32 %v3184, %v3398
        %v3400 = vpop.f32.mrb[0].mxu0
        %3401 = vmatprep.mubr.f32.mxu0 0.0
        %3402 = vmatmul.mubr.f32.gmra.mrb[0].mxu0 %v2522
        %v3403 = vpop.f32.mrb[0].mxu0
        %v3404 = vadd.f32 %v3189, %v3403
        %v3405 = vpop.f32.mrb[0].mxu0
        %3406 = vmatprep.mubr.f32.mxu0 0.0
        %3407 = vmatmul.mubr.f32.gmra.mrb[0].mxu0 %v2529
        %v3408 = vpop.f32.mrb[0].mxu0
        %v3409 = vadd.f32 %v3194, %v3408
        %v3410 = vpop.f32.mrb[0].mxu0
        %3411 = vmatprep.mubr.f32.mxu0 0.0
        %3412 = vmatmul.mubr.f32.gmra.mrb[0].mxu0 %v2536
        %v3413 = vpop.f32.mrb[0].mxu0
        %v3414 = vadd.f32 %v3199, %v3413
        %v3415 = vpop.f32.mrb[0].mxu0
        %3416 = vmatprep.mubr.f32.mxu0 0.0
        %3417 = vmatmul.mubr.f32.gmra.mrb[0].mxu0 %v2543
        %v3418 = vpop.f32.mrb[0].mxu0
        %v3419 = vadd.f32 %v3204, %v3418
        %v3420 = vpop.f32.mrb[0].mxu0
        %3421 = vmatprep.mubr.f32.mxu0 0.0
        %3422 = vmatmul.mubr.f32.gmra.mrb[0].mxu0 %v2550
        %v3423 = vpop.f32.mrb[0].mxu0
        %v3424 = vadd.f32 %v3209, %v3423
        %v3425 = vpop.f32.mrb[0].mxu0
        %3426 = vmatprep.mubr.f32.mxu0 0.0
        %3427 = vmatmul.mubr.f32.gmra.mrb[0].mxu0 %v2557
        %v3428 = vpop.f32.mrb[0].mxu0
        %v3429 = vadd.f32 %v3214, %v3428
        %v3430 = vpop.f32.mrb[0].mxu0
        %3431 = vmatprep.mubr.f32.mxu0 0.0
        %3432 = vmatmul.mubr.f32.gmra.mrb[0].mxu0 %v2564
        %v3433 = vpop.f32.mrb[0].mxu0
        %v3434 = vadd.f32 %v3219, %v3433
        %v3435 = vpop.f32.mrb[0].mxu0
        %3436 = vmatprep.mubr.f32.mxu0 0.0
        %3437 = vmatmul.mubr.f32.gmra.mrb[0].mxu0 %v2571
        %v3438 = vpop.f32.mrb[0].mxu0
        %v3439 = vadd.f32 %v3224, %v3438
        %v3440 = vpop.f32.mrb[0].mxu0
        %3441 = vmatprep.mubr.f32.mxu0 0.0
        %3442 = vmatmul.mubr.f32.gmra.mrb[0].mxu0 %v2578
        %v3443 = vpop.f32.mrb[0].mxu0
        %v3444 = vadd.f32 %v3229, %v3443
        %v3445 = vpop.f32.mrb[0].mxu0
        %3446 = vmatprep.mubr.f32.mxu0 0.0
        %3447 = vmatmul.mubr.f32.gmra.mrb[0].mxu0 %v2585
        %v3448 = vpop.f32.mrb[0].mxu0
        %v3449 = vadd.f32 %v3234, %v3448
        %v3450 = vpop.f32.mrb[0].mxu0
        %3451 = vmatprep.mubr.f32.mxu0 0.0
        %3452 = vmatmul.mubr.f32.gmra.mrb[0].mxu0 %v2592
        %v3453 = vpop.f32.mrb[0].mxu0
        %v3454 = vadd.f32 %v3239, %v3453
        %v3455 = vpop.f32.mrb[0].mxu0
        %3456 = vmatprep.mubr.f32.mxu0 0.0
        %3457 = vmatmul.mubr.f32.gmra.mrb[0].mxu0 %v2599
        %v3458 = vpop.f32.mrb[0].mxu0
        %v3459 = vadd.f32 %v3244, %v3458
        %v3460 = vpop.f32.mrb[0].mxu0
        %3461 = vmatprep.mubr.f32.mxu0 0.0
        %3462 = vmatmul.mubr.f32.gmra.mrb[0].mxu0 %v2606
        %v3463 = vpop.f32.mrb[0].mxu0
        %v3464 = vadd.f32 %v3249, %v3463
        %v3465 = vpop.f32.mrb[0].mxu0
        %3466 = vdwg.mxu0
        %v3467 = vmul.f32 %v2249, 0.0012755102
        %v3468 = vmul.f32 %v2254, 0.0012755102
        %v3469 = vmul.f32 %v2259, 0.0012755102
        %v3470 = vmul.f32 %v2264, 0.0012755102
        %v3471 = vmul.f32 %v2269, 0.0012755102
        %v3472 = vmul.f32 %v2274, 0.0012755102
        %v3473 = vmul.f32 %v2279, 0.0012755102
        %v3474 = vmul.f32 %v2284, 0.0012755102
        %v3475 = vmul.f32 %v2289, 0.0012755102
        %v3476 = vmul.f32 %v2294, 0.0012755102
        %v3477 = vmul.f32 %v2299, 0.0012755102
        %v3478 = vmul.f32 %v2304, 0.0012755102
        %v3479 = vmul.f32 %v2309, 0.0012755102
        %v3480 = vmul.f32 %v2314, 0.0012755102
        %v3481 = vmul.f32 %v2319, 0.0012755102
        %v3482 = vmul.f32 %v2324, 0.0012755102
        %v3483 = vmul.f32 %v2329, 0.0012755102
        %v3484 = vmul.f32 %v2334, 0.0012755102
        %v3485 = vmul.f32 %v2339, 0.0012755102
        %v3486 = vmul.f32 %v2344, 0.0012755102
        %v3487 = vmul.f32 %v2349, 0.0012755102
        %v3488 = vmul.f32 %v2354, 0.0012755102
        %v3489 = vmul.f32 %v2359, 0.0012755102
        %v3490 = vmul.f32 %v2364, 0.0012755102
        %v3491 = vmul.f32 %v2369, 0.0012755102
        %v3492 = vmul.f32 %v2374, 0.0012755102
        %v3493 = vmul.f32 %v2379, 0.0012755102
        %v3494 = vmul.f32 %v2384, 0.0012755102
        %v3495 = vmul.f32 %v2389, 0.0012755102
        %v3496 = vmul.f32 %v2394, 0.0012755102
        %v3497 = vmul.f32 %v3319, 0.0012755102
        %v3498 = vmul.f32 %v3324, 0.0012755102
        %v3499 = vmul.f32 %v3329, 0.0012755102
        %v3500 = vmul.f32 %v3334, 0.0012755102
        %v3501 = vmul.f32 %v3339, 0.0012755102
        %v3502 = vmul.f32 %v3344, 0.0012755102
        %v3503 = vmul.f32 %v3349, 0.0012755102
        %v3504 = vmul.f32 %v3354, 0.0012755102
        %v3505 = vmul.f32 %v3359, 0.0012755102
        %v3506 = vmul.f32 %v3364, 0.0012755102
        %v3507 = vmul.f32 %v3369, 0.0012755102
        %v3508 = vmul.f32 %v3374, 0.0012755102
        %v3509 = vmul.f32 %v3379, 0.0012755102
        %v3510 = vmul.f32 %v3384, 0.0012755102
        %v3511 = vmul.f32 %v3389, 0.0012755102
        %v3512 = vmul.f32 %v3394, 0.0012755102
        %v3513 = vmul.f32 %v3399, 0.0012755102
        %v3514 = vmul.f32 %v3404, 0.0012755102
        %v3515 = vmul.f32 %v3409, 0.0012755102
        %v3516 = vmul.f32 %v3414, 0.0012755102
        %v3517 = vmul.f32 %v3419, 0.0012755102
        %v3518 = vmul.f32 %v3424, 0.0012755102
        %v3519 = vmul.f32 %v3429, 0.0012755102
        %v3520 = vmul.f32 %v3434, 0.0012755102
        %v3521 = vmul.f32 %v3439, 0.0012755102
        %v3522 = vmul.f32 %v3444, 0.0012755102
        %v3523 = vmul.f32 %v3449, 0.0012755102
        %v3524 = vmul.f32 %v3454, 0.0012755102
        %v3525 = vmul.f32 %v3459, 0.0012755102
        %v3526 = vmul.f32 %v3464, 0.0012755102
        %v3527 = vmul.f32 %v3467, %v3467
        %v3528 = vmul.f32 %v3468, %v3468
        %v3529 = vmul.f32 %v3469, %v3469
        %v3530 = vmul.f32 %v3470, %v3470
        %v3531 = vmul.f32 %v3471, %v3471
        %v3532 = vmul.f32 %v3472, %v3472
        %v3533 = vmul.f32 %v3473, %v3473
        %v3534 = vmul.f32 %v3474, %v3474
        %v3535 = vmul.f32 %v3475, %v3475
        %v3536 = vmul.f32 %v3476, %v3476
        %v3537 = vmul.f32 %v3477, %v3477
        %v3538 = vmul.f32 %v3478, %v3478
        %v3539 = vmul.f32 %v3479, %v3479
        %v3540 = vmul.f32 %v3480, %v3480
        %v3541 = vmul.f32 %v3481, %v3481
        %v3542 = vmul.f32 %v3482, %v3482
        %v3543 = vmul.f32 %v3483, %v3483
        %v3544 = vmul.f32 %v3484, %v3484
        %v3545 = vmul.f32 %v3485, %v3485
        %v3546 = vmul.f32 %v3486, %v3486
        %v3547 = vmul.f32 %v3487, %v3487
        %v3548 = vmul.f32 %v3488, %v3488
        %v3549 = vmul.f32 %v3489, %v3489
        %v3550 = vmul.f32 %v3490, %v3490
        %v3551 = vmul.f32 %v3491, %v3491
        %v3552 = vmul.f32 %v3492, %v3492
        %v3553 = vmul.f32 %v3493, %v3493
        %v3554 = vmul.f32 %v3494, %v3494
        %v3555 = vmul.f32 %v3495, %v3495
        %v3556 = vmul.f32 %v3496, %v3496
        %v3557 = vsub.f32 %v3497, %v3527
        %v3558 = vsub.f32 %v3498, %v3528
        %v3559 = vsub.f32 %v3499, %v3529
        %v3560 = vsub.f32 %v3500, %v3530
        %v3561 = vsub.f32 %v3501, %v3531
        %v3562 = vsub.f32 %v3502, %v3532
        %v3563 = vsub.f32 %v3503, %v3533
        %v3564 = vsub.f32 %v3504, %v3534
        %v3565 = vsub.f32 %v3505, %v3535
        %v3566 = vsub.f32 %v3506, %v3536
        %v3567 = vsub.f32 %v3507, %v3537
        %v3568 = vsub.f32 %v3508, %v3538
        %v3569 = vsub.f32 %v3509, %v3539
        %v3570 = vsub.f32 %v3510, %v3540
        %v3571 = vsub.f32 %v3511, %v3541
        %v3572 = vsub.f32 %v3512, %v3542
        %v3573 = vsub.f32 %v3513, %v3543
        %v3574 = vsub.f32 %v3514, %v3544
        %v3575 = vsub.f32 %v3515, %v3545
        %v3576 = vsub.f32 %v3516, %v3546
        %v3577 = vsub.f32 %v3517, %v3547
        %v3578 = vsub.f32 %v3518, %v3548
        %v3579 = vsub.f32 %v3519, %v3549
        %v3580 = vsub.f32 %v3520, %v3550
        %v3581 = vsub.f32 %v3521, %v3551
        %v3582 = vsub.f32 %v3522, %v3552
        %v3583 = vsub.f32 %v3523, %v3553
        %v3584 = vsub.f32 %v3524, %v3554
        %v3585 = vsub.f32 %v3525, %v3555
        %v3586 = vsub.f32 %v3526, %v3556
        %v3587 = vadd.f32 %v3557, 1e-05
        %v3588 = vadd.f32 %v3558, 1e-05
        %v3589 = vadd.f32 %v3559, 1e-05
        %v3590 = vadd.f32 %v3560, 1e-05
        %v3591 = vadd.f32 %v3561, 1e-05
        %v3592 = vadd.f32 %v3562, 1e-05
        %v3593 = vadd.f32 %v3563, 1e-05
        %v3594 = vadd.f32 %v3564, 1e-05
        %v3595 = vadd.f32 %v3565, 1e-05
        %v3596 = vadd.f32 %v3566, 1e-05
        %v3597 = vadd.f32 %v3567, 1e-05
        %v3598 = vadd.f32 %v3568, 1e-05
        %v3599 = vadd.f32 %v3569, 1e-05
        %v3600 = vadd.f32 %v3570, 1e-05
        %v3601 = vadd.f32 %v3571, 1e-05
        %v3602 = vadd.f32 %v3572, 1e-05
        %v3603 = vadd.f32 %v3573, 1e-05
        %v3604 = vadd.f32 %v3574, 1e-05
        %v3605 = vadd.f32 %v3575, 1e-05
        %v3606 = vadd.f32 %v3576, 1e-05
        %v3607 = vadd.f32 %v3577, 1e-05
        %v3608 = vadd.f32 %v3578, 1e-05
        %v3609 = vadd.f32 %v3579, 1e-05
        %v3610 = vadd.f32 %v3580, 1e-05
        %v3611 = vadd.f32 %v3581, 1e-05
        %v3612 = vadd.f32 %v3582, 1e-05
        %v3613 = vadd.f32 %v3583, 1e-05
        %v3614 = vadd.f32 %v3584, 1e-05
        %v3615 = vadd.f32 %v3585, 1e-05
        %v3616 = vadd.f32 %v3586, 1e-05
        %v3617 = vrsqrt.pop %v3587
        %v3618 = vrsqrt.pop %v3588
        %v3619 = vrsqrt.pop %v3589
        %v3620 = vrsqrt.pop %v3590
        %v3621 = vrsqrt.pop %v3591
        %v3622 = vrsqrt.pop %v3592
        %v3623 = vrsqrt.pop %v3593
        %v3624 = vrsqrt.pop %v3594
        %v3625 = vrsqrt.pop %v3595
        %v3626 = vrsqrt.pop %v3596
        %v3627 = vrsqrt.pop %v3597
        %v3628 = vrsqrt.pop %v3598
        %v3629 = vrsqrt.pop %v3599
        %v3630 = vrsqrt.pop %v3600
        %v3631 = vrsqrt.pop %v3601
        %v3632 = vrsqrt.pop %v3602
        %v3633 = vrsqrt.pop %v3603
        %v3634 = vrsqrt.pop %v3604
        %v3635 = vrsqrt.pop %v3605
        %v3636 = vrsqrt.pop %v3606
        %v3637 = vrsqrt.pop %v3607
        %v3638 = vrsqrt.pop %v3608
        %v3639 = vrsqrt.pop %v3609
        %v3640 = vrsqrt.pop %v3610
        %v3641 = vrsqrt.pop %v3611
        %v3642 = vrsqrt.pop %v3612
        %v3643 = vrsqrt.pop %v3613
        %v3644 = vrsqrt.pop %v3614
        %v3645 = vrsqrt.pop %v3615
        %v3646 = vrsqrt.pop %v3616
        %s3647 = smul.u32 %s21, 240
        %s3648 = scalar_lea.vmem %s3, %s3647
        %v3649 = vld [vmem:[%s3648] sm:$0xff]
        %v3650 = vld [vmem:[%s3648 + $0x8] sm:$0xff]
        %v3651 = vld [vmem:[%s3648 + $0x10] sm:$0xff]
        %v3652 = vld [vmem:[%s3648 + $0x18] sm:$0xff]
        %v3653 = vld [vmem:[%s3648 + $0x20] sm:$0xff]
        %v3654 = vld [vmem:[%s3648 + $0x28] sm:$0xff]
        %v3655 = vld [vmem:[%s3648 + $0x30] sm:$0xff]
        %v3656 = vld [vmem:[%s3648 + $0x38] sm:$0xff]
        %v3657 = vld [vmem:[%s3648 + $0x40] sm:$0xff]
        %v3658 = vld [vmem:[%s3648 + $0x48] sm:$0xff]
        %v3659 = vld [vmem:[%s3648 + $0x50] sm:$0xff]
        %v3660 = vld [vmem:[%s3648 + $0x58] sm:$0xff]
        %v3661 = vld [vmem:[%s3648 + $0x60] sm:$0xff]
        %v3662 = vld [vmem:[%s3648 + $0x68] sm:$0xff]
        %v3663 = vld [vmem:[%s3648 + $0x70] sm:$0xff]
        %v3664 = vld [vmem:[%s3648 + $0x78] sm:$0xff]
        %v3665 = vld [vmem:[%s3648 + $0x80] sm:$0xff]
        %v3666 = vld [vmem:[%s3648 + $0x88] sm:$0xff]
        %v3667 = vld [vmem:[%s3648 + $0x90] sm:$0xff]
        %v3668 = vld [vmem:[%s3648 + $0x98] sm:$0xff]
        %v3669 = vld [vmem:[%s3648 + $0xa0] sm:$0xff]
        %v3670 = vld [vmem:[%s3648 + $0xa8] sm:$0xff]
        %v3671 = vld [vmem:[%s3648 + $0xb0] sm:$0xff]
        %v3672 = vld [vmem:[%s3648 + $0xb8] sm:$0xff]
        %v3673 = vld [vmem:[%s3648 + $0xc0] sm:$0xff]
        %v3674 = vld [vmem:[%s3648 + $0xc8] sm:$0xff]
        %v3675 = vld [vmem:[%s3648 + $0xd0] sm:$0xff]
        %v3676 = vld [vmem:[%s3648 + $0xd8] sm:$0xff]
        %v3677 = vld [vmem:[%s3648 + $0xe0] sm:$0xff]
        %v3678 = vld [vmem:[%s3648 + $0xe8] sm:$0xff]
        %s3679 = scalar_lea.vmem %s4, %s3647
        %v3680 = vld [vmem:[%s3679] sm:$0xff]
        %v3681 = vld [vmem:[%s3679 + $0x8] sm:$0xff]
        %v3682 = vld [vmem:[%s3679 + $0x10] sm:$0xff]
        %v3683 = vld [vmem:[%s3679 + $0x18] sm:$0xff]
        %v3684 = vld [vmem:[%s3679 + $0x20] sm:$0xff]
        %v3685 = vld [vmem:[%s3679 + $0x28] sm:$0xff]
        %v3686 = vld [vmem:[%s3679 + $0x30] sm:$0xff]
        %v3687 = vld [vmem:[%s3679 + $0x38] sm:$0xff]
        %v3688 = vld [vmem:[%s3679 + $0x40] sm:$0xff]
        %v3689 = vld [vmem:[%s3679 + $0x48] sm:$0xff]
        %v3690 = vld [vmem:[%s3679 + $0x50] sm:$0xff]
        %v3691 = vld [vmem:[%s3679 + $0x58] sm:$0xff]
        %v3692 = vld [vmem:[%s3679 + $0x60] sm:$0xff]
        %v3693 = vld [vmem:[%s3679 + $0x68] sm:$0xff]
        %v3694 = vld [vmem:[%s3679 + $0x70] sm:$0xff]
        %v3695 = vld [vmem:[%s3679 + $0x78] sm:$0xff]
        %v3696 = vld [vmem:[%s3679 + $0x80] sm:$0xff]
        %v3697 = vld [vmem:[%s3679 + $0x88] sm:$0xff]
        %v3698 = vld [vmem:[%s3679 + $0x90] sm:$0xff]
        %v3699 = vld [vmem:[%s3679 + $0x98] sm:$0xff]
        %v3700 = vld [vmem:[%s3679 + $0xa0] sm:$0xff]
        %v3701 = vld [vmem:[%s3679 + $0xa8] sm:$0xff]
        %v3702 = vld [vmem:[%s3679 + $0xb0] sm:$0xff]
        %v3703 = vld [vmem:[%s3679 + $0xb8] sm:$0xff]
        %v3704 = vld [vmem:[%s3679 + $0xc0] sm:$0xff]
        %v3705 = vld [vmem:[%s3679 + $0xc8] sm:$0xff]
        %v3706 = vld [vmem:[%s3679 + $0xd0] sm:$0xff]
        %v3707 = vld [vmem:[%s3679 + $0xd8] sm:$0xff]
        %v3708 = vld [vmem:[%s3679 + $0xe0] sm:$0xff]
        %v3709 = vld [vmem:[%s3679 + $0xe8] sm:$0xff]
        %v3710 = vmul.f32 %v3649, %v3617
        %v3711 = vmul.f32 %v3650, %v3618
        %v3712 = vmul.f32 %v3651, %v3619
        %v3713 = vmul.f32 %v3652, %v3620
        %v3714 = vmul.f32 %v3653, %v3621
        %v3715 = vmul.f32 %v3654, %v3622
        %v3716 = vmul.f32 %v3655, %v3623
        %v3717 = vmul.f32 %v3656, %v3624
        %v3718 = vmul.f32 %v3657, %v3625
        %v3719 = vmul.f32 %v3658, %v3626
        %v3720 = vmul.f32 %v3659, %v3627
        %v3721 = vmul.f32 %v3660, %v3628
        %v3722 = vmul.f32 %v3661, %v3629
        %v3723 = vmul.f32 %v3662, %v3630
        %v3724 = vmul.f32 %v3663, %v3631
        %v3725 = vmul.f32 %v3664, %v3632
        %v3726 = vmul.f32 %v3665, %v3633
        %v3727 = vmul.f32 %v3666, %v3634
        %v3728 = vmul.f32 %v3667, %v3635
        %v3729 = vmul.f32 %v3668, %v3636
        %v3730 = vmul.f32 %v3669, %v3637
        %v3731 = vmul.f32 %v3670, %v3638
        %v3732 = vmul.f32 %v3671, %v3639
        %v3733 = vmul.f32 %v3672, %v3640
        %v3734 = vmul.f32 %v3673, %v3641
        %v3735 = vmul.f32 %v3674, %v3642
        %v3736 = vmul.f32 %v3675, %v3643
        %v3737 = vmul.f32 %v3676, %v3644
        %v3738 = vmul.f32 %v3677, %v3645
        %v3739 = vmul.f32 %v3678, %v3646
        %v3740 = vmul.f32 %v3467, %v3710
        %v3741 = vmul.f32 %v3468, %v3711
        %v3742 = vmul.f32 %v3469, %v3712
        %v3743 = vmul.f32 %v3470, %v3713
        %v3744 = vmul.f32 %v3471, %v3714
        %v3745 = vmul.f32 %v3472, %v3715
        %v3746 = vmul.f32 %v3473, %v3716
        %v3747 = vmul.f32 %v3474, %v3717
        %v3748 = vmul.f32 %v3475, %v3718
        %v3749 = vmul.f32 %v3476, %v3719
        %v3750 = vmul.f32 %v3477, %v3720
        %v3751 = vmul.f32 %v3478, %v3721
        %v3752 = vmul.f32 %v3479, %v3722
        %v3753 = vmul.f32 %v3480, %v3723
        %v3754 = vmul.f32 %v3481, %v3724
        %v3755 = vmul.f32 %v3482, %v3725
        %v3756 = vmul.f32 %v3483, %v3726
        %v3757 = vmul.f32 %v3484, %v3727
        %v3758 = vmul.f32 %v3485, %v3728
        %v3759 = vmul.f32 %v3486, %v3729
        %v3760 = vmul.f32 %v3487, %v3730
        %v3761 = vmul.f32 %v3488, %v3731
        %v3762 = vmul.f32 %v3489, %v3732
        %v3763 = vmul.f32 %v3490, %v3733
        %v3764 = vmul.f32 %v3491, %v3734
        %v3765 = vmul.f32 %v3492, %v3735
        %v3766 = vmul.f32 %v3493, %v3736
        %v3767 = vmul.f32 %v3494, %v3737
        %v3768 = vmul.f32 %v3495, %v3738
        %v3769 = vmul.f32 %v3496, %v3739
        %v3770 = vsub.f32 %v3680, %v3740
        %v3771 = vsub.f32 %v3681, %v3741
        %v3772 = vsub.f32 %v3682, %v3742
        %v3773 = vsub.f32 %v3683, %v3743
        %v3774 = vsub.f32 %v3684, %v3744
        %v3775 = vsub.f32 %v3685, %v3745
        %v3776 = vsub.f32 %v3686, %v3746
        %v3777 = vsub.f32 %v3687, %v3747
        %v3778 = vsub.f32 %v3688, %v3748
        %v3779 = vsub.f32 %v3689, %v3749
        %v3780 = vsub.f32 %v3690, %v3750
        %v3781 = vsub.f32 %v3691, %v3751
        %v3782 = vsub.f32 %v3692, %v3752
        %v3783 = vsub.f32 %v3693, %v3753
        %v3784 = vsub.f32 %v3694, %v3754
        %v3785 = vsub.f32 %v3695, %v3755
        %v3786 = vsub.f32 %v3696, %v3756
        %v3787 = vsub.f32 %v3697, %v3757
        %v3788 = vsub.f32 %v3698, %v3758
        %v3789 = vsub.f32 %v3699, %v3759
        %v3790 = vsub.f32 %v3700, %v3760
        %v3791 = vsub.f32 %v3701, %v3761
        %v3792 = vsub.f32 %v3702, %v3762
        %v3793 = vsub.f32 %v3703, %v3763
        %v3794 = vsub.f32 %v3704, %v3764
        %v3795 = vsub.f32 %v3705, %v3765
        %v3796 = vsub.f32 %v3706, %v3766
        %v3797 = vsub.f32 %v3707, %v3767
        %v3798 = vsub.f32 %v3708, %v3768
        %v3799 = vsub.f32 %v3709, %v3769
        %3801 = vset.pattern.permute.xlu0 0
        %3802 = vperm.xlu0 %3801, %v3710
        %v3803 = vpop.permute.xlu0 %3802
        %3806 = vset.pattern.permute.xlu0 0
        %3807 = vperm.xlu0 %3806, %v3711
        %v3808 = vpop.permute.xlu0 %3807
        %3811 = vset.pattern.permute.xlu0 0
        %3812 = vperm.xlu0 %3811, %v3712
        %v3813 = vpop.permute.xlu0 %3812
        %3816 = vset.pattern.permute.xlu0 0
        %3817 = vperm.xlu0 %3816, %v3713
        %v3818 = vpop.permute.xlu0 %3817
        %3821 = vset.pattern.permute.xlu0 0
        %3822 = vperm.xlu0 %3821, %v3714
        %v3823 = vpop.permute.xlu0 %3822
        %3826 = vset.pattern.permute.xlu0 0
        %3827 = vperm.xlu0 %3826, %v3715
        %v3828 = vpop.permute.xlu0 %3827
        %3831 = vset.pattern.permute.xlu0 0
        %3832 = vperm.xlu0 %3831, %v3716
        %v3833 = vpop.permute.xlu0 %3832
        %3836 = vset.pattern.permute.xlu0 0
        %3837 = vperm.xlu0 %3836, %v3717
        %v3838 = vpop.permute.xlu0 %3837
        %3841 = vset.pattern.permute.xlu0 0
        %3842 = vperm.xlu0 %3841, %v3718
        %v3843 = vpop.permute.xlu0 %3842
        %3846 = vset.pattern.permute.xlu0 0
        %3847 = vperm.xlu0 %3846, %v3719
        %v3848 = vpop.permute.xlu0 %3847
        %3851 = vset.pattern.permute.xlu0 0
        %3852 = vperm.xlu0 %3851, %v3720
        %v3853 = vpop.permute.xlu0 %3852
        %3856 = vset.pattern.permute.xlu0 0
        %3857 = vperm.xlu0 %3856, %v3721
        %v3858 = vpop.permute.xlu0 %3857
        %3861 = vset.pattern.permute.xlu0 0
        %3862 = vperm.xlu0 %3861, %v3722
        %v3863 = vpop.permute.xlu0 %3862
        %3866 = vset.pattern.permute.xlu0 0
        %3867 = vperm.xlu0 %3866, %v3723
        %v3868 = vpop.permute.xlu0 %3867
        %3871 = vset.pattern.permute.xlu0 0
        %3872 = vperm.xlu0 %3871, %v3724
        %v3873 = vpop.permute.xlu0 %3872
        %3876 = vset.pattern.permute.xlu0 0
        %3877 = vperm.xlu0 %3876, %v3725
        %v3878 = vpop.permute.xlu0 %3877
        %3881 = vset.pattern.permute.xlu0 0
        %3882 = vperm.xlu0 %3881, %v3726
        %v3883 = vpop.permute.xlu0 %3882
        %3886 = vset.pattern.permute.xlu0 0
        %3887 = vperm.xlu0 %3886, %v3727
        %v3888 = vpop.permute.xlu0 %3887
        %3891 = vset.pattern.permute.xlu0 0
        %3892 = vperm.xlu0 %3891, %v3728
        %v3893 = vpop.permute.xlu0 %3892
        %3896 = vset.pattern.permute.xlu0 0
        %3897 = vperm.xlu0 %3896, %v3729
        %v3898 = vpop.permute.xlu0 %3897
        %3901 = vset.pattern.permute.xlu0 0
        %3902 = vperm.xlu0 %3901, %v3730
        %v3903 = vpop.permute.xlu0 %3902
        %3906 = vset.pattern.permute.xlu0 0
        %3907 = vperm.xlu0 %3906, %v3731
        %v3908 = vpop.permute.xlu0 %3907
        %3911 = vset.pattern.permute.xlu0 0
        %3912 = vperm.xlu0 %3911, %v3732
        %v3913 = vpop.permute.xlu0 %3912
        %3916 = vset.pattern.permute.xlu0 0
        %3917 = vperm.xlu0 %3916, %v3733
        %v3918 = vpop.permute.xlu0 %3917
        %3921 = vset.pattern.permute.xlu0 0
        %3922 = vperm.xlu0 %3921, %v3734
        %v3923 = vpop.permute.xlu0 %3922
        %3926 = vset.pattern.permute.xlu0 0
        %3927 = vperm.xlu0 %3926, %v3735
        %v3928 = vpop.permute.xlu0 %3927
        %3931 = vset.pattern.permute.xlu0 0
        %3932 = vperm.xlu0 %3931, %v3736
        %v3933 = vpop.permute.xlu0 %3932
        %3936 = vset.pattern.permute.xlu0 0
        %3937 = vperm.xlu0 %3936, %v3737
        %v3938 = vpop.permute.xlu0 %3937
        %3941 = vset.pattern.permute.xlu0 0
        %3942 = vperm.xlu0 %3941, %v3738
        %v3943 = vpop.permute.xlu0 %3942
        %3946 = vset.pattern.permute.xlu0 0
        %3947 = vperm.xlu0 %3946, %v3739
        %v3948 = vpop.permute.xlu0 %3947
        %v3950 = vmul.f32 %v654, %v3803
        %v3951 = vmul.f32 %v656, %v3803
        %v3952 = vmul.f32 %v899, %v3803
        %v3953 = vmul.f32 %v901, %v3803
        %v3954 = vmul.f32 %v1144, %v3803
        %v3955 = vmul.f32 %v1146, %v3803
        %v3956 = vmul.f32 %v1389, %v3803
        %v3957 = vmul.f32 %v660, %v3808
        %v3958 = vmul.f32 %v662, %v3808
        %v3959 = vmul.f32 %v905, %v3808
        %v3960 = vmul.f32 %v907, %v3808
        %v3961 = vmul.f32 %v1150, %v3808
        %v3962 = vmul.f32 %v1152, %v3808
        %v3963 = vmul.f32 %v1394, %v3808
        %v3964 = vmul.f32 %v666, %v3813
        %v3965 = vmul.f32 %v668, %v3813
        %v3966 = vmul.f32 %v911, %v3813
        %v3967 = vmul.f32 %v913, %v3813
        %v3968 = vmul.f32 %v1156, %v3813
        %v3969 = vmul.f32 %v1158, %v3813
        %v3970 = vmul.f32 %v1399, %v3813
        %v3971 = vmul.f32 %v672, %v3818
        %v3972 = vmul.f32 %v674, %v3818
        %v3973 = vmul.f32 %v917, %v3818
        %v3974 = vmul.f32 %v919, %v3818
        %v3975 = vmul.f32 %v1162, %v3818
        %v3976 = vmul.f32 %v1164, %v3818
        %v3977 = vmul.f32 %v1404, %v3818
        %v3978 = vmul.f32 %v678, %v3823
        %v3979 = vmul.f32 %v680, %v3823
        %v3980 = vmul.f32 %v923, %v3823
        %v3981 = vmul.f32 %v925, %v3823
        %v3982 = vmul.f32 %v1168, %v3823
        %v3983 = vmul.f32 %v1170, %v3823
        %v3984 = vmul.f32 %v1409, %v3823
        %v3985 = vmul.f32 %v684, %v3828
        %v3986 = vmul.f32 %v686, %v3828
        %v3987 = vmul.f32 %v929, %v3828
        %v3988 = vmul.f32 %v931, %v3828
        %v3989 = vmul.f32 %v1174, %v3828
        %v3990 = vmul.f32 %v1176, %v3828
        %v3991 = vmul.f32 %v1414, %v3828
        %v3992 = vmul.f32 %v690, %v3833
        %v3993 = vmul.f32 %v692, %v3833
        %v3994 = vmul.f32 %v935, %v3833
        %v3995 = vmul.f32 %v937, %v3833
        %v3996 = vmul.f32 %v1180, %v3833
        %v3997 = vmul.f32 %v1182, %v3833
        %v3998 = vmul.f32 %v1419, %v3833
        %v3999 = vmul.f32 %v696, %v3838
        %v4000 = vmul.f32 %v698, %v3838
        %v4001 = vmul.f32 %v941, %v3838
        %v4002 = vmul.f32 %v943, %v3838
        %v4003 = vmul.f32 %v1186, %v3838
        %v4004 = vmul.f32 %v1188, %v3838
        %v4005 = vmul.f32 %v1424, %v3838
        %v4006 = vmul.f32 %v702, %v3843
        %v4007 = vmul.f32 %v704, %v3843
        %v4008 = vmul.f32 %v947, %v3843
        %v4009 = vmul.f32 %v949, %v3843
        %v4010 = vmul.f32 %v1192, %v3843
        %v4011 = vmul.f32 %v1194, %v3843
        %v4012 = vmul.f32 %v1429, %v3843
        %v4013 = vmul.f32 %v708, %v3848
        %v4014 = vmul.f32 %v710, %v3848
        %v4015 = vmul.f32 %v953, %v3848
        %v4016 = vmul.f32 %v955, %v3848
        %v4017 = vmul.f32 %v1198, %v3848
        %v4018 = vmul.f32 %v1200, %v3848
        %v4019 = vmul.f32 %v1434, %v3848
        %v4020 = vmul.f32 %v714, %v3853
        %v4021 = vmul.f32 %v716, %v3853
        %v4022 = vmul.f32 %v959, %v3853
        %v4023 = vmul.f32 %v961, %v3853
        %v4024 = vmul.f32 %v1204, %v3853
        %v4025 = vmul.f32 %v1206, %v3853
        %v4026 = vmul.f32 %v1439, %v3853
        %v4027 = vmul.f32 %v720, %v3858
        %v4028 = vmul.f32 %v722, %v3858
        %v4029 = vmul.f32 %v965, %v3858
        %v4030 = vmul.f32 %v967, %v3858
        %v4031 = vmul.f32 %v1210, %v3858
        %v4032 = vmul.f32 %v1212, %v3858
        %v4033 = vmul.f32 %v1444, %v3858
        %v4034 = vmul.f32 %v726, %v3863
        %v4035 = vmul.f32 %v728, %v3863
        %v4036 = vmul.f32 %v971, %v3863
        %v4037 = vmul.f32 %v973, %v3863
        %v4038 = vmul.f32 %v1216, %v3863
        %v4039 = vmul.f32 %v1218, %v3863
        %v4040 = vmul.f32 %v1449, %v3863
        %v4041 = vmul.f32 %v732, %v3868
        %v4042 = vmul.f32 %v734, %v3868
        %v4043 = vmul.f32 %v977, %v3868
        %v4044 = vmul.f32 %v979, %v3868
        %v4045 = vmul.f32 %v1222, %v3868
        %v4046 = vmul.f32 %v1224, %v3868
        %v4047 = vmul.f32 %v1454, %v3868
        %v4048 = vmul.f32 %v738, %v3873
        %v4049 = vmul.f32 %v740, %v3873
        %v4050 = vmul.f32 %v983, %v3873
        %v4051 = vmul.f32 %v985, %v3873
        %v4052 = vmul.f32 %v1228, %v3873
        %v4053 = vmul.f32 %v1230, %v3873
        %v4054 = vmul.f32 %v1459, %v3873
        %v4055 = vmul.f32 %v744, %v3878
        %v4056 = vmul.f32 %v746, %v3878
        %v4057 = vmul.f32 %v989, %v3878
        %v4058 = vmul.f32 %v991, %v3878
        %v4059 = vmul.f32 %v1234, %v3878
        %v4060 = vmul.f32 %v1236, %v3878
        %v4061 = vmul.f32 %v1464, %v3878
        %v4062 = vmul.f32 %v750, %v3883
        %v4063 = vmul.f32 %v752, %v3883
        %v4064 = vmul.f32 %v995, %v3883
        %v4065 = vmul.f32 %v997, %v3883
        %v4066 = vmul.f32 %v1240, %v3883
        %v4067 = vmul.f32 %v1242, %v3883
        %v4068 = vmul.f32 %v1469, %v3883
        %v4069 = vmul.f32 %v756, %v3888
        %v4070 = vmul.f32 %v758, %v3888
        %v4071 = vmul.f32 %v1001, %v3888
        %v4072 = vmul.f32 %v1003, %v3888
        %v4073 = vmul.f32 %v1246, %v3888
        %v4074 = vmul.f32 %v1248, %v3888
        %v4075 = vmul.f32 %v1474, %v3888
        %v4076 = vmul.f32 %v762, %v3893
        %v4077 = vmul.f32 %v764, %v3893
        %v4078 = vmul.f32 %v1007, %v3893
        %v4079 = vmul.f32 %v1009, %v3893
        %v4080 = vmul.f32 %v1252, %v3893
        %v4081 = vmul.f32 %v1254, %v3893
        %v4082 = vmul.f32 %v1479, %v3893
        %v4083 = vmul.f32 %v768, %v3898
        %v4084 = vmul.f32 %v770, %v3898
        %v4085 = vmul.f32 %v1013, %v3898
        %v4086 = vmul.f32 %v1015, %v3898
        %v4087 = vmul.f32 %v1258, %v3898
        %v4088 = vmul.f32 %v1260, %v3898
        %v4089 = vmul.f32 %v1484, %v3898
        %v4090 = vmul.f32 %v774, %v3903
        %v4091 = vmul.f32 %v776, %v3903
        %v4092 = vmul.f32 %v1019, %v3903
        %v4093 = vmul.f32 %v1021, %v3903
        %v4094 = vmul.f32 %v1264, %v3903
        %v4095 = vmul.f32 %v1266, %v3903
        %v4096 = vmul.f32 %v1489, %v3903
        %v4097 = vmul.f32 %v780, %v3908
        %v4098 = vmul.f32 %v782, %v3908
        %v4099 = vmul.f32 %v1025, %v3908
        %v4100 = vmul.f32 %v1027, %v3908
        %v4101 = vmul.f32 %v1270, %v3908
        %v4102 = vmul.f32 %v1272, %v3908
        %v4103 = vmul.f32 %v1494, %v3908
        %v4104 = vmul.f32 %v786, %v3913
        %v4105 = vmul.f32 %v788, %v3913
        %v4106 = vmul.f32 %v1031, %v3913
        %v4107 = vmul.f32 %v1033, %v3913
        %v4108 = vmul.f32 %v1276, %v3913
        %v4109 = vmul.f32 %v1278, %v3913
        %v4110 = vmul.f32 %v1499, %v3913
        %v4111 = vmul.f32 %v792, %v3918
        %v4112 = vmul.f32 %v794, %v3918
        %v4113 = vmul.f32 %v1037, %v3918
        %v4114 = vmul.f32 %v1039, %v3918
        %v4115 = vmul.f32 %v1282, %v3918
        %v4116 = vmul.f32 %v1284, %v3918
        %v4117 = vmul.f32 %v1504, %v3918
        %v4118 = vmul.f32 %v798, %v3923
        %v4119 = vmul.f32 %v800, %v3923
        %v4120 = vmul.f32 %v1043, %v3923
        %v4121 = vmul.f32 %v1045, %v3923
        %v4122 = vmul.f32 %v1288, %v3923
        %v4123 = vmul.f32 %v1290, %v3923
        %v4124 = vmul.f32 %v1509, %v3923
        %v4125 = vmul.f32 %v804, %v3928
        %v4126 = vmul.f32 %v806, %v3928
        %v4127 = vmul.f32 %v1049, %v3928
        %v4128 = vmul.f32 %v1051, %v3928
        %v4129 = vmul.f32 %v1294, %v3928
        %v4130 = vmul.f32 %v1296, %v3928
        %v4131 = vmul.f32 %v1514, %v3928
        %v4132 = vmul.f32 %v810, %v3933
        %v4133 = vmul.f32 %v812, %v3933
        %v4134 = vmul.f32 %v1055, %v3933
        %v4135 = vmul.f32 %v1057, %v3933
        %v4136 = vmul.f32 %v1300, %v3933
        %v4137 = vmul.f32 %v1302, %v3933
        %v4138 = vmul.f32 %v1519, %v3933
        %v4139 = vmul.f32 %v816, %v3938
        %v4140 = vmul.f32 %v818, %v3938
        %v4141 = vmul.f32 %v1061, %v3938
        %v4142 = vmul.f32 %v1063, %v3938
        %v4143 = vmul.f32 %v1306, %v3938
        %v4144 = vmul.f32 %v1308, %v3938
        %v4145 = vmul.f32 %v1524, %v3938
        %v4146 = vmul.f32 %v822, %v3943
        %v4147 = vmul.f32 %v824, %v3943
        %v4148 = vmul.f32 %v1067, %v3943
        %v4149 = vmul.f32 %v1069, %v3943
        %v4150 = vmul.f32 %v1312, %v3943
        %v4151 = vmul.f32 %v1314, %v3943
        %v4152 = vmul.f32 %v1529, %v3943
        %v4153 = vmul.f32 %v828, %v3948
        %v4154 = vmul.f32 %v830, %v3948
        %v4155 = vmul.f32 %v1073, %v3948
        %v4156 = vmul.f32 %v1075, %v3948
        %v4157 = vmul.f32 %v1318, %v3948
        %v4158 = vmul.f32 %v1320, %v3948
        %v4159 = vmul.f32 %v1534, %v3948
        %4161 = vset.pattern.permute.xlu0 0
        %4162 = vperm.xlu0 %4161, %v3770
        %v4163 = vpop.permute.xlu0 %4162
        %4166 = vset.pattern.permute.xlu0 0
        %4167 = vperm.xlu0 %4166, %v3771
        %v4168 = vpop.permute.xlu0 %4167
        %4171 = vset.pattern.permute.xlu0 0
        %4172 = vperm.xlu0 %4171, %v3772
        %v4173 = vpop.permute.xlu0 %4172
        %4176 = vset.pattern.permute.xlu0 0
        %4177 = vperm.xlu0 %4176, %v3773
        %v4178 = vpop.permute.xlu0 %4177
        %4181 = vset.pattern.permute.xlu0 0
        %4182 = vperm.xlu0 %4181, %v3774
        %v4183 = vpop.permute.xlu0 %4182
        %4186 = vset.pattern.permute.xlu0 0
        %4187 = vperm.xlu0 %4186, %v3775
        %v4188 = vpop.permute.xlu0 %4187
        %4191 = vset.pattern.permute.xlu0 0
        %4192 = vperm.xlu0 %4191, %v3776
        %v4193 = vpop.permute.xlu0 %4192
        %4196 = vset.pattern.permute.xlu0 0
        %4197 = vperm.xlu0 %4196, %v3777
        %v4198 = vpop.permute.xlu0 %4197
        %4201 = vset.pattern.permute.xlu0 0
        %4202 = vperm.xlu0 %4201, %v3778
        %v4203 = vpop.permute.xlu0 %4202
        %4206 = vset.pattern.permute.xlu0 0
        %4207 = vperm.xlu0 %4206, %v3779
        %v4208 = vpop.permute.xlu0 %4207
        %4211 = vset.pattern.permute.xlu0 0
        %4212 = vperm.xlu0 %4211, %v3780
        %v4213 = vpop.permute.xlu0 %4212
        %4216 = vset.pattern.permute.xlu0 0
        %4217 = vperm.xlu0 %4216, %v3781
        %v4218 = vpop.permute.xlu0 %4217
        %4221 = vset.pattern.permute.xlu0 0
        %4222 = vperm.xlu0 %4221, %v3782
        %v4223 = vpop.permute.xlu0 %4222
        %4226 = vset.pattern.permute.xlu0 0
        %4227 = vperm.xlu0 %4226, %v3783
        %v4228 = vpop.permute.xlu0 %4227
        %4231 = vset.pattern.permute.xlu0 0
        %4232 = vperm.xlu0 %4231, %v3784
        %v4233 = vpop.permute.xlu0 %4232
        %4236 = vset.pattern.permute.xlu0 0
        %4237 = vperm.xlu0 %4236, %v3785
        %v4238 = vpop.permute.xlu0 %4237
        %4241 = vset.pattern.permute.xlu0 0
        %4242 = vperm.xlu0 %4241, %v3786
        %v4243 = vpop.permute.xlu0 %4242
        %4246 = vset.pattern.permute.xlu0 0
        %4247 = vperm.xlu0 %4246, %v3787
        %v4248 = vpop.permute.xlu0 %4247
        %4251 = vset.pattern.permute.xlu0 0
        %4252 = vperm.xlu0 %4251, %v3788
        %v4253 = vpop.permute.xlu0 %4252
        %4256 = vset.pattern.permute.xlu0 0
        %4257 = vperm.xlu0 %4256, %v3789
        %v4258 = vpop.permute.xlu0 %4257
        %4261 = vset.pattern.permute.xlu0 0
        %4262 = vperm.xlu0 %4261, %v3790
        %v4263 = vpop.permute.xlu0 %4262
        %4266 = vset.pattern.permute.xlu0 0
        %4267 = vperm.xlu0 %4266, %v3791
        %v4268 = vpop.permute.xlu0 %4267
        %4271 = vset.pattern.permute.xlu0 0
        %4272 = vperm.xlu0 %4271, %v3792
        %v4273 = vpop.permute.xlu0 %4272
        %4276 = vset.pattern.permute.xlu0 0
        %4277 = vperm.xlu0 %4276, %v3793
        %v4278 = vpop.permute.xlu0 %4277
        %4281 = vset.pattern.permute.xlu0 0
        %4282 = vperm.xlu0 %4281, %v3794
        %v4283 = vpop.permute.xlu0 %4282
        %4286 = vset.pattern.permute.xlu0 0
        %4287 = vperm.xlu0 %4286, %v3795
        %v4288 = vpop.permute.xlu0 %4287
        %4291 = vset.pattern.permute.xlu0 0
        %4292 = vperm.xlu0 %4291, %v3796
        %v4293 = vpop.permute.xlu0 %4292
        %4296 = vset.pattern.permute.xlu0 0
        %4297 = vperm.xlu0 %4296, %v3797
        %v4298 = vpop.permute.xlu0 %4297
        %4301 = vset.pattern.permute.xlu0 0
        %4302 = vperm.xlu0 %4301, %v3798
        %v4303 = vpop.permute.xlu0 %4302
        %4306 = vset.pattern.permute.xlu0 0
        %4307 = vperm.xlu0 %4306, %v3799
        %v4308 = vpop.permute.xlu0 %4307
        %v4310 = vadd.f32 %v3950, %v4163
        %v4311 = vadd.f32 %v3951, %v4163
        %v4312 = vadd.f32 %v3952, %v4163
        %v4313 = vadd.f32 %v3953, %v4163
        %v4314 = vadd.f32 %v3954, %v4163
        %v4315 = vadd.f32 %v3955, %v4163
        %v4316 = vadd.f32 %v3956, %v4163
        %v4317 = vadd.f32 %v3957, %v4168
        %v4318 = vadd.f32 %v3958, %v4168
        %v4319 = vadd.f32 %v3959, %v4168
        %v4320 = vadd.f32 %v3960, %v4168
        %v4321 = vadd.f32 %v3961, %v4168
        %v4322 = vadd.f32 %v3962, %v4168
        %v4323 = vadd.f32 %v3963, %v4168
        %v4324 = vadd.f32 %v3964, %v4173
        %v4325 = vadd.f32 %v3965, %v4173
        %v4326 = vadd.f32 %v3966, %v4173
        %v4327 = vadd.f32 %v3967, %v4173
        %v4328 = vadd.f32 %v3968, %v4173
        %v4329 = vadd.f32 %v3969, %v4173
        %v4330 = vadd.f32 %v3970, %v4173
        %v4331 = vadd.f32 %v3971, %v4178
        %v4332 = vadd.f32 %v3972, %v4178
        %v4333 = vadd.f32 %v3973, %v4178
        %v4334 = vadd.f32 %v3974, %v4178
        %v4335 = vadd.f32 %v3975, %v4178
        %v4336 = vadd.f32 %v3976, %v4178
        %v4337 = vadd.f32 %v3977, %v4178
        %v4338 = vadd.f32 %v3978, %v4183
        %v4339 = vadd.f32 %v3979, %v4183
        %v4340 = vadd.f32 %v3980, %v4183
        %v4341 = vadd.f32 %v3981, %v4183
        %v4342 = vadd.f32 %v3982, %v4183
        %v4343 = vadd.f32 %v3983, %v4183
        %v4344 = vadd.f32 %v3984, %v4183
        %v4345 = vadd.f32 %v3985, %v4188
        %v4346 = vadd.f32 %v3986, %v4188
        %v4347 = vadd.f32 %v3987, %v4188
        %v4348 = vadd.f32 %v3988, %v4188
        %v4349 = vadd.f32 %v3989, %v4188
        %v4350 = vadd.f32 %v3990, %v4188
        %v4351 = vadd.f32 %v3991, %v4188
        %v4352 = vadd.f32 %v3992, %v4193
        %v4353 = vadd.f32 %v3993, %v4193
        %v4354 = vadd.f32 %v3994, %v4193
        %v4355 = vadd.f32 %v3995, %v4193
        %v4356 = vadd.f32 %v3996, %v4193
        %v4357 = vadd.f32 %v3997, %v4193
        %v4358 = vadd.f32 %v3998, %v4193
        %v4359 = vadd.f32 %v3999, %v4198
        %v4360 = vadd.f32 %v4000, %v4198
        %v4361 = vadd.f32 %v4001, %v4198
        %v4362 = vadd.f32 %v4002, %v4198
        %v4363 = vadd.f32 %v4003, %v4198
        %v4364 = vadd.f32 %v4004, %v4198
        %v4365 = vadd.f32 %v4005, %v4198
        %v4366 = vadd.f32 %v4006, %v4203
        %v4367 = vadd.f32 %v4007, %v4203
        %v4368 = vadd.f32 %v4008, %v4203
        %v4369 = vadd.f32 %v4009, %v4203
        %v4370 = vadd.f32 %v4010, %v4203
        %v4371 = vadd.f32 %v4011, %v4203
        %v4372 = vadd.f32 %v4012, %v4203
        %v4373 = vadd.f32 %v4013, %v4208
        %v4374 = vadd.f32 %v4014, %v4208
        %v4375 = vadd.f32 %v4015, %v4208
        %v4376 = vadd.f32 %v4016, %v4208
        %v4377 = vadd.f32 %v4017, %v4208
        %v4378 = vadd.f32 %v4018, %v4208
        %v4379 = vadd.f32 %v4019, %v4208
        %v4380 = vadd.f32 %v4020, %v4213
        %v4381 = vadd.f32 %v4021, %v4213
        %v4382 = vadd.f32 %v4022, %v4213
        %v4383 = vadd.f32 %v4023, %v4213
        %v4384 = vadd.f32 %v4024, %v4213
        %v4385 = vadd.f32 %v4025, %v4213
        %v4386 = vadd.f32 %v4026, %v4213
        %v4387 = vadd.f32 %v4027, %v4218
        %v4388 = vadd.f32 %v4028, %v4218
        %v4389 = vadd.f32 %v4029, %v4218
        %v4390 = vadd.f32 %v4030, %v4218
        %v4391 = vadd.f32 %v4031, %v4218
        %v4392 = vadd.f32 %v4032, %v4218
        %v4393 = vadd.f32 %v4033, %v4218
        %v4394 = vadd.f32 %v4034, %v4223
        %v4395 = vadd.f32 %v4035, %v4223
        %v4396 = vadd.f32 %v4036, %v4223
        %v4397 = vadd.f32 %v4037, %v4223
        %v4398 = vadd.f32 %v4038, %v4223
        %v4399 = vadd.f32 %v4039, %v4223
        %v4400 = vadd.f32 %v4040, %v4223
        %v4401 = vadd.f32 %v4041, %v4228
        %v4402 = vadd.f32 %v4042, %v4228
        %v4403 = vadd.f32 %v4043, %v4228
        %v4404 = vadd.f32 %v4044, %v4228
        %v4405 = vadd.f32 %v4045, %v4228
        %v4406 = vadd.f32 %v4046, %v4228
        %v4407 = vadd.f32 %v4047, %v4228
        %v4408 = vadd.f32 %v4048, %v4233
        %v4409 = vadd.f32 %v4049, %v4233
        %v4410 = vadd.f32 %v4050, %v4233
        %v4411 = vadd.f32 %v4051, %v4233
        %v4412 = vadd.f32 %v4052, %v4233
        %v4413 = vadd.f32 %v4053, %v4233
        %v4414 = vadd.f32 %v4054, %v4233
        %v4415 = vadd.f32 %v4055, %v4238
        %v4416 = vadd.f32 %v4056, %v4238
        %v4417 = vadd.f32 %v4057, %v4238
        %v4418 = vadd.f32 %v4058, %v4238
        %v4419 = vadd.f32 %v4059, %v4238
        %v4420 = vadd.f32 %v4060, %v4238
        %v4421 = vadd.f32 %v4061, %v4238
        %v4422 = vadd.f32 %v4062, %v4243
        %v4423 = vadd.f32 %v4063, %v4243
        %v4424 = vadd.f32 %v4064, %v4243
        %v4425 = vadd.f32 %v4065, %v4243
        %v4426 = vadd.f32 %v4066, %v4243
        %v4427 = vadd.f32 %v4067, %v4243
        %v4428 = vadd.f32 %v4068, %v4243
        %v4429 = vadd.f32 %v4069, %v4248
        %v4430 = vadd.f32 %v4070, %v4248
        %v4431 = vadd.f32 %v4071, %v4248
        %v4432 = vadd.f32 %v4072, %v4248
        %v4433 = vadd.f32 %v4073, %v4248
        %v4434 = vadd.f32 %v4074, %v4248
        %v4435 = vadd.f32 %v4075, %v4248
        %v4436 = vadd.f32 %v4076, %v4253
        %v4437 = vadd.f32 %v4077, %v4253
        %v4438 = vadd.f32 %v4078, %v4253
        %v4439 = vadd.f32 %v4079, %v4253
        %v4440 = vadd.f32 %v4080, %v4253
        %v4441 = vadd.f32 %v4081, %v4253
        %v4442 = vadd.f32 %v4082, %v4253
        %v4443 = vadd.f32 %v4083, %v4258
        %v4444 = vadd.f32 %v4084, %v4258
        %v4445 = vadd.f32 %v4085, %v4258
        %v4446 = vadd.f32 %v4086, %v4258
        %v4447 = vadd.f32 %v4087, %v4258
        %v4448 = vadd.f32 %v4088, %v4258
        %v4449 = vadd.f32 %v4089, %v4258
        %v4450 = vadd.f32 %v4090, %v4263
        %v4451 = vadd.f32 %v4091, %v4263
        %v4452 = vadd.f32 %v4092, %v4263
        %v4453 = vadd.f32 %v4093, %v4263
        %v4454 = vadd.f32 %v4094, %v4263
        %v4455 = vadd.f32 %v4095, %v4263
        %v4456 = vadd.f32 %v4096, %v4263
        %v4457 = vadd.f32 %v4097, %v4268
        %v4458 = vadd.f32 %v4098, %v4268
        %v4459 = vadd.f32 %v4099, %v4268
        %v4460 = vadd.f32 %v4100, %v4268
        %v4461 = vadd.f32 %v4101, %v4268
        %v4462 = vadd.f32 %v4102, %v4268
        %v4463 = vadd.f32 %v4103, %v4268
        %v4464 = vadd.f32 %v4104, %v4273
        %v4465 = vadd.f32 %v4105, %v4273
        %v4466 = vadd.f32 %v4106, %v4273
        %v4467 = vadd.f32 %v4107, %v4273
        %v4468 = vadd.f32 %v4108, %v4273
        %v4469 = vadd.f32 %v4109, %v4273
        %v4470 = vadd.f32 %v4110, %v4273
        %v4471 = vadd.f32 %v4111, %v4278
        %v4472 = vadd.f32 %v4112, %v4278
        %v4473 = vadd.f32 %v4113, %v4278
        %v4474 = vadd.f32 %v4114, %v4278
        %v4475 = vadd.f32 %v4115, %v4278
        %v4476 = vadd.f32 %v4116, %v4278
        %v4477 = vadd.f32 %v4117, %v4278
        %v4478 = vadd.f32 %v4118, %v4283
        %v4479 = vadd.f32 %v4119, %v4283
        %v4480 = vadd.f32 %v4120, %v4283
        %v4481 = vadd.f32 %v4121, %v4283
        %v4482 = vadd.f32 %v4122, %v4283
        %v4483 = vadd.f32 %v4123, %v4283
        %v4484 = vadd.f32 %v4124, %v4283
        %v4485 = vadd.f32 %v4125, %v4288
        %v4486 = vadd.f32 %v4126, %v4288
        %v4487 = vadd.f32 %v4127, %v4288
        %v4488 = vadd.f32 %v4128, %v4288
        %v4489 = vadd.f32 %v4129, %v4288
        %v4490 = vadd.f32 %v4130, %v4288
        %v4491 = vadd.f32 %v4131, %v4288
        %v4492 = vadd.f32 %v4132, %v4293
        %v4493 = vadd.f32 %v4133, %v4293
        %v4494 = vadd.f32 %v4134, %v4293
        %v4495 = vadd.f32 %v4135, %v4293
        %v4496 = vadd.f32 %v4136, %v4293
        %v4497 = vadd.f32 %v4137, %v4293
        %v4498 = vadd.f32 %v4138, %v4293
        %v4499 = vadd.f32 %v4139, %v4298
        %v4500 = vadd.f32 %v4140, %v4298
        %v4501 = vadd.f32 %v4141, %v4298
        %v4502 = vadd.f32 %v4142, %v4298
        %v4503 = vadd.f32 %v4143, %v4298
        %v4504 = vadd.f32 %v4144, %v4298
        %v4505 = vadd.f32 %v4145, %v4298
        %v4506 = vadd.f32 %v4146, %v4303
        %v4507 = vadd.f32 %v4147, %v4303
        %v4508 = vadd.f32 %v4148, %v4303
        %v4509 = vadd.f32 %v4149, %v4303
        %v4510 = vadd.f32 %v4150, %v4303
        %v4511 = vadd.f32 %v4151, %v4303
        %v4512 = vadd.f32 %v4152, %v4303
        %v4513 = vadd.f32 %v4153, %v4308
        %v4514 = vadd.f32 %v4154, %v4308
        %v4515 = vadd.f32 %v4155, %v4308
        %v4516 = vadd.f32 %v4156, %v4308
        %v4517 = vadd.f32 %v4157, %v4308
        %v4518 = vadd.f32 %v4158, %v4308
        %v4519 = vadd.f32 %v4159, %v4308
        %4520 = vst [vmem:[%s248] sm:$0xff] %v4310
        %4521 = vst [vmem:[%s248 + $0x8] sm:$0xff] %v4311
        %4522 = vst [vmem:[%s248 + $0x10] sm:$0xff] %v4312
        %4523 = vst [vmem:[%s248 + $0x18] sm:$0xff] %v4313
        %4524 = vst [vmem:[%s248 + $0x20] sm:$0xff] %v4314
        %4525 = vst [vmem:[%s248 + $0x28] sm:$0xff] %v4315
        %4526 = vst [vmem:[%s248 + $0x30] sm:$0xff] %v4316
        %4527 = vst [vmem:[%s248 + $0x38] sm:$0xff] %v4317
        %4528 = vst [vmem:[%s248 + $0x40] sm:$0xff] %v4318
        %4529 = vst [vmem:[%s248 + $0x48] sm:$0xff] %v4319
        %4530 = vst [vmem:[%s248 + $0x50] sm:$0xff] %v4320
        %4531 = vst [vmem:[%s248 + $0x58] sm:$0xff] %v4321
        %4532 = vst [vmem:[%s248 + $0x60] sm:$0xff] %v4322
        %4533 = vst [vmem:[%s248 + $0x68] sm:$0xff] %v4323
        %4534 = vst [vmem:[%s248 + $0x70] sm:$0xff] %v4324
        %4535 = vst [vmem:[%s248 + $0x78] sm:$0xff] %v4325
        %4536 = vst [vmem:[%s248 + $0x80] sm:$0xff] %v4326
        %4537 = vst [vmem:[%s248 + $0x88] sm:$0xff] %v4327
        %4538 = vst [vmem:[%s248 + $0x90] sm:$0xff] %v4328
        %4539 = vst [vmem:[%s248 + $0x98] sm:$0xff] %v4329
        %4540 = vst [vmem:[%s248 + $0xa0] sm:$0xff] %v4330
        %4541 = vst [vmem:[%s248 + $0xa8] sm:$0xff] %v4331
        %4542 = vst [vmem:[%s248 + $0xb0] sm:$0xff] %v4332
        %4543 = vst [vmem:[%s248 + $0xb8] sm:$0xff] %v4333
        %4544 = vst [vmem:[%s248 + $0xc0] sm:$0xff] %v4334
        %4545 = vst [vmem:[%s248 + $0xc8] sm:$0xff] %v4335
        %4546 = vst [vmem:[%s248 + $0xd0] sm:$0xff] %v4336
        %4547 = vst [vmem:[%s248 + $0xd8] sm:$0xff] %v4337
        %4548 = vst [vmem:[%s248 + $0xe0] sm:$0xff] %v4338
        %4549 = vst [vmem:[%s248 + $0xe8] sm:$0xff] %v4339
        %4550 = vst [vmem:[%s248 + $0xf0] sm:$0xff] %v4340
        %4551 = vst [vmem:[%s248 + $0xf8] sm:$0xff] %v4341
        %4552 = vst [vmem:[%s248 + $0x100] sm:$0xff] %v4342
        %4553 = vst [vmem:[%s248 + $0x108] sm:$0xff] %v4343
        %4554 = vst [vmem:[%s248 + $0x110] sm:$0xff] %v4344
        %4555 = vst [vmem:[%s248 + $0x118] sm:$0xff] %v4345
        %4556 = vst [vmem:[%s248 + $0x120] sm:$0xff] %v4346
        %4557 = vst [vmem:[%s248 + $0x128] sm:$0xff] %v4347
        %4558 = vst [vmem:[%s248 + $0x130] sm:$0xff] %v4348
        %4559 = vst [vmem:[%s248 + $0x138] sm:$0xff] %v4349
        %4560 = vst [vmem:[%s248 + $0x140] sm:$0xff] %v4350
        %4561 = vst [vmem:[%s248 + $0x148] sm:$0xff] %v4351
        %4562 = vst [vmem:[%s248 + $0x150] sm:$0xff] %v4352
        %4563 = vst [vmem:[%s248 + $0x158] sm:$0xff] %v4353
        %4564 = vst [vmem:[%s248 + $0x160] sm:$0xff] %v4354
        %4565 = vst [vmem:[%s248 + $0x168] sm:$0xff] %v4355
        %4566 = vst [vmem:[%s248 + $0x170] sm:$0xff] %v4356
        %4567 = vst [vmem:[%s248 + $0x178] sm:$0xff] %v4357
        %4568 = vst [vmem:[%s248 + $0x180] sm:$0xff] %v4358
        %4569 = vst [vmem:[%s248 + $0x188] sm:$0xff] %v4359
        %4570 = vst [vmem:[%s248 + $0x190] sm:$0xff] %v4360
        %4571 = vst [vmem:[%s248 + $0x198] sm:$0xff] %v4361
        %4572 = vst [vmem:[%s248 + $0x1a0] sm:$0xff] %v4362
        %4573 = vst [vmem:[%s248 + $0x1a8] sm:$0xff] %v4363
        %4574 = vst [vmem:[%s248 + $0x1b0] sm:$0xff] %v4364
        %4575 = vst [vmem:[%s248 + $0x1b8] sm:$0xff] %v4365
        %4576 = vst [vmem:[%s248 + $0x1c0] sm:$0xff] %v4366
        %4577 = vst [vmem:[%s248 + $0x1c8] sm:$0xff] %v4367
        %4578 = vst [vmem:[%s248 + $0x1d0] sm:$0xff] %v4368
        %4579 = vst [vmem:[%s248 + $0x1d8] sm:$0xff] %v4369
        %4580 = vst [vmem:[%s248 + $0x1e0] sm:$0xff] %v4370
        %4581 = vst [vmem:[%s248 + $0x1e8] sm:$0xff] %v4371
        %4582 = vst [vmem:[%s248 + $0x1f0] sm:$0xff] %v4372
        %4583 = vst [vmem:[%s248 + $0x1f8] sm:$0xff] %v4373
        %4584 = vst [vmem:[%s248 + $0x200] sm:$0xff] %v4374
        %4585 = vst [vmem:[%s248 + $0x208] sm:$0xff] %v4375
        %4586 = vst [vmem:[%s248 + $0x210] sm:$0xff] %v4376
        %4587 = vst [vmem:[%s248 + $0x218] sm:$0xff] %v4377
        %4588 = vst [vmem:[%s248 + $0x220] sm:$0xff] %v4378
        %4589 = vst [vmem:[%s248 + $0x228] sm:$0xff] %v4379
        %4590 = vst [vmem:[%s248 + $0x230] sm:$0xff] %v4380
        %4591 = vst [vmem:[%s248 + $0x238] sm:$0xff] %v4381
        %4592 = vst [vmem:[%s248 + $0x240] sm:$0xff] %v4382
        %4593 = vst [vmem:[%s248 + $0x248] sm:$0xff] %v4383
        %4594 = vst [vmem:[%s248 + $0x250] sm:$0xff] %v4384
        %4595 = vst [vmem:[%s248 + $0x258] sm:$0xff] %v4385
        %4596 = vst [vmem:[%s248 + $0x260] sm:$0xff] %v4386
        %4597 = vst [vmem:[%s248 + $0x268] sm:$0xff] %v4387
        %4598 = vst [vmem:[%s248 + $0x270] sm:$0xff] %v4388
        %4599 = vst [vmem:[%s248 + $0x278] sm:$0xff] %v4389
        %4600 = vst [vmem:[%s248 + $0x280] sm:$0xff] %v4390
        %4601 = vst [vmem:[%s248 + $0x288] sm:$0xff] %v4391
        %4602 = vst [vmem:[%s248 + $0x290] sm:$0xff] %v4392
        %4603 = vst [vmem:[%s248 + $0x298] sm:$0xff] %v4393
        %4604 = vst [vmem:[%s248 + $0x2a0] sm:$0xff] %v4394
        %4605 = vst [vmem:[%s248 + $0x2a8] sm:$0xff] %v4395
        %4606 = vst [vmem:[%s248 + $0x2b0] sm:$0xff] %v4396
        %4607 = vst [vmem:[%s248 + $0x2b8] sm:$0xff] %v4397
        %4608 = vst [vmem:[%s248 + $0x2c0] sm:$0xff] %v4398
        %4609 = vst [vmem:[%s248 + $0x2c8] sm:$0xff] %v4399
        %4610 = vst [vmem:[%s248 + $0x2d0] sm:$0xff] %v4400
        %4611 = vst [vmem:[%s248 + $0x2d8] sm:$0xff] %v4401
        %4612 = vst [vmem:[%s248 + $0x2e0] sm:$0xff] %v4402
        %4613 = vst [vmem:[%s248 + $0x2e8] sm:$0xff] %v4403
        %4614 = vst [vmem:[%s248 + $0x2f0] sm:$0xff] %v4404
        %4615 = vst [vmem:[%s248 + $0x2f8] sm:$0xff] %v4405
        %4616 = vst [vmem:[%s248 + $0x300] sm:$0xff] %v4406
        %4617 = vst [vmem:[%s248 + $0x308] sm:$0xff] %v4407
        %4618 = vst [vmem:[%s248 + $0x310] sm:$0xff] %v4408
        %4619 = vst [vmem:[%s248 + $0x318] sm:$0xff] %v4409
        %4620 = vst [vmem:[%s248 + $0x320] sm:$0xff] %v4410
        %4621 = vst [vmem:[%s248 + $0x328] sm:$0xff] %v4411
        %4622 = vst [vmem:[%s248 + $0x330] sm:$0xff] %v4412
        %4623 = vst [vmem:[%s248 + $0x338] sm:$0xff] %v4413
        %4624 = vst [vmem:[%s248 + $0x340] sm:$0xff] %v4414
        %4625 = vst [vmem:[%s248 + $0x348] sm:$0xff] %v4415
        %4626 = vst [vmem:[%s248 + $0x350] sm:$0xff] %v4416
        %4627 = vst [vmem:[%s248 + $0x358] sm:$0xff] %v4417
        %4628 = vst [vmem:[%s248 + $0x360] sm:$0xff] %v4418
        %4629 = vst [vmem:[%s248 + $0x368] sm:$0xff] %v4419
        %4630 = vst [vmem:[%s248 + $0x370] sm:$0xff] %v4420
        %4631 = vst [vmem:[%s248 + $0x378] sm:$0xff] %v4421
        %4632 = vst [vmem:[%s248 + $0x380] sm:$0xff] %v4422
        %4633 = vst [vmem:[%s248 + $0x388] sm:$0xff] %v4423
        %4634 = vst [vmem:[%s248 + $0x390] sm:$0xff] %v4424
        %4635 = vst [vmem:[%s248 + $0x398] sm:$0xff] %v4425
        %4636 = vst [vmem:[%s248 + $0x3a0] sm:$0xff] %v4426
        %4637 = vst [vmem:[%s248 + $0x3a8] sm:$0xff] %v4427
        %4638 = vst [vmem:[%s248 + $0x3b0] sm:$0xff] %v4428
        %4639 = vst [vmem:[%s248 + $0x3b8] sm:$0xff] %v4429
        %4640 = vst [vmem:[%s248 + $0x3c0] sm:$0xff] %v4430
        %4641 = vst [vmem:[%s248 + $0x3c8] sm:$0xff] %v4431
        %4642 = vst [vmem:[%s248 + $0x3d0] sm:$0xff] %v4432
        %4643 = vst [vmem:[%s248 + $0x3d8] sm:$0xff] %v4433
        %4644 = vst [vmem:[%s248 + $0x3e0] sm:$0xff] %v4434
        %4645 = vst [vmem:[%s248 + $0x3e8] sm:$0xff] %v4435
        %4646 = vst [vmem:[%s248 + $0x3f0] sm:$0xff] %v4436
        %4647 = vst [vmem:[%s248 + $0x3f8] sm:$0xff] %v4437
        %4648 = vst [vmem:[%s248 + $0x400] sm:$0xff] %v4438
        %4649 = vst [vmem:[%s248 + $0x408] sm:$0xff] %v4439
        %4650 = vst [vmem:[%s248 + $0x410] sm:$0xff] %v4440
        %4651 = vst [vmem:[%s248 + $0x418] sm:$0xff] %v4441
        %4652 = vst [vmem:[%s248 + $0x420] sm:$0xff] %v4442
        %4653 = vst [vmem:[%s248 + $0x428] sm:$0xff] %v4443
        %4654 = vst [vmem:[%s248 + $0x430] sm:$0xff] %v4444
        %4655 = vst [vmem:[%s248 + $0x438] sm:$0xff] %v4445
        %4656 = vst [vmem:[%s248 + $0x440] sm:$0xff] %v4446
        %4657 = vst [vmem:[%s248 + $0x448] sm:$0xff] %v4447
        %4658 = vst [vmem:[%s248 + $0x450] sm:$0xff] %v4448
        %4659 = vst [vmem:[%s248 + $0x458] sm:$0xff] %v4449
        %4660 = vst [vmem:[%s248 + $0x460] sm:$0xff] %v4450
        %4661 = vst [vmem:[%s248 + $0x468] sm:$0xff] %v4451
        %4662 = vst [vmem:[%s248 + $0x470] sm:$0xff] %v4452
        %4663 = vst [vmem:[%s248 + $0x478] sm:$0xff] %v4453
        %4664 = vst [vmem:[%s248 + $0x480] sm:$0xff] %v4454
        %4665 = vst [vmem:[%s248 + $0x488] sm:$0xff] %v4455
        %4666 = vst [vmem:[%s248 + $0x490] sm:$0xff] %v4456
        %4667 = vst [vmem:[%s248 + $0x498] sm:$0xff] %v4457
        %4668 = vst [vmem:[%s248 + $0x4a0] sm:$0xff] %v4458
        %4669 = vst [vmem:[%s248 + $0x4a8] sm:$0xff] %v4459
        %4670 = vst [vmem:[%s248 + $0x4b0] sm:$0xff] %v4460
        %4671 = vst [vmem:[%s248 + $0x4b8] sm:$0xff] %v4461
        %4672 = vst [vmem:[%s248 + $0x4c0] sm:$0xff] %v4462
        %4673 = vst [vmem:[%s248 + $0x4c8] sm:$0xff] %v4463
        %4674 = vst [vmem:[%s248 + $0x4d0] sm:$0xff] %v4464
        %4675 = vst [vmem:[%s248 + $0x4d8] sm:$0xff] %v4465
        %4676 = vst [vmem:[%s248 + $0x4e0] sm:$0xff] %v4466
        %4677 = vst [vmem:[%s248 + $0x4e8] sm:$0xff] %v4467
        %4678 = vst [vmem:[%s248 + $0x4f0] sm:$0xff] %v4468
        %4679 = vst [vmem:[%s248 + $0x4f8] sm:$0xff] %v4469
        %4680 = vst [vmem:[%s248 + $0x500] sm:$0xff] %v4470
        %4681 = vst [vmem:[%s248 + $0x508] sm:$0xff] %v4471
        %4682 = vst [vmem:[%s248 + $0x510] sm:$0xff] %v4472
        %4683 = vst [vmem:[%s248 + $0x518] sm:$0xff] %v4473
        %4684 = vst [vmem:[%s248 + $0x520] sm:$0xff] %v4474
        %4685 = vst [vmem:[%s248 + $0x528] sm:$0xff] %v4475
        %4686 = vst [vmem:[%s248 + $0x530] sm:$0xff] %v4476
        %4687 = vst [vmem:[%s248 + $0x538] sm:$0xff] %v4477
        %4688 = vst [vmem:[%s248 + $0x540] sm:$0xff] %v4478
        %4689 = vst [vmem:[%s248 + $0x548] sm:$0xff] %v4479
        %4690 = vst [vmem:[%s248 + $0x550] sm:$0xff] %v4480
        %4691 = vst [vmem:[%s248 + $0x558] sm:$0xff] %v4481
        %4692 = vst [vmem:[%s248 + $0x560] sm:$0xff] %v4482
        %4693 = vst [vmem:[%s248 + $0x568] sm:$0xff] %v4483
        %4694 = vst [vmem:[%s248 + $0x570] sm:$0xff] %v4484
        %4695 = vst [vmem:[%s248 + $0x578] sm:$0xff] %v4485
        %4696 = vst [vmem:[%s248 + $0x580] sm:$0xff] %v4486
        %4697 = vst [vmem:[%s248 + $0x588] sm:$0xff] %v4487
        %4698 = vst [vmem:[%s248 + $0x590] sm:$0xff] %v4488
        %4699 = vst [vmem:[%s248 + $0x598] sm:$0xff] %v4489
        %4700 = vst [vmem:[%s248 + $0x5a0] sm:$0xff] %v4490
        %4701 = vst [vmem:[%s248 + $0x5a8] sm:$0xff] %v4491
        %4702 = vst [vmem:[%s248 + $0x5b0] sm:$0xff] %v4492
        %4703 = vst [vmem:[%s248 + $0x5b8] sm:$0xff] %v4493
        %4704 = vst [vmem:[%s248 + $0x5c0] sm:$0xff] %v4494
        %4705 = vst [vmem:[%s248 + $0x5c8] sm:$0xff] %v4495
        %4706 = vst [vmem:[%s248 + $0x5d0] sm:$0xff] %v4496
        %4707 = vst [vmem:[%s248 + $0x5d8] sm:$0xff] %v4497
        %4708 = vst [vmem:[%s248 + $0x5e0] sm:$0xff] %v4498
        %4709 = vst [vmem:[%s248 + $0x5e8] sm:$0xff] %v4499
        %4710 = vst [vmem:[%s248 + $0x5f0] sm:$0xff] %v4500
        %4711 = vst [vmem:[%s248 + $0x5f8] sm:$0xff] %v4501
        %4712 = vst [vmem:[%s248 + $0x600] sm:$0xff] %v4502
        %4713 = vst [vmem:[%s248 + $0x608] sm:$0xff] %v4503
        %4714 = vst [vmem:[%s248 + $0x610] sm:$0xff] %v4504
        %4715 = vst [vmem:[%s248 + $0x618] sm:$0xff] %v4505
        %4716 = vst [vmem:[%s248 + $0x620] sm:$0xff] %v4506
        %4717 = vst [vmem:[%s248 + $0x628] sm:$0xff] %v4507
        %4718 = vst [vmem:[%s248 + $0x630] sm:$0xff] %v4508
        %4719 = vst [vmem:[%s248 + $0x638] sm:$0xff] %v4509
        %4720 = vst [vmem:[%s248 + $0x640] sm:$0xff] %v4510
        %4721 = vst [vmem:[%s248 + $0x648] sm:$0xff] %v4511
        %4722 = vst [vmem:[%s248 + $0x650] sm:$0xff] %v4512
        %4723 = vst [vmem:[%s248 + $0x658] sm:$0xff] %v4513
        %4724 = vst [vmem:[%s248 + $0x660] sm:$0xff] %v4514
        %4725 = vst [vmem:[%s248 + $0x668] sm:$0xff] %v4515
        %4726 = vst [vmem:[%s248 + $0x670] sm:$0xff] %v4516
        %4727 = vst [vmem:[%s248 + $0x678] sm:$0xff] %v4517
        %4728 = vst [vmem:[%s248 + $0x680] sm:$0xff] %v4518
        %4729 = vst [vmem:[%s248 + $0x688] sm:$0xff] %v4519
        %s4730 = sand.u32 %s139, 1
        %s4731 = scalar_lea.sflag [#allocation4], %s4730
        %s4732 = sand.u32 %s139, 1
        %s4733 = smul.addr %s4732, 1680
        %s4734 = scalar_lea.vmem [#allocation7], %s4733
        // Predicated region
        $region49: #{tpu_custom_call.1} parent=39 // pred_check
          %p4735 = pneg %p149
        $region50: #{tpu_custom_call.1} parent=39 // pred_check_branch
          %4737 = sbr.rel (%p4735) target = $region52
        $region51: #{tpu_custom_call.1} parent=39 // pred_region
          %s4738 = smul.u32 30, %s21
          %s4740 = ssub.s32 26880, 26880
          %4741 = vsyncadd %s4731, %s4740
          %s4742 = smul.addr %s4738, 7
          %s4743 = smul.addr %s4742, 128
          %s4744 = scalar_lea.hbm %s5, %s4743
          %s4745 = sshll.u32 %s4734, 4
          %s4746 = int_to_ptr.vmem [resolvable:$true] %s4745
          %4751 = dma.vmem_to_hbm [thread:$0]  %s4746, 26880, %s4744, %s4731, 896, 896, 56
        $region52: #{tpu_custom_call.1} parent=39 // pred_fallthru
          _
      $region40: #{tpu_custom_call.1} parent=5 // pred_fallthru
        _
      %p4752 = scmp.le.s32.totalorder 2, %s16
      // Predicated region
      $region53: #{tpu_custom_call.1} parent=5 // pred_check
        %p4753 = pneg %p4752
      $region54: #{tpu_custom_call.1} parent=5 // pred_check_branch
        %4755 = sbr.rel (%p4753) target = $region56
      $region55: #{tpu_custom_call.1} parent=5 // pred_region
        %s4756 = ssub.s32 %s16, 2
        // Predicated region
        $region57: #{tpu_custom_call.1} parent=55 // pred_check
          %p4757 = pneg %p155
        $region58: #{tpu_custom_call.1} parent=55 // pred_check_branch
          %4759 = sbr.rel (%p4757) target = $region60
        $region59: #{tpu_custom_call.1} parent=55 // pred_region
          %s4760 = sand.u32 %s140, 1
          %s4761 = scalar_lea.sflag [#allocation4], %s4760
          %s4762 = sand.u32 %s140, 1
          %s4763 = smul.addr %s4762, 1680
          %s4764 = scalar_lea.vmem [#allocation7], %s4763
          %4765 = dma.done %s4761, 26880
        $region60: #{tpu_custom_call.1} parent=55 // pred_fallthru
          _
      $region56: #{tpu_custom_call.1} parent=5 // pred_fallthru
        _
    $region6: #{tpu_custom_call.1} parent=1 // loop_footer
      %s20 = sadd.s32 1, %s16
    $region7: #{tpu_custom_call.1} parent=1 // loop_footer_branch
      %15 = sbr.rel target = $region3
    $region8: #{tpu_custom_call.1} parent=1 // loop_exit
      _
    %4766 = vsyncpa [#allocation3], 1
    %s4767 = scalar_lea.sflag [#allocation3], 1
    %4768 = vsyncpa %s4767, 1
    %4769 = vsyncpa [#allocation6], 1
    %4770 = vsyncpa [#allocation4], 1
    %s4771 = scalar_lea.sflag [#allocation4], 1
    %4772 = vsyncpa %s4771, 1

</llo_original>
